<compile_context>
chip_gen: v6e
topology: v6e:2x2x1
jax: 0.10.0
libtpu: 0.0.40
codegen_flags: <defaults>
</compile_context>

<pallas_src>
import functools

import jax
import jax.numpy as jnp
from jax import lax
from jax.experimental import pallas as pl
from jax.experimental.pallas import tpu as pltpu


# ----------------------------------------------------------------------------
# Fused kernel: 18 x (conv3x3 -> BN -> ReLU -> conv3x3 -> BN -> +res -> ReLU)
#               + global avg-pool + fc + softmax
# ----------------------------------------------------------------------------
def _fused_kernel(x_ref, w_ref, b_ref, mask_ref, fcw_ref, fcb_ref,
                  logits_ref, probas_ref, act_ref, h_ref, col_ref,
                  *, row_w, guard, num_blocks, rows_per_image, batch, inv_pool):
    Mp, C = x_ref.shape
    shifts = tuple((dy - 1) * row_w + (dx - 1)
                   for dy in range(3) for dx in range(3))

    # --- init: zero the guarded scratches, place the input activation ---
    act_ref[...] = jnp.zeros(act_ref.shape, act_ref.dtype)
    h_ref[...] = jnp.zeros(h_ref.shape, h_ref.dtype)
    act_ref[guard:guard + Mp, :] = x_ref[...]

    mask = mask_ref[...]                              # (Mp, C) f32, hoisted once

    def conv_bias(src_ref, step):
        # im2col staging: 9 shifted bf16 copies -> one (Mp, 9C) x (9C, C) matmul.
        for t, sh in enumerate(shifts):
            col_ref[:, t * C:(t + 1) * C] = (
                src_ref[guard + sh:guard + sh + Mp, :].astype(jnp.bfloat16))
        acc = jnp.dot(col_ref[...], w_ref[step],
                      preferred_element_type=jnp.float32)        # (Mp, C) f32
        return acc + b_ref[step]

    def block_body(bi, carry):
        s1 = 2 * bi
        # conv1 + folded BN + ReLU   (halo re-zeroed by the interior mask)
        h = jnp.maximum(conv_bias(act_ref, s1), 0.0) * mask
        h_ref[guard:guard + Mp, :] = h
        # conv2 + folded BN + identity shortcut + ReLU
        y = conv_bias(h_ref, s1 + 1) + act_ref[guard:guard + Mp, :]
        act_ref[guard:guard + Mp, :] = jnp.maximum(y, 0.0) * mask
        return carry

    lax.fori_loop(0, num_blocks, block_body, 0)

    # --- head: global average pool + fc + softmax ---
    pooled = jnp.concatenate(
        [jnp.sum(act_ref[guard + n * rows_per_image:
                         guard + (n + 1) * rows_per_image, :],
                 axis=0, keepdims=True)
         for n in range(batch)], axis=0) * inv_pool               # (N, C)
    logits = jnp.dot(pooled, fcw_ref[...],
                     preferred_element_type=jnp.float32) + fcb_ref[...]
    logits_ref[...] = logits
    m = jnp.max(logits, axis=1, keepdims=True)
    e = jnp.exp(logits - m)
    probas_ref[...] = e / jnp.sum(e, axis=1, keepdims=True)


# ----------------------------------------------------------------------------
# Forward pass equivalent to ResNet110_server_v3.forward (eval mode)
# ----------------------------------------------------------------------------
@jax.jit
def resnet110_server_v3_forward(x_nchw, w_all, b_all, fc_w, fc_b):
    N, C, H, W = x_nchw.shape
    Hp, Wp = H + 2, W + 2                      # zero-halo spatial extents
    Mp = N * Hp * Wp                           # flat zero-halo row count
    nsteps = w_all.shape[0]
    num_classes = fc_w.shape[1]
    guard = ((Wp + 1 + 7) // 8) * 8            # zero guard >= max tap shift

    x = jnp.transpose(x_nchw, (0, 2, 3, 1)).astype(jnp.float32)          # NHWC
    x_halo = jnp.pad(x, ((0, 0), (1, 1), (1, 1), (0, 0))).reshape(Mp, C)

    r = jnp.arange(Mp)
    i = (r % (Hp * Wp)) // Wp
    j = r % Wp
    interior = ((i >= 1) & (i <= H) & (j >= 1) & (j <= W)).astype(jnp.float32)
    mask = jnp.broadcast_to(interior[:, None], (Mp, C))   # pre-broadcast, f32

    kernel = functools.partial(
        _fused_kernel, row_w=Wp, guard=guard, num_blocks=nsteps // 2,
        rows_per_image=Hp * Wp, batch=N, inv_pool=1.0 / (H * W))

    vspec = pl.BlockSpec(memory_space=pltpu.MemorySpace.VMEM)
    logits, probas = pl.pallas_call(
        kernel,
        out_shape=(jax.ShapeDtypeStruct((N, num_classes), jnp.float32),
                   jax.ShapeDtypeStruct((N, num_classes), jnp.float32)),
        in_specs=[vspec] * 6,
        out_specs=(vspec, vspec),
        scratch_shapes=[
            pltpu.VMEM((2 * guard + Mp, C), jnp.float32),   # activation + guard
            pltpu.VMEM((2 * guard + Mp, C), jnp.float32),   # conv1 output + guard
            pltpu.VMEM((Mp, 9 * C), jnp.bfloat16),          # im2col staging
        ],
    )(x_halo, w_all, b_all, mask, fc_w, fc_b)
    return ([logits], probas)


# ----------------------------------------------------------------------------
# Parameter init (mirrors the PyTorch module's shapes / kaiming init),
# with eval-mode BatchNorm folded into the conv weights.
# ----------------------------------------------------------------------------
def init_params(key, num_blocks_layer3, planes=64, num_classes=10, eps=1e-5):
    nsteps = 2 * num_blocks_layer3
    kw, kfw, kfb = jax.random.split(key, 3)
    # kaiming_normal_ (fan_in = planes*3*3) on every 3x3 conv, HWIO layout.
    conv_std = (2.0 / (planes * 3 * 3)) ** 0.5
    w = jax.random.normal(kw, (nsteps, 3, 3, planes, planes),
                          jnp.float32) * conv_std
    # BatchNorm2d eval-mode fold with default running stats
    # (gamma=1, beta=0, mean=0, var=1): scale = 1/sqrt(1+eps), bias = 0.
    scale = jnp.full((nsteps, planes), 1.0 / (1.0 + eps) ** 0.5, jnp.float32)
    bias = jnp.zeros((nsteps, planes), jnp.float32)
    w_folded = w * scale[:, None, None, None, :]         # fold per output channel
    w_all = w_folded.reshape(nsteps, 9 * planes, planes).astype(jnp.bfloat16)
    b_all = bias.reshape(nsteps, 1, planes)
    # fc: kaiming_normal_ weight, PyTorch-default uniform bias.
    fc_w = jax.random.normal(kfw, (planes, num_classes),
                             jnp.float32) * (2.0 / planes) ** 0.5
    bound = 1.0 / planes ** 0.5
    fc_b = jax.random.uniform(kfb, (1, num_classes), jnp.float32, -bound, bound)
    return w_all, b_all, fc_w, fc_b


# ----------------------------------------------------------------------------
# Pure-JAX reference (same folded bf16 weights, f32 accumulation)
# ----------------------------------------------------------------------------
@jax.jit
def reference_forward(x_nchw, w_all, b_all, fc_w, fc_b):
    x = jnp.transpose(x_nchw, (0, 2, 3, 1)).astype(jnp.float32)
    C = x.shape[-1]
    nsteps = w_all.shape[0]
    dn = ('NHWC', 'HWIO', 'NHWC')
    res = None
    for step in range(nsteps):
        w = w_all[step].reshape(3, 3, C, C)
        conv = lax.conv_general_dilated(
            x.astype(jnp.bfloat16), w, window_strides=(1, 1), padding='SAME',
            dimension_numbers=dn, preferred_element_type=jnp.float32)
        y = conv + b_all[step, 0]
        if step % 2 == 1:
            y = y + res
        else:
            res = x
        x = jnp.maximum(y, 0.0)
    pooled = jnp.mean(x, axis=(1, 2))
    logits = jnp.dot(pooled, fc_w, precision=lax.Precision.HIGHEST) + fc_b
    probas = jax.nn.softmax(logits, axis=1)
    return logits, probas


if __name__ == "__main__":
    # ResNet110 config: num_blocks = [18, 18, 18]; server_v3 holds only layer3,
    # which sees 64-channel 8x8 feature maps (in_planes=64, stride=1 throughout).
    NUM_BLOCKS_LAYER3 = 18
    N, C, H, W = 2, 64, 8, 8
    NUM_CLASSES = 10

    key = jax.random.PRNGKey(0)
    key, kx = jax.random.split(key)
    x = jax.random.normal(kx, (N, C, H, W), jnp.float32)   # NCHW, like PyTorch

    params = init_params(key, NUM_BLOCKS_LAYER3, planes=C, num_classes=NUM_CLASSES)

    logits_list, probas = resnet110_server_v3_forward(x, *params)
    logits = logits_list[0]
    jax.block_until_ready((logits, probas))

    assert logits.shape == (N, NUM_CLASSES)
    assert probas.shape == (N, NUM_CLASSES)
    assert bool(jnp.all(jnp.isfinite(logits))) and bool(jnp.all(jnp.isfinite(probas)))
    assert bool(jnp.allclose(jnp.sum(probas, axis=1), 1.0, atol=1e-5))

    ref_logits, ref_probas = reference_forward(x, *params)
    logit_scale = 1.0 + float(jnp.max(jnp.abs(ref_logits)))
    max_logit_err = float(jnp.max(jnp.abs(logits - ref_logits)))
    assert max_logit_err <= 5e-2 * logit_scale, (max_logit_err, logit_scale)
    assert bool(jnp.allclose(probas, ref_probas, atol=4e-2)), "probas mismatch"

    print("KERNEL_OK")
</pallas_src>

<mosaic_0001>
module attributes {stable_mosaic.version = 11 : i64} {
  func.func @_fused_kernel(%arg0: memref<200x64xf32, #tpu.memory_space<vmem>>, %arg1: memref<36x576x64xbf16, #tpu.memory_space<vmem>>, %arg2: memref<36x1x64xf32, #tpu.memory_space<vmem>>, %arg3: memref<200x64xf32, #tpu.memory_space<vmem>>, %arg4: memref<64x10xf32, #tpu.memory_space<vmem>>, %arg5: memref<1x10xf32, #tpu.memory_space<vmem>>, %arg6: memref<2x10xf32, #tpu.memory_space<vmem>>, %arg7: memref<2x10xf32, #tpu.memory_space<vmem>>, %arg8: memref<232x64xf32, #tpu.memory_space<vmem>>, %arg9: memref<232x64xf32, #tpu.memory_space<vmem>>, %arg10: memref<200x576xbf16, #tpu.memory_space<vmem>>) attributes {dimension_semantics = [], scalar_prefetch = 0 : i64, scratch_operands = 3 : i64, tpu.core_type = #tpu.core_type<tc>} {
    %cst = arith.constant 0.000000e+00 : f32
    %0 = vector.broadcast %cst : f32 to vector<232x64xf32>
    %c0 = arith.constant 0 : index
    %c0_0 = arith.constant 0 : index
    %1 = vector.load %arg8[%c0, %c0_0] : memref<232x64xf32, #tpu.memory_space<vmem>>, vector<232x64xf32>
    tpu.vector_store %arg8[%c0, %c0_0], %0 {strides = array<i32>} : memref<232x64xf32, #tpu.memory_space<vmem>>, vector<232x64xf32>,
    %cst_1 = arith.constant 0.000000e+00 : f32
    %2 = vector.broadcast %cst_1 : f32 to vector<232x64xf32>
    %c0_2 = arith.constant 0 : index
    %c0_3 = arith.constant 0 : index
    %3 = vector.load %arg9[%c0_2, %c0_3] : memref<232x64xf32, #tpu.memory_space<vmem>>, vector<232x64xf32>
    tpu.vector_store %arg9[%c0_2, %c0_3], %2 {strides = array<i32>} : memref<232x64xf32, #tpu.memory_space<vmem>>, vector<232x64xf32>,
    %c0_4 = arith.constant 0 : index
    %c0_5 = arith.constant 0 : index
    %4 = vector.load %arg0[%c0_4, %c0_5] : memref<200x64xf32, #tpu.memory_space<vmem>>, vector<200x64xf32>
    %c16 = arith.constant 16 : index
    %c0_6 = arith.constant 0 : index
    %5 = vector.load %arg8[%c16, %c0_6] : memref<232x64xf32, #tpu.memory_space<vmem>>, vector<200x64xf32>
    tpu.vector_store %arg8[%c16, %c0_6], %4 {strides = array<i32>} : memref<232x64xf32, #tpu.memory_space<vmem>>, vector<200x64xf32>,
    %c0_7 = arith.constant 0 : index
    %c0_8 = arith.constant 0 : index
    %6 = vector.load %arg3[%c0_7, %c0_8] : memref<200x64xf32, #tpu.memory_space<vmem>>, vector<200x64xf32>
    %c0_i32 = arith.constant 0 : i32
    %c18_i32 = arith.constant 18 : i32
    %7 = arith.addi %c0_i32, %c18_i32 : i32
    %c1_i32 = arith.constant 1 : i32
    scf.for %arg11 = %c0_i32 to %7 step %c1_i32  : i32 {
      %c2_i32 = arith.constant 2 : i32
      %33 = arith.muli %c2_i32, %arg11 : i32
      %c5 = arith.constant 5 : index
      %c0_27 = arith.constant 0 : index
      %34 = vector.load %arg8[%c5, %c0_27] : memref<232x64xf32, #tpu.memory_space<vmem>>, vector<200x64xf32>
      %35 = arith.truncf %34 : vector<200x64xf32> to vector<200x64xbf16>
      %c0_28 = arith.constant 0 : index
      %c0_29 = arith.constant 0 : index
      %36 = vector.load %arg10[%c0_28, %c0_29] : memref<200x576xbf16, #tpu.memory_space<vmem>>, vector<200x64xbf16>
      tpu.vector_store %arg10[%c0_28, %c0_29], %35 {strides = array<i32>} : memref<200x576xbf16, #tpu.memory_space<vmem>>, vector<200x64xbf16>,
      %c6 = arith.constant 6 : index
      %c0_30 = arith.constant 0 : index
      %37 = vector.load %arg8[%c6, %c0_30] : memref<232x64xf32, #tpu.memory_space<vmem>>, vector<200x64xf32>
      %38 = arith.truncf %37 : vector<200x64xf32> to vector<200x64xbf16>
      %c0_31 = arith.constant 0 : index
      %c64 = arith.constant 64 : index
      %39 = vector.load %arg10[%c0_31, %c64] : memref<200x576xbf16, #tpu.memory_space<vmem>>, vector<200x64xbf16>
      tpu.vector_store %arg10[%c0_31, %c64], %38 {strides = array<i32>} : memref<200x576xbf16, #tpu.memory_space<vmem>>, vector<200x64xbf16>,
      %c7 = arith.constant 7 : index
      %c0_32 = arith.constant 0 : index
      %40 = vector.load %arg8[%c7, %c0_32] : memref<232x64xf32, #tpu.memory_space<vmem>>, vector<200x64xf32>
      %41 = arith.truncf %40 : vector<200x64xf32> to vector<200x64xbf16>
      %c0_33 = arith.constant 0 : index
      %c128 = arith.constant 128 : index
      %42 = vector.load %arg10[%c0_33, %c128] : memref<200x576xbf16, #tpu.memory_space<vmem>>, vector<200x64xbf16>
      tpu.vector_store %arg10[%c0_33, %c128], %41 {strides = array<i32>} : memref<200x576xbf16, #tpu.memory_space<vmem>>, vector<200x64xbf16>,
      %c15 = arith.constant 15 : index
      %c0_34 = arith.constant 0 : index
      %43 = vector.load %arg8[%c15, %c0_34] : memref<232x64xf32, #tpu.memory_space<vmem>>, vector<200x64xf32>
      %44 = arith.truncf %43 : vector<200x64xf32> to vector<200x64xbf16>
      %c0_35 = arith.constant 0 : index
      %c192 = arith.constant 192 : index
      %45 = vector.load %arg10[%c0_35, %c192] : memref<200x576xbf16, #tpu.memory_space<vmem>>, vector<200x64xbf16>
      tpu.vector_store %arg10[%c0_35, %c192], %44 {strides = array<i32>} : memref<200x576xbf16, #tpu.memory_space<vmem>>, vector<200x64xbf16>,
      %c16_36 = arith.constant 16 : index
      %c0_37 = arith.constant 0 : index
      %46 = vector.load %arg8[%c16_36, %c0_37] : memref<232x64xf32, #tpu.memory_space<vmem>>, vector<200x64xf32>
      %47 = arith.truncf %46 : vector<200x64xf32> to vector<200x64xbf16>
      %c0_38 = arith.constant 0 : index
      %c256 = arith.constant 256 : index
      %48 = vector.load %arg10[%c0_38, %c256] : memref<200x576xbf16, #tpu.memory_space<vmem>>, vector<200x64xbf16>
      tpu.vector_store %arg10[%c0_38, %c256], %47 {strides = array<i32>} : memref<200x576xbf16, #tpu.memory_space<vmem>>, vector<200x64xbf16>,
      %c17 = arith.constant 17 : index
      %c0_39 = arith.constant 0 : index
      %49 = vector.load %arg8[%c17, %c0_39] : memref<232x64xf32, #tpu.memory_space<vmem>>, vector<200x64xf32>
      %50 = arith.truncf %49 : vector<200x64xf32> to vector<200x64xbf16>
      %c0_40 = arith.constant 0 : index
      %c320 = arith.constant 320 : index
      %51 = vector.load %arg10[%c0_40, %c320] : memref<200x576xbf16, #tpu.memory_space<vmem>>, vector<200x64xbf16>
      tpu.vector_store %arg10[%c0_40, %c320], %50 {strides = array<i32>} : memref<200x576xbf16, #tpu.memory_space<vmem>>, vector<200x64xbf16>,
      %c25 = arith.constant 25 : index
      %c0_41 = arith.constant 0 : index
      %52 = vector.load %arg8[%c25, %c0_41] : memref<232x64xf32, #tpu.memory_space<vmem>>, vector<200x64xf32>
      %53 = arith.truncf %52 : vector<200x64xf32> to vector<200x64xbf16>
      %c0_42 = arith.constant 0 : index
      %c384 = arith.constant 384 : index
      %54 = vector.load %arg10[%c0_42, %c384] : memref<200x576xbf16, #tpu.memory_space<vmem>>, vector<200x64xbf16>
      tpu.vector_store %arg10[%c0_42, %c384], %53 {strides = array<i32>} : memref<200x576xbf16, #tpu.memory_space<vmem>>, vector<200x64xbf16>,
      %c26 = arith.constant 26 : index
      %c0_43 = arith.constant 0 : index
      %55 = vector.load %arg8[%c26, %c0_43] : memref<232x64xf32, #tpu.memory_space<vmem>>, vector<200x64xf32>
      %56 = arith.truncf %55 : vector<200x64xf32> to vector<200x64xbf16>
      %c0_44 = arith.constant 0 : index
      %c448 = arith.constant 448 : index
      %57 = vector.load %arg10[%c0_44, %c448] : memref<200x576xbf16, #tpu.memory_space<vmem>>, vector<200x64xbf16>
      tpu.vector_store %arg10[%c0_44, %c448], %56 {strides = array<i32>} : memref<200x576xbf16, #tpu.memory_space<vmem>>, vector<200x64xbf16>,
      %c27 = arith.constant 27 : index
      %c0_45 = arith.constant 0 : index
      %58 = vector.load %arg8[%c27, %c0_45] : memref<232x64xf32, #tpu.memory_space<vmem>>, vector<200x64xf32>
      %59 = arith.truncf %58 : vector<200x64xf32> to vector<200x64xbf16>
      %c0_46 = arith.constant 0 : index
      %c512 = arith.constant 512 : index
      %60 = vector.load %arg10[%c0_46, %c512] : memref<200x576xbf16, #tpu.memory_space<vmem>>, vector<200x64xbf16>
      tpu.vector_store %arg10[%c0_46, %c512], %59 {strides = array<i32>} : memref<200x576xbf16, #tpu.memory_space<vmem>>, vector<200x64xbf16>,
      %c0_47 = arith.constant 0 : index
      %c0_48 = arith.constant 0 : index
      %61 = vector.load %arg10[%c0_47, %c0_48] : memref<200x576xbf16, #tpu.memory_space<vmem>>, vector<200x576xbf16>
      %62 = arith.index_cast %33 : i32 to index
      %c0_49 = arith.constant 0 : index
      %c0_50 = arith.constant 0 : index
      %63 = vector.load %arg1[%62, %c0_49, %c0_50] : memref<36x576x64xbf16, #tpu.memory_space<vmem>>, vector<1x576x64xbf16>
      %64 = vector.shape_cast %63 : vector<1x576x64xbf16> to vector<576x64xbf16>
      %cst_51 = arith.constant dense<0.000000e+00> : vector<200x64xf32>
      %65 = tpu.matmul %61, %64, %cst_51 {dimension_numbers = #tpu.dot_dimension_numbers<[1], [0], [0], [1], [0, 0, 1, 1], [], []>} : vector<200x576xbf16>, vector<576x64xbf16>, vector<200x64xf32> -> vector<200x64xf32>
      %66 = arith.index_cast %33 : i32 to index
      %c0_52 = arith.constant 0 : index
      %c0_53 = arith.constant 0 : index
      %67 = vector.load %arg2[%66, %c0_52, %c0_53] : memref<36x1x64xf32, #tpu.memory_space<vmem>>, vector<1x1x64xf32>
      %68 = vector.shape_cast %67 : vector<1x1x64xf32> to vector<1x64xf32>
      %69 = vector.broadcast %68 : vector<1x64xf32> to vector<200x64xf32>
      %70 = arith.addf %65, %69 : vector<200x64xf32>
      %cst_54 = arith.constant 0.000000e+00 : f32
      %71 = vector.broadcast %cst_54 : f32 to vector<200x64xf32>
      %72 = arith.maximumf %70, %71 : vector<200x64xf32>
      %73 = arith.mulf %72, %6 : vector<200x64xf32>
      %c16_55 = arith.constant 16 : index
      %c0_56 = arith.constant 0 : index
      %74 = vector.load %arg9[%c16_55, %c0_56] : memref<232x64xf32, #tpu.memory_space<vmem>>, vector<200x64xf32>
      tpu.vector_store %arg9[%c16_55, %c0_56], %73 {strides = array<i32>} : memref<232x64xf32, #tpu.memory_space<vmem>>, vector<200x64xf32>,
      %c1_i32_57 = arith.constant 1 : i32
      %75 = arith.addi %33, %c1_i32_57 : i32
      %c5_58 = arith.constant 5 : index
      %c0_59 = arith.constant 0 : index
      %76 = vector.load %arg9[%c5_58, %c0_59] : memref<232x64xf32, #tpu.memory_space<vmem>>, vector<200x64xf32>
      %77 = arith.truncf %76 : vector<200x64xf32> to vector<200x64xbf16>
      %c0_60 = arith.constant 0 : index
      %c0_61 = arith.constant 0 : index
      %78 = vector.load %arg10[%c0_60, %c0_61] : memref<200x576xbf16, #tpu.memory_space<vmem>>, vector<200x64xbf16>
      tpu.vector_store %arg10[%c0_60, %c0_61], %77 {strides = array<i32>} : memref<200x576xbf16, #tpu.memory_space<vmem>>, vector<200x64xbf16>,
      %c6_62 = arith.constant 6 : index
      %c0_63 = arith.constant 0 : index
      %79 = vector.load %arg9[%c6_62, %c0_63] : memref<232x64xf32, #tpu.memory_space<vmem>>, vector<200x64xf32>
      %80 = arith.truncf %79 : vector<200x64xf32> to vector<200x64xbf16>
      %c0_64 = arith.constant 0 : index
      %c64_65 = arith.constant 64 : index
      %81 = vector.load %arg10[%c0_64, %c64_65] : memref<200x576xbf16, #tpu.memory_space<vmem>>, vector<200x64xbf16>
      tpu.vector_store %arg10[%c0_64, %c64_65], %80 {strides = array<i32>} : memref<200x576xbf16, #tpu.memory_space<vmem>>, vector<200x64xbf16>,
      %c7_66 = arith.constant 7 : index
      %c0_67 = arith.constant 0 : index
      %82 = vector.load %arg9[%c7_66, %c0_67] : memref<232x64xf32, #tpu.memory_space<vmem>>, vector<200x64xf32>
      %83 = arith.truncf %82 : vector<200x64xf32> to vector<200x64xbf16>
      %c0_68 = arith.constant 0 : index
      %c128_69 = arith.constant 128 : index
      %84 = vector.load %arg10[%c0_68, %c128_69] : memref<200x576xbf16, #tpu.memory_space<vmem>>, vector<200x64xbf16>
      tpu.vector_store %arg10[%c0_68, %c128_69], %83 {strides = array<i32>} : memref<200x576xbf16, #tpu.memory_space<vmem>>, vector<200x64xbf16>,
      %c15_70 = arith.constant 15 : index
      %c0_71 = arith.constant 0 : index
      %85 = vector.load %arg9[%c15_70, %c0_71] : memref<232x64xf32, #tpu.memory_space<vmem>>, vector<200x64xf32>
      %86 = arith.truncf %85 : vector<200x64xf32> to vector<200x64xbf16>
      %c0_72 = arith.constant 0 : index
      %c192_73 = arith.constant 192 : index
      %87 = vector.load %arg10[%c0_72, %c192_73] : memref<200x576xbf16, #tpu.memory_space<vmem>>, vector<200x64xbf16>
      tpu.vector_store %arg10[%c0_72, %c192_73], %86 {strides = array<i32>} : memref<200x576xbf16, #tpu.memory_space<vmem>>, vector<200x64xbf16>,
      %c16_74 = arith.constant 16 : index
      %c0_75 = arith.constant 0 : index
      %88 = vector.load %arg9[%c16_74, %c0_75] : memref<232x64xf32, #tpu.memory_space<vmem>>, vector<200x64xf32>
      %89 = arith.truncf %88 : vector<200x64xf32> to vector<200x64xbf16>
      %c0_76 = arith.constant 0 : index
      %c256_77 = arith.constant 256 : index
      %90 = vector.load %arg10[%c0_76, %c256_77] : memref<200x576xbf16, #tpu.memory_space<vmem>>, vector<200x64xbf16>
      tpu.vector_store %arg10[%c0_76, %c256_77], %89 {strides = array<i32>} : memref<200x576xbf16, #tpu.memory_space<vmem>>, vector<200x64xbf16>,
      %c17_78 = arith.constant 17 : index
      %c0_79 = arith.constant 0 : index
      %91 = vector.load %arg9[%c17_78, %c0_79] : memref<232x64xf32, #tpu.memory_space<vmem>>, vector<200x64xf32>
      %92 = arith.truncf %91 : vector<200x64xf32> to vector<200x64xbf16>
      %c0_80 = arith.constant 0 : index
      %c320_81 = arith.constant 320 : index
      %93 = vector.load %arg10[%c0_80, %c320_81] : memref<200x576xbf16, #tpu.memory_space<vmem>>, vector<200x64xbf16>
      tpu.vector_store %arg10[%c0_80, %c320_81], %92 {strides = array<i32>} : memref<200x576xbf16, #tpu.memory_space<vmem>>, vector<200x64xbf16>,
      %c25_82 = arith.constant 25 : index
      %c0_83 = arith.constant 0 : index
      %94 = vector.load %arg9[%c25_82, %c0_83] : memref<232x64xf32, #tpu.memory_space<vmem>>, vector<200x64xf32>
      %95 = arith.truncf %94 : vector<200x64xf32> to vector<200x64xbf16>
      %c0_84 = arith.constant 0 : index
      %c384_85 = arith.constant 384 : index
      %96 = vector.load %arg10[%c0_84, %c384_85] : memref<200x576xbf16, #tpu.memory_space<vmem>>, vector<200x64xbf16>
      tpu.vector_store %arg10[%c0_84, %c384_85], %95 {strides = array<i32>} : memref<200x576xbf16, #tpu.memory_space<vmem>>, vector<200x64xbf16>,
      %c26_86 = arith.constant 26 : index
      %c0_87 = arith.constant 0 : index
      %97 = vector.load %arg9[%c26_86, %c0_87] : memref<232x64xf32, #tpu.memory_space<vmem>>, vector<200x64xf32>
      %98 = arith.truncf %97 : vector<200x64xf32> to vector<200x64xbf16>
      %c0_88 = arith.constant 0 : index
      %c448_89 = arith.constant 448 : index
      %99 = vector.load %arg10[%c0_88, %c448_89] : memref<200x576xbf16, #tpu.memory_space<vmem>>, vector<200x64xbf16>
      tpu.vector_store %arg10[%c0_88, %c448_89], %98 {strides = array<i32>} : memref<200x576xbf16, #tpu.memory_space<vmem>>, vector<200x64xbf16>,
      %c27_90 = arith.constant 27 : index
      %c0_91 = arith.constant 0 : index
      %100 = vector.load %arg9[%c27_90, %c0_91] : memref<232x64xf32, #tpu.memory_space<vmem>>, vector<200x64xf32>
      %101 = arith.truncf %100 : vector<200x64xf32> to vector<200x64xbf16>
      %c0_92 = arith.constant 0 : index
      %c512_93 = arith.constant 512 : index
      %102 = vector.load %arg10[%c0_92, %c512_93] : memref<200x576xbf16, #tpu.memory_space<vmem>>, vector<200x64xbf16>
      tpu.vector_store %arg10[%c0_92, %c512_93], %101 {strides = array<i32>} : memref<200x576xbf16, #tpu.memory_space<vmem>>, vector<200x64xbf16>,
      %c0_94 = arith.constant 0 : index
      %c0_95 = arith.constant 0 : index
      %103 = vector.load %arg10[%c0_94, %c0_95] : memref<200x576xbf16, #tpu.memory_space<vmem>>, vector<200x576xbf16>
      %104 = arith.index_cast %75 : i32 to index
      %c0_96 = arith.constant 0 : index
      %c0_97 = arith.constant 0 : index
      %105 = vector.load %arg1[%104, %c0_96, %c0_97] : memref<36x576x64xbf16, #tpu.memory_space<vmem>>, vector<1x576x64xbf16>
      %106 = vector.shape_cast %105 : vector<1x576x64xbf16> to vector<576x64xbf16>
      %cst_98 = arith.constant dense<0.000000e+00> : vector<200x64xf32>
      %107 = tpu.matmul %103, %106, %cst_98 {dimension_numbers = #tpu.dot_dimension_numbers<[1], [0], [0], [1], [0, 0, 1, 1], [], []>} : vector<200x576xbf16>, vector<576x64xbf16>, vector<200x64xf32> -> vector<200x64xf32>
      %108 = arith.index_cast %75 : i32 to index
      %c0_99 = arith.constant 0 : index
      %c0_100 = arith.constant 0 : index
      %109 = vector.load %arg2[%108, %c0_99, %c0_100] : memref<36x1x64xf32, #tpu.memory_space<vmem>>, vector<1x1x64xf32>
      %110 = vector.shape_cast %109 : vector<1x1x64xf32> to vector<1x64xf32>
      %111 = vector.broadcast %110 : vector<1x64xf32> to vector<200x64xf32>
      %112 = arith.addf %107, %111 : vector<200x64xf32>
      %c16_101 = arith.constant 16 : index
      %c0_102 = arith.constant 0 : index
      %113 = vector.load %arg8[%c16_101, %c0_102] : memref<232x64xf32, #tpu.memory_space<vmem>>, vector<200x64xf32>
      %114 = arith.addf %112, %113 : vector<200x64xf32>
      %cst_103 = arith.constant 0.000000e+00 : f32
      %115 = vector.broadcast %cst_103 : f32 to vector<200x64xf32>
      %116 = arith.maximumf %114, %115 : vector<200x64xf32>
      %117 = arith.mulf %116, %6 : vector<200x64xf32>
      %c16_104 = arith.constant 16 : index
      %c0_105 = arith.constant 0 : index
      %118 = vector.load %arg8[%c16_104, %c0_105] : memref<232x64xf32, #tpu.memory_space<vmem>>, vector<200x64xf32>
      tpu.vector_store %arg8[%c16_104, %c0_105], %117 {strides = array<i32>} : memref<232x64xf32, #tpu.memory_space<vmem>>, vector<200x64xf32>,
    }
    %c18_i32_9 = arith.constant 18 : i32
    %c16_10 = arith.constant 16 : index
    %c0_11 = arith.constant 0 : index
    %8 = vector.load %arg8[%c16_10, %c0_11] : memref<232x64xf32, #tpu.memory_space<vmem>>, vector<100x64xf32>
    %cst_12 = arith.constant dense<0.000000e+00> : vector<64xf32>
    %9 = vector.multi_reduction <add>, %8, %cst_12 [0] : vector<100x64xf32> to vector<64xf32>
    %10 = vector.shape_cast %9 : vector<64xf32> to vector<1x64xf32>
    %c116 = arith.constant 116 : index
    %c0_13 = arith.constant 0 : index
    %11 = vector.load %arg8[%c116, %c0_13] : memref<232x64xf32, #tpu.memory_space<vmem>>, vector<100x64xf32>
    %cst_14 = arith.constant dense<0.000000e+00> : vector<64xf32>
    %12 = vector.multi_reduction <add>, %11, %cst_14 [0] : vector<100x64xf32> to vector<64xf32>
    %13 = vector.shape_cast %12 : vector<64xf32> to vector<1x64xf32>
    %14 = tpu.concatenate %10, %13 in 0 : vector<1x64xf32>, vector<1x64xf32> -> vector<2x64xf32>
    %cst_15 = arith.constant 1.562500e-02 : f32
    %15 = vector.broadcast %cst_15 : f32 to vector<2x64xf32>
    %16 = arith.mulf %14, %15 : vector<2x64xf32>
    %c0_16 = arith.constant 0 : index
    %c0_17 = arith.constant 0 : index
    %17 = vector.load %arg4[%c0_16, %c0_17] : memref<64x10xf32, #tpu.memory_space<vmem>>, vector<64x10xf32>
    %cst_18 = arith.constant dense<0.000000e+00> : vector<2x10xf32>
    %18 = tpu.matmul %16, %17, %cst_18 {dimension_numbers = #tpu.dot_dimension_numbers<[1], [0], [0], [1], [0, 0, 1, 1], [], []>} : vector<2x64xf32>, vector<64x10xf32>, vector<2x10xf32> -> vector<2x10xf32>
    %c0_19 = arith.constant 0 : index
    %c0_20 = arith.constant 0 : index
    %19 = vector.load %arg5[%c0_19, %c0_20] : memref<1x10xf32, #tpu.memory_space<vmem>>, vector<1x10xf32>
    %20 = vector.broadcast %19 : vector<1x10xf32> to vector<2x10xf32>
    %21 = arith.addf %18, %20 : vector<2x10xf32>
    %c0_21 = arith.constant 0 : index
    %c0_22 = arith.constant 0 : index
    %22 = vector.load %arg6[%c0_21, %c0_22] : memref<2x10xf32, #tpu.memory_space<vmem>>, vector<2x10xf32>
    tpu.vector_store %arg6[%c0_21, %c0_22], %21 {strides = array<i32>} : memref<2x10xf32, #tpu.memory_space<vmem>>, vector<2x10xf32>,
    %cst_23 = arith.constant dense<0xFF800000> : vector<2xf32>
    %23 = vector.multi_reduction <maximumf>, %21, %cst_23 [1] : vector<2x10xf32> to vector<2xf32>
    %24 = vector.shape_cast %23 : vector<2xf32> to vector<2x1xf32>
    %25 = vector.broadcast %24 : vector<2x1xf32> to vector<2x10xf32>
    %26 = arith.subf %21, %25 : vector<2x10xf32>
    %27 = math.exp %26 : vector<2x10xf32>
    %cst_24 = arith.constant dense<0.000000e+00> : vector<2xf32>
    %28 = vector.multi_reduction <add>, %27, %cst_24 [1] : vector<2x10xf32> to vector<2xf32>
    %29 = vector.shape_cast %28 : vector<2xf32> to vector<2x1xf32>
    %30 = vector.broadcast %29 : vector<2x1xf32> to vector<2x10xf32>
    %31 = arith.divf %27, %30 : vector<2x10xf32>
    %c0_25 = arith.constant 0 : index
    %c0_26 = arith.constant 0 : index
    %32 = vector.load %arg7[%c0_25, %c0_26] : memref<2x10xf32, #tpu.memory_space<vmem>>, vector<2x10xf32>
    tpu.vector_store %arg7[%c0_25, %c0_26], %31 {strides = array<i32>} : memref<2x10xf32, #tpu.memory_space<vmem>>, vector<2x10xf32>,
    return
  }
}

</mosaic_0001>

<llo_original>
// kernel: resnet110_server_v3_forward.1
$region0: #{resnet110_server_v3_forward.1}
  #allocation0 [shape = 'u32[]', space=smem, size = 0x4, offset = 0x4, fixed_abs, tag = 'smem constant byte address 0x4 - core index']
  #allocation1 [shape = 'u32[144,128]{1,0:T(1,128)}', space=vmem, size = 0x12000, scoped, tag = 'internal scratch']
  #allocation2 [shape = 'f32[232,64]{1,0:T(8,128)}', space=vmem, size = 0x1d000, scoped, tag = 'scratch operand']
  #allocation3 [shape = 'f32[232,64]{1,0:T(8,128)}', space=vmem, size = 0x1d000, scoped, tag = 'scratch operand']
  #allocation4 [shape = 'bf16[200,576]{1,0:T(8,128)(2,1)}', space=vmem, size = 0x3e800, scoped, tag = 'scratch operand']
  %s0 = inlined_call_operand.vmem [shape: f32[200,64], index: 0, kind: input, shape index: {}]
  %s1 = inlined_call_operand.vmem [shape: bf16[36,576,64], index: 1, kind: input, shape index: {}]
  %s2 = inlined_call_operand.vmem [shape: f32[36,1,64], index: 2, kind: input, shape index: {}]
  %s3 = inlined_call_operand.vmem [shape: f32[200,64], index: 3, kind: input, shape index: {}]
  %s4 = inlined_call_operand.vmem [shape: f32[64,10], index: 4, kind: input, shape index: {}]
  %s5 = inlined_call_operand.vmem [shape: f32[1,10], index: 5, kind: input, shape index: {}]
  %s6 = inlined_call_operand.hbm [shape: f32[2,10], index: 6, kind: output, shape index: {0}]
  %s7 = inlined_call_operand.hbm [shape: f32[2,10], index: 7, kind: output, shape index: {1}]
  %8 = xla_tuple %s6, %s7
  %s9 = sld [smem:[#allocation0]]
  $region49: #{resnet110_server_v3_forward.1} parent=0
    _
  %s11 = ssub.s32 1, %s9
  %s12 = scalar_select 0, %s11, %s9
  $region1: #{resnet110_server_v3_forward.1} parent=0
    #allocation5 [shape = 'u8[1024]{0}', space=vmem, size = 0x400, scoped, tag = 'output window, operand 0, single buffered']
    #allocation6 [shape = 's32[1]{0}', space=sflag, size = 0x4, scoped, tag = 'scoped memory for resnet110_server_v3_forward.1']
    #allocation7 [shape = 'u8[1024]{0}', space=vmem, size = 0x400, scoped, tag = 'output window, operand 1, single buffered']
    #allocation8 [shape = 's32[1]{0}', space=sflag, size = 0x4, scoped, tag = 'scoped memory for resnet110_server_v3_forward.1']
    %13 = vsyncpa [#allocation6], 0
    %14 = vsyncpa [#allocation8], 0
    // Predicated region
    $region2: #{resnet110_server_v3_forward.1} parent=1 // pred_check
      _
    $region3: #{resnet110_server_v3_forward.1} parent=1 // pred_check_branch
      %16 = sbr.rel (0) target = $region5
    $region4: #{resnet110_server_v3_forward.1} parent=1 // pred_region
      _
    $region5: #{resnet110_server_v3_forward.1} parent=1 // pred_fallthru
      _
    // Predicated region
    $region6: #{resnet110_server_v3_forward.1} parent=1 // pred_check
      _
    $region7: #{resnet110_server_v3_forward.1} parent=1 // pred_check_branch
      %18 = sbr.rel (0) target = $region9
    $region8: #{resnet110_server_v3_forward.1} parent=1 // pred_region
      _
    $region9: #{resnet110_server_v3_forward.1} parent=1 // pred_fallthru
      _
    // Predicated region
    $region10: #{resnet110_server_v3_forward.1} parent=1 // pred_check
      _
    $region11: #{resnet110_server_v3_forward.1} parent=1 // pred_check_branch
      %20 = sbr.rel (0) target = $region13
    $region12: #{resnet110_server_v3_forward.1} parent=1 // pred_region
      _
    $region13: #{resnet110_server_v3_forward.1} parent=1 // pred_fallthru
      _
    // Predicated region
    $region14: #{resnet110_server_v3_forward.1} parent=1 // pred_check
      _
    $region15: #{resnet110_server_v3_forward.1} parent=1 // pred_check_branch
      %22 = sbr.rel (0) target = $region17
    $region16: #{resnet110_server_v3_forward.1} parent=1 // pred_region
      _
    $region17: #{resnet110_server_v3_forward.1} parent=1 // pred_fallthru
      _
    // Predicated region
    $region18: #{resnet110_server_v3_forward.1} parent=1 // pred_check
      _
    $region19: #{resnet110_server_v3_forward.1} parent=1 // pred_check_branch
      %24 = sbr.rel (0) target = $region21
    $region20: #{resnet110_server_v3_forward.1} parent=1 // pred_region
      _
    $region21: #{resnet110_server_v3_forward.1} parent=1 // pred_fallthru
      _
    // Predicated region
    $region22: #{resnet110_server_v3_forward.1} parent=1 // pred_check
      _
    $region23: #{resnet110_server_v3_forward.1} parent=1 // pred_check_branch
      %26 = sbr.rel (0) target = $region25
    $region24: #{resnet110_server_v3_forward.1} parent=1 // pred_region
      _
    $region25: #{resnet110_server_v3_forward.1} parent=1 // pred_fallthru
      _
    %vm28 = vcmask 523264
    %29 = vst.msk [vmem:[#allocation2] sm:$0xff] %vm28, 0.0
    %30 = vst.msk [vmem:[#allocation2 + $0x8] sm:$0xff] %vm28, 0.0
    %31 = vst.msk [vmem:[#allocation2 + $0x10] sm:$0xff] %vm28, 0.0
    %32 = vst.msk [vmem:[#allocation2 + $0x18] sm:$0xff] %vm28, 0.0
    %33 = vst.msk [vmem:[#allocation2 + $0x20] sm:$0xff] %vm28, 0.0
    %34 = vst.msk [vmem:[#allocation2 + $0x28] sm:$0xff] %vm28, 0.0
    %35 = vst.msk [vmem:[#allocation2 + $0x30] sm:$0xff] %vm28, 0.0
    %36 = vst.msk [vmem:[#allocation2 + $0x38] sm:$0xff] %vm28, 0.0
    %37 = vst.msk [vmem:[#allocation2 + $0x40] sm:$0xff] %vm28, 0.0
    %38 = vst.msk [vmem:[#allocation2 + $0x48] sm:$0xff] %vm28, 0.0
    %39 = vst.msk [vmem:[#allocation2 + $0x50] sm:$0xff] %vm28, 0.0
    %40 = vst.msk [vmem:[#allocation2 + $0x58] sm:$0xff] %vm28, 0.0
    %41 = vst.msk [vmem:[#allocation2 + $0x60] sm:$0xff] %vm28, 0.0
    %42 = vst.msk [vmem:[#allocation2 + $0x68] sm:$0xff] %vm28, 0.0
    %43 = vst.msk [vmem:[#allocation2 + $0x70] sm:$0xff] %vm28, 0.0
    %44 = vst.msk [vmem:[#allocation2 + $0x78] sm:$0xff] %vm28, 0.0
    %45 = vst.msk [vmem:[#allocation2 + $0x80] sm:$0xff] %vm28, 0.0
    %46 = vst.msk [vmem:[#allocation2 + $0x88] sm:$0xff] %vm28, 0.0
    %47 = vst.msk [vmem:[#allocation2 + $0x90] sm:$0xff] %vm28, 0.0
    %48 = vst.msk [vmem:[#allocation2 + $0x98] sm:$0xff] %vm28, 0.0
    %49 = vst.msk [vmem:[#allocation2 + $0xa0] sm:$0xff] %vm28, 0.0
    %50 = vst.msk [vmem:[#allocation2 + $0xa8] sm:$0xff] %vm28, 0.0
    %51 = vst.msk [vmem:[#allocation2 + $0xb0] sm:$0xff] %vm28, 0.0
    %52 = vst.msk [vmem:[#allocation2 + $0xb8] sm:$0xff] %vm28, 0.0
    %53 = vst.msk [vmem:[#allocation2 + $0xc0] sm:$0xff] %vm28, 0.0
    %54 = vst.msk [vmem:[#allocation2 + $0xc8] sm:$0xff] %vm28, 0.0
    %55 = vst.msk [vmem:[#allocation2 + $0xd0] sm:$0xff] %vm28, 0.0
    %56 = vst.msk [vmem:[#allocation2 + $0xd8] sm:$0xff] %vm28, 0.0
    %57 = vst.msk [vmem:[#allocation2 + $0xe0] sm:$0xff] %vm28, 0.0
    %58 = vst.msk [vmem:[#allocation3] sm:$0xff] %vm28, 0.0
    %59 = vst.msk [vmem:[#allocation3 + $0x8] sm:$0xff] %vm28, 0.0
    %60 = vst.msk [vmem:[#allocation3 + $0x10] sm:$0xff] %vm28, 0.0
    %61 = vst.msk [vmem:[#allocation3 + $0x18] sm:$0xff] %vm28, 0.0
    %62 = vst.msk [vmem:[#allocation3 + $0x20] sm:$0xff] %vm28, 0.0
    %63 = vst.msk [vmem:[#allocation3 + $0x28] sm:$0xff] %vm28, 0.0
    %64 = vst.msk [vmem:[#allocation3 + $0x30] sm:$0xff] %vm28, 0.0
    %65 = vst.msk [vmem:[#allocation3 + $0x38] sm:$0xff] %vm28, 0.0
    %66 = vst.msk [vmem:[#allocation3 + $0x40] sm:$0xff] %vm28, 0.0
    %67 = vst.msk [vmem:[#allocation3 + $0x48] sm:$0xff] %vm28, 0.0
    %68 = vst.msk [vmem:[#allocation3 + $0x50] sm:$0xff] %vm28, 0.0
    %69 = vst.msk [vmem:[#allocation3 + $0x58] sm:$0xff] %vm28, 0.0
    %70 = vst.msk [vmem:[#allocation3 + $0x60] sm:$0xff] %vm28, 0.0
    %71 = vst.msk [vmem:[#allocation3 + $0x68] sm:$0xff] %vm28, 0.0
    %72 = vst.msk [vmem:[#allocation3 + $0x70] sm:$0xff] %vm28, 0.0
    %73 = vst.msk [vmem:[#allocation3 + $0x78] sm:$0xff] %vm28, 0.0
    %74 = vst.msk [vmem:[#allocation3 + $0x80] sm:$0xff] %vm28, 0.0
    %75 = vst.msk [vmem:[#allocation3 + $0x88] sm:$0xff] %vm28, 0.0
    %76 = vst.msk [vmem:[#allocation3 + $0x90] sm:$0xff] %vm28, 0.0
    %77 = vst.msk [vmem:[#allocation3 + $0x98] sm:$0xff] %vm28, 0.0
    %78 = vst.msk [vmem:[#allocation3 + $0xa0] sm:$0xff] %vm28, 0.0
    %79 = vst.msk [vmem:[#allocation3 + $0xa8] sm:$0xff] %vm28, 0.0
    %80 = vst.msk [vmem:[#allocation3 + $0xb0] sm:$0xff] %vm28, 0.0
    %81 = vst.msk [vmem:[#allocation3 + $0xb8] sm:$0xff] %vm28, 0.0
    %82 = vst.msk [vmem:[#allocation3 + $0xc0] sm:$0xff] %vm28, 0.0
    %83 = vst.msk [vmem:[#allocation3 + $0xc8] sm:$0xff] %vm28, 0.0
    %84 = vst.msk [vmem:[#allocation3 + $0xd0] sm:$0xff] %vm28, 0.0
    %85 = vst.msk [vmem:[#allocation3 + $0xd8] sm:$0xff] %vm28, 0.0
    %86 = vst.msk [vmem:[#allocation3 + $0xe0] sm:$0xff] %vm28, 0.0
    %v87 = vld [vmem:[%s0] sm:$0xff]
    %v88 = vld [vmem:[%s0 + $0x8] sm:$0xff]
    %v89 = vld [vmem:[%s0 + $0x10] sm:$0xff]
    %v90 = vld [vmem:[%s0 + $0x18] sm:$0xff]
    %v91 = vld [vmem:[%s0 + $0x20] sm:$0xff]
    %v92 = vld [vmem:[%s0 + $0x28] sm:$0xff]
    %v93 = vld [vmem:[%s0 + $0x30] sm:$0xff]
    %v94 = vld [vmem:[%s0 + $0x38] sm:$0xff]
    %v95 = vld [vmem:[%s0 + $0x40] sm:$0xff]
    %v96 = vld [vmem:[%s0 + $0x48] sm:$0xff]
    %v97 = vld [vmem:[%s0 + $0x50] sm:$0xff]
    %v98 = vld [vmem:[%s0 + $0x58] sm:$0xff]
    %v99 = vld [vmem:[%s0 + $0x60] sm:$0xff]
    %v100 = vld [vmem:[%s0 + $0x68] sm:$0xff]
    %v101 = vld [vmem:[%s0 + $0x70] sm:$0xff]
    %v102 = vld [vmem:[%s0 + $0x78] sm:$0xff]
    %v103 = vld [vmem:[%s0 + $0x80] sm:$0xff]
    %v104 = vld [vmem:[%s0 + $0x88] sm:$0xff]
    %v105 = vld [vmem:[%s0 + $0x90] sm:$0xff]
    %v106 = vld [vmem:[%s0 + $0x98] sm:$0xff]
    %v107 = vld [vmem:[%s0 + $0xa0] sm:$0xff]
    %v108 = vld [vmem:[%s0 + $0xa8] sm:$0xff]
    %v109 = vld [vmem:[%s0 + $0xb0] sm:$0xff]
    %v110 = vld [vmem:[%s0 + $0xb8] sm:$0xff]
    %v111 = vld [vmem:[%s0 + $0xc0] sm:$0xff]
    %112 = vst.msk [vmem:[#allocation2 + $0x10] sm:$0xff] %vm28, %v87
    %113 = vst.msk [vmem:[#allocation2 + $0x18] sm:$0xff] %vm28, %v88
    %114 = vst.msk [vmem:[#allocation2 + $0x20] sm:$0xff] %vm28, %v89
    %115 = vst.msk [vmem:[#allocation2 + $0x28] sm:$0xff] %vm28, %v90
    %116 = vst.msk [vmem:[#allocation2 + $0x30] sm:$0xff] %vm28, %v91
    %117 = vst.msk [vmem:[#allocation2 + $0x38] sm:$0xff] %vm28, %v92
    %118 = vst.msk [vmem:[#allocation2 + $0x40] sm:$0xff] %vm28, %v93
    %119 = vst.msk [vmem:[#allocation2 + $0x48] sm:$0xff] %vm28, %v94
    %120 = vst.msk [vmem:[#allocation2 + $0x50] sm:$0xff] %vm28, %v95
    %121 = vst.msk [vmem:[#allocation2 + $0x58] sm:$0xff] %vm28, %v96
    %122 = vst.msk [vmem:[#allocation2 + $0x60] sm:$0xff] %vm28, %v97
    %123 = vst.msk [vmem:[#allocation2 + $0x68] sm:$0xff] %vm28, %v98
    %124 = vst.msk [vmem:[#allocation2 + $0x70] sm:$0xff] %vm28, %v99
    %125 = vst.msk [vmem:[#allocation2 + $0x78] sm:$0xff] %vm28, %v100
    %126 = vst.msk [vmem:[#allocation2 + $0x80] sm:$0xff] %vm28, %v101
    %127 = vst.msk [vmem:[#allocation2 + $0x88] sm:$0xff] %vm28, %v102
    %128 = vst.msk [vmem:[#allocation2 + $0x90] sm:$0xff] %vm28, %v103
    %129 = vst.msk [vmem:[#allocation2 + $0x98] sm:$0xff] %vm28, %v104
    %130 = vst.msk [vmem:[#allocation2 + $0xa0] sm:$0xff] %vm28, %v105
    %131 = vst.msk [vmem:[#allocation2 + $0xa8] sm:$0xff] %vm28, %v106
    %132 = vst.msk [vmem:[#allocation2 + $0xb0] sm:$0xff] %vm28, %v107
    %133 = vst.msk [vmem:[#allocation2 + $0xb8] sm:$0xff] %vm28, %v108
    %134 = vst.msk [vmem:[#allocation2 + $0xc0] sm:$0xff] %vm28, %v109
    %135 = vst.msk [vmem:[#allocation2 + $0xc8] sm:$0xff] %vm28, %v110
    %136 = vst.msk [vmem:[#allocation2 + $0xd0] sm:$0xff] %vm28, %v111
    %v137 = vld [vmem:[%s3] sm:$0xff]
    %v138 = vld [vmem:[%s3 + $0x8] sm:$0xff]
    %v139 = vld [vmem:[%s3 + $0x10] sm:$0xff]
    %v140 = vld [vmem:[%s3 + $0x18] sm:$0xff]
    %v141 = vld [vmem:[%s3 + $0x20] sm:$0xff]
    %v142 = vld [vmem:[%s3 + $0x28] sm:$0xff]
    %v143 = vld [vmem:[%s3 + $0x30] sm:$0xff]
    %v144 = vld [vmem:[%s3 + $0x38] sm:$0xff]
    %v145 = vld [vmem:[%s3 + $0x40] sm:$0xff]
    %v146 = vld [vmem:[%s3 + $0x48] sm:$0xff]
    %v147 = vld [vmem:[%s3 + $0x50] sm:$0xff]
    %v148 = vld [vmem:[%s3 + $0x58] sm:$0xff]
    %v149 = vld [vmem:[%s3 + $0x60] sm:$0xff]
    %v150 = vld [vmem:[%s3 + $0x68] sm:$0xff]
    %v151 = vld [vmem:[%s3 + $0x70] sm:$0xff]
    %v152 = vld [vmem:[%s3 + $0x78] sm:$0xff]
    %v153 = vld [vmem:[%s3 + $0x80] sm:$0xff]
    %v154 = vld [vmem:[%s3 + $0x88] sm:$0xff]
    %v155 = vld [vmem:[%s3 + $0x90] sm:$0xff]
    %v156 = vld [vmem:[%s3 + $0x98] sm:$0xff]
    %v157 = vld [vmem:[%s3 + $0xa0] sm:$0xff]
    %v158 = vld [vmem:[%s3 + $0xa8] sm:$0xff]
    %v159 = vld [vmem:[%s3 + $0xb0] sm:$0xff]
    %v160 = vld [vmem:[%s3 + $0xb8] sm:$0xff]
    %v161 = vld [vmem:[%s3 + $0xc0] sm:$0xff]
    loop: start=0, step=1, limit=18
    $region26: #{resnet110_server_v3_forward.1} parent=1 // loop_pre_header
      _
    $region27: #{resnet110_server_v3_forward.1} parent=1 // loop_header
      %s163 = sphi 0, %s167
      %p164 = scmp.ge.s32.totalorder %s163, 18
    $region28: #{resnet110_server_v3_forward.1} parent=1 // loop_header_branch
      %166 = sbr.rel (%p164) target = $region32
    $region29: #{resnet110_server_v3_forward.1} parent=1 // loop_body
      %s168 = smul.u32 %s163, 2
      %v169 = vld [vmem:[#allocation2 + $0x5] sm:$0xff]
      %v170 = vld [vmem:[#allocation2 + $0xd] sm:$0xff]
      %v171 = vld [vmem:[#allocation2 + $0x15] sm:$0xff]
      %v172 = vld [vmem:[#allocation2 + $0x1d] sm:$0xff]
      %v173 = vld [vmem:[#allocation2 + $0x25] sm:$0xff]
      %v174 = vld [vmem:[#allocation2 + $0x2d] sm:$0xff]
      %v175 = vld [vmem:[#allocation2 + $0x35] sm:$0xff]
      %v176 = vld [vmem:[#allocation2 + $0x3d] sm:$0xff]
      %v177 = vld [vmem:[#allocation2 + $0x45] sm:$0xff]
      %v178 = vld [vmem:[#allocation2 + $0x4d] sm:$0xff]
      %v179 = vld [vmem:[#allocation2 + $0x55] sm:$0xff]
      %v180 = vld [vmem:[#allocation2 + $0x5d] sm:$0xff]
      %v181 = vld [vmem:[#allocation2 + $0x65] sm:$0xff]
      %v182 = vld [vmem:[#allocation2 + $0x6d] sm:$0xff]
      %v183 = vld [vmem:[#allocation2 + $0x75] sm:$0xff]
      %v184 = vld [vmem:[#allocation2 + $0x7d] sm:$0xff]
      %v185 = vld [vmem:[#allocation2 + $0x85] sm:$0xff]
      %v186 = vld [vmem:[#allocation2 + $0x8d] sm:$0xff]
      %v187 = vld [vmem:[#allocation2 + $0x95] sm:$0xff]
      %v188 = vld [vmem:[#allocation2 + $0x9d] sm:$0xff]
      %v189 = vld [vmem:[#allocation2 + $0xa5] sm:$0xff]
      %v190 = vld [vmem:[#allocation2 + $0xad] sm:$0xff]
      %v191 = vld [vmem:[#allocation2 + $0xb5] sm:$0xff]
      %v192 = vld [vmem:[#allocation2 + $0xbd] sm:$0xff]
      %v193 = vld [vmem:[#allocation2 + $0xc5] sm:$0xff]
      %v194 = vpack.c.bf16 %v170, %v169
      %v195 = vpack.c.bf16 %v172, %v171
      %v196 = vpack.c.bf16 %v174, %v173
      %v197 = vpack.c.bf16 %v176, %v175
      %v198 = vpack.c.bf16 %v178, %v177
      %v199 = vpack.c.bf16 %v180, %v179
      %v200 = vpack.c.bf16 %v182, %v181
      %v201 = vpack.c.bf16 %v184, %v183
      %v202 = vpack.c.bf16 %v186, %v185
      %v203 = vpack.c.bf16 %v188, %v187
      %v204 = vpack.c.bf16 %v190, %v189
      %v205 = vpack.c.bf16 %v192, %v191
      %v206 = vpack.c.bf16 %v193, %v193
      %v220 = vunpack.c.l.b16 %v194
      %v221 = vunpack.c.h.b16 %v194
      %v222 = vunpack.c.l.b16 %v195
      %v223 = vunpack.c.h.b16 %v195
      %v224 = vunpack.c.l.b16 %v196
      %v225 = vunpack.c.h.b16 %v196
      %v226 = vunpack.c.l.b16 %v197
      %v227 = vunpack.c.h.b16 %v197
      %v228 = vunpack.c.l.b16 %v198
      %v229 = vunpack.c.h.b16 %v198
      %v230 = vunpack.c.l.b16 %v199
      %v231 = vunpack.c.h.b16 %v199
      %v232 = vunpack.c.l.b16 %v200
      %v233 = vunpack.c.h.b16 %v200
      %v234 = vunpack.c.l.b16 %v201
      %v235 = vunpack.c.h.b16 %v201
      %v236 = vunpack.c.l.b16 %v202
      %v237 = vunpack.c.h.b16 %v202
      %v238 = vunpack.c.l.b16 %v203
      %v239 = vunpack.c.h.b16 %v203
      %v240 = vunpack.c.l.b16 %v204
      %v241 = vunpack.c.h.b16 %v204
      %v242 = vunpack.c.l.b16 %v205
      %v243 = vunpack.c.h.b16 %v205
      %v244 = vunpack.c.l.b16 %v206
      %v245 = vpack.c.b16 %v220, %v220
      %v246 = vpack.c.b16 %v221, %v221
      %v247 = vpack.c.b16 %v222, %v222
      %v248 = vpack.c.b16 %v223, %v223
      %v249 = vpack.c.b16 %v224, %v224
      %v250 = vpack.c.b16 %v225, %v225
      %v251 = vpack.c.b16 %v226, %v226
      %v252 = vpack.c.b16 %v227, %v227
      %v253 = vpack.c.b16 %v228, %v228
      %v254 = vpack.c.b16 %v229, %v229
      %v255 = vpack.c.b16 %v230, %v230
      %v256 = vpack.c.b16 %v231, %v231
      %v257 = vpack.c.b16 %v232, %v232
      %v258 = vpack.c.b16 %v233, %v233
      %v259 = vpack.c.b16 %v234, %v234
      %v260 = vpack.c.b16 %v235, %v235
      %v261 = vpack.c.b16 %v236, %v236
      %v262 = vpack.c.b16 %v237, %v237
      %v263 = vpack.c.b16 %v238, %v238
      %v264 = vpack.c.b16 %v239, %v239
      %v265 = vpack.c.b16 %v240, %v240
      %v266 = vpack.c.b16 %v241, %v241
      %v267 = vpack.c.b16 %v242, %v242
      %v268 = vpack.c.b16 %v243, %v243
      %v269 = vpack.c.b16 %v244, %v244
      %vm295 = vcmask 519168
      %296 = vst.msk [vmem:[#allocation4] sm:$0xf] %vm295, %v245
      %297 = vst.msk [vmem:[#allocation4 + $0x14] sm:$0xf] %vm295, %v246
      %298 = vst.msk [vmem:[#allocation4 + $0x28] sm:$0xf] %vm295, %v247
      %299 = vst.msk [vmem:[#allocation4 + $0x3c] sm:$0xf] %vm295, %v248
      %300 = vst.msk [vmem:[#allocation4 + $0x50] sm:$0xf] %vm295, %v249
      %301 = vst.msk [vmem:[#allocation4 + $0x64] sm:$0xf] %vm295, %v250
      %302 = vst.msk [vmem:[#allocation4 + $0x78] sm:$0xf] %vm295, %v251
      %303 = vst.msk [vmem:[#allocation4 + $0x8c] sm:$0xf] %vm295, %v252
      %304 = vst.msk [vmem:[#allocation4 + $0xa0] sm:$0xf] %vm295, %v253
      %305 = vst.msk [vmem:[#allocation4 + $0xb4] sm:$0xf] %vm295, %v254
      %306 = vst.msk [vmem:[#allocation4 + $0xc8] sm:$0xf] %vm295, %v255
      %307 = vst.msk [vmem:[#allocation4 + $0xdc] sm:$0xf] %vm295, %v256
      %308 = vst.msk [vmem:[#allocation4 + $0xf0] sm:$0xf] %vm295, %v257
      %309 = vst.msk [vmem:[#allocation4 + $0x104] sm:$0xf] %vm295, %v258
      %310 = vst.msk [vmem:[#allocation4 + $0x118] sm:$0xf] %vm295, %v259
      %311 = vst.msk [vmem:[#allocation4 + $0x12c] sm:$0xf] %vm295, %v260
      %312 = vst.msk [vmem:[#allocation4 + $0x140] sm:$0xf] %vm295, %v261
      %313 = vst.msk [vmem:[#allocation4 + $0x154] sm:$0xf] %vm295, %v262
      %314 = vst.msk [vmem:[#allocation4 + $0x168] sm:$0xf] %vm295, %v263
      %315 = vst.msk [vmem:[#allocation4 + $0x17c] sm:$0xf] %vm295, %v264
      %316 = vst.msk [vmem:[#allocation4 + $0x190] sm:$0xf] %vm295, %v265
      %317 = vst.msk [vmem:[#allocation4 + $0x1a4] sm:$0xf] %vm295, %v266
      %318 = vst.msk [vmem:[#allocation4 + $0x1b8] sm:$0xf] %vm295, %v267
      %319 = vst.msk [vmem:[#allocation4 + $0x1cc] sm:$0xf] %vm295, %v268
      %320 = vst.msk [vmem:[#allocation4 + $0x1e0] sm:$0xf] %vm295, %v269
      %v321 = vld [vmem:[#allocation2 + $0x6] sm:$0xff]
      %v322 = vld [vmem:[#allocation2 + $0xe] sm:$0xff]
      %v323 = vld [vmem:[#allocation2 + $0x16] sm:$0xff]
      %v324 = vld [vmem:[#allocation2 + $0x1e] sm:$0xff]
      %v325 = vld [vmem:[#allocation2 + $0x26] sm:$0xff]
      %v326 = vld [vmem:[#allocation2 + $0x2e] sm:$0xff]
      %v327 = vld [vmem:[#allocation2 + $0x36] sm:$0xff]
      %v328 = vld [vmem:[#allocation2 + $0x3e] sm:$0xff]
      %v329 = vld [vmem:[#allocation2 + $0x46] sm:$0xff]
      %v330 = vld [vmem:[#allocation2 + $0x4e] sm:$0xff]
      %v331 = vld [vmem:[#allocation2 + $0x56] sm:$0xff]
      %v332 = vld [vmem:[#allocation2 + $0x5e] sm:$0xff]
      %v333 = vld [vmem:[#allocation2 + $0x66] sm:$0xff]
      %v334 = vld [vmem:[#allocation2 + $0x6e] sm:$0xff]
      %v335 = vld [vmem:[#allocation2 + $0x76] sm:$0xff]
      %v336 = vld [vmem:[#allocation2 + $0x7e] sm:$0xff]
      %v337 = vld [vmem:[#allocation2 + $0x86] sm:$0xff]
      %v338 = vld [vmem:[#allocation2 + $0x8e] sm:$0xff]
      %v339 = vld [vmem:[#allocation2 + $0x96] sm:$0xff]
      %v340 = vld [vmem:[#allocation2 + $0x9e] sm:$0xff]
      %v341 = vld [vmem:[#allocation2 + $0xa6] sm:$0xff]
      %v342 = vld [vmem:[#allocation2 + $0xae] sm:$0xff]
      %v343 = vld [vmem:[#allocation2 + $0xb6] sm:$0xff]
      %v344 = vld [vmem:[#allocation2 + $0xbe] sm:$0xff]
      %v345 = vld [vmem:[#allocation2 + $0xc6] sm:$0xff]
      %v346 = vpack.c.bf16 %v322, %v321
      %v347 = vpack.c.bf16 %v324, %v323
      %v348 = vpack.c.bf16 %v326, %v325
      %v349 = vpack.c.bf16 %v328, %v327
      %v350 = vpack.c.bf16 %v330, %v329
      %v351 = vpack.c.bf16 %v332, %v331
      %v352 = vpack.c.bf16 %v334, %v333
      %v353 = vpack.c.bf16 %v336, %v335
      %v354 = vpack.c.bf16 %v338, %v337
      %v355 = vpack.c.bf16 %v340, %v339
      %v356 = vpack.c.bf16 %v342, %v341
      %v357 = vpack.c.bf16 %v344, %v343
      %v358 = vpack.c.bf16 %v345, %v345
      %v372 = vunpack.c.l.b16 %v346
      %v373 = vunpack.c.h.b16 %v346
      %v374 = vunpack.c.l.b16 %v347
      %v375 = vunpack.c.h.b16 %v347
      %v376 = vunpack.c.l.b16 %v348
      %v377 = vunpack.c.h.b16 %v348
      %v378 = vunpack.c.l.b16 %v349
      %v379 = vunpack.c.h.b16 %v349
      %v380 = vunpack.c.l.b16 %v350
      %v381 = vunpack.c.h.b16 %v350
      %v382 = vunpack.c.l.b16 %v351
      %v383 = vunpack.c.h.b16 %v351
      %v384 = vunpack.c.l.b16 %v352
      %v385 = vunpack.c.h.b16 %v352
      %v386 = vunpack.c.l.b16 %v353
      %v387 = vunpack.c.h.b16 %v353
      %v388 = vunpack.c.l.b16 %v354
      %v389 = vunpack.c.h.b16 %v354
      %v390 = vunpack.c.l.b16 %v355
      %v391 = vunpack.c.h.b16 %v355
      %v392 = vunpack.c.l.b16 %v356
      %v393 = vunpack.c.h.b16 %v356
      %v394 = vunpack.c.l.b16 %v357
      %v395 = vunpack.c.h.b16 %v357
      %v396 = vunpack.c.l.b16 %v358
      %v397 = vpack.c.b16 %v372, %v372
      %v398 = vpack.c.b16 %v373, %v373
      %v399 = vpack.c.b16 %v374, %v374
      %v400 = vpack.c.b16 %v375, %v375
      %v401 = vpack.c.b16 %v376, %v376
      %v402 = vpack.c.b16 %v377, %v377
      %v403 = vpack.c.b16 %v378, %v378
      %v404 = vpack.c.b16 %v379, %v379
      %v405 = vpack.c.b16 %v380, %v380
      %v406 = vpack.c.b16 %v381, %v381
      %v407 = vpack.c.b16 %v382, %v382
      %v408 = vpack.c.b16 %v383, %v383
      %v409 = vpack.c.b16 %v384, %v384
      %v410 = vpack.c.b16 %v385, %v385
      %v411 = vpack.c.b16 %v386, %v386
      %v412 = vpack.c.b16 %v387, %v387
      %v413 = vpack.c.b16 %v388, %v388
      %v414 = vpack.c.b16 %v389, %v389
      %v415 = vpack.c.b16 %v390, %v390
      %v416 = vpack.c.b16 %v391, %v391
      %v417 = vpack.c.b16 %v392, %v392
      %v418 = vpack.c.b16 %v393, %v393
      %v419 = vpack.c.b16 %v394, %v394
      %v420 = vpack.c.b16 %v395, %v395
      %v421 = vpack.c.b16 %v396, %v396
      %422 = vrot.lane.b32.xlu0 %v397, 64
      %v423 = vpop.permute.xlu0 %422
      %424 = vrot.lane.b32.xlu0 %v398, 64
      %v425 = vpop.permute.xlu0 %424
      %426 = vrot.lane.b32.xlu0 %v399, 64
      %v427 = vpop.permute.xlu0 %426
      %428 = vrot.lane.b32.xlu0 %v400, 64
      %v429 = vpop.permute.xlu0 %428
      %430 = vrot.lane.b32.xlu0 %v401, 64
      %v431 = vpop.permute.xlu0 %430
      %432 = vrot.lane.b32.xlu0 %v402, 64
      %v433 = vpop.permute.xlu0 %432
      %434 = vrot.lane.b32.xlu0 %v403, 64
      %v435 = vpop.permute.xlu0 %434
      %436 = vrot.lane.b32.xlu0 %v404, 64
      %v437 = vpop.permute.xlu0 %436
      %438 = vrot.lane.b32.xlu0 %v405, 64
      %v439 = vpop.permute.xlu0 %438
      %440 = vrot.lane.b32.xlu0 %v406, 64
      %v441 = vpop.permute.xlu0 %440
      %442 = vrot.lane.b32.xlu0 %v407, 64
      %v443 = vpop.permute.xlu0 %442
      %444 = vrot.lane.b32.xlu0 %v408, 64
      %v445 = vpop.permute.xlu0 %444
      %446 = vrot.lane.b32.xlu0 %v409, 64
      %v447 = vpop.permute.xlu0 %446
      %448 = vrot.lane.b32.xlu0 %v410, 64
      %v449 = vpop.permute.xlu0 %448
      %450 = vrot.lane.b32.xlu0 %v411, 64
      %v451 = vpop.permute.xlu0 %450
      %452 = vrot.lane.b32.xlu0 %v412, 64
      %v453 = vpop.permute.xlu0 %452
      %454 = vrot.lane.b32.xlu0 %v413, 64
      %v455 = vpop.permute.xlu0 %454
      %456 = vrot.lane.b32.xlu0 %v414, 64
      %v457 = vpop.permute.xlu0 %456
      %458 = vrot.lane.b32.xlu0 %v415, 64
      %v459 = vpop.permute.xlu0 %458
      %460 = vrot.lane.b32.xlu0 %v416, 64
      %v461 = vpop.permute.xlu0 %460
      %462 = vrot.lane.b32.xlu0 %v417, 64
      %v463 = vpop.permute.xlu0 %462
      %464 = vrot.lane.b32.xlu0 %v418, 64
      %v465 = vpop.permute.xlu0 %464
      %466 = vrot.lane.b32.xlu0 %v419, 64
      %v467 = vpop.permute.xlu0 %466
      %468 = vrot.lane.b32.xlu0 %v420, 64
      %v469 = vpop.permute.xlu0 %468
      %470 = vrot.lane.b32.xlu0 %v421, 64
      %v471 = vpop.permute.xlu0 %470
      %vm497 = vcmask 1043968
      %498 = vst.msk [vmem:[#allocation4] sm:$0xf] %vm497, %v423
      %499 = vst.msk [vmem:[#allocation4 + $0x14] sm:$0xf] %vm497, %v425
      %500 = vst.msk [vmem:[#allocation4 + $0x28] sm:$0xf] %vm497, %v427
      %501 = vst.msk [vmem:[#allocation4 + $0x3c] sm:$0xf] %vm497, %v429
      %502 = vst.msk [vmem:[#allocation4 + $0x50] sm:$0xf] %vm497, %v431
      %503 = vst.msk [vmem:[#allocation4 + $0x64] sm:$0xf] %vm497, %v433
      %504 = vst.msk [vmem:[#allocation4 + $0x78] sm:$0xf] %vm497, %v435
      %505 = vst.msk [vmem:[#allocation4 + $0x8c] sm:$0xf] %vm497, %v437
      %506 = vst.msk [vmem:[#allocation4 + $0xa0] sm:$0xf] %vm497, %v439
      %507 = vst.msk [vmem:[#allocation4 + $0xb4] sm:$0xf] %vm497, %v441
      %508 = vst.msk [vmem:[#allocation4 + $0xc8] sm:$0xf] %vm497, %v443
      %509 = vst.msk [vmem:[#allocation4 + $0xdc] sm:$0xf] %vm497, %v445
      %510 = vst.msk [vmem:[#allocation4 + $0xf0] sm:$0xf] %vm497, %v447
      %511 = vst.msk [vmem:[#allocation4 + $0x104] sm:$0xf] %vm497, %v449
      %512 = vst.msk [vmem:[#allocation4 + $0x118] sm:$0xf] %vm497, %v451
      %513 = vst.msk [vmem:[#allocation4 + $0x12c] sm:$0xf] %vm497, %v453
      %514 = vst.msk [vmem:[#allocation4 + $0x140] sm:$0xf] %vm497, %v455
      %515 = vst.msk [vmem:[#allocation4 + $0x154] sm:$0xf] %vm497, %v457
      %516 = vst.msk [vmem:[#allocation4 + $0x168] sm:$0xf] %vm497, %v459
      %517 = vst.msk [vmem:[#allocation4 + $0x17c] sm:$0xf] %vm497, %v461
      %518 = vst.msk [vmem:[#allocation4 + $0x190] sm:$0xf] %vm497, %v463
      %519 = vst.msk [vmem:[#allocation4 + $0x1a4] sm:$0xf] %vm497, %v465
      %520 = vst.msk [vmem:[#allocation4 + $0x1b8] sm:$0xf] %vm497, %v467
      %521 = vst.msk [vmem:[#allocation4 + $0x1cc] sm:$0xf] %vm497, %v469
      %522 = vst.msk [vmem:[#allocation4 + $0x1e0] sm:$0xf] %vm497, %v471
      %v523 = vld [vmem:[#allocation2 + $0x7] sm:$0xff]
      %v524 = vld [vmem:[#allocation2 + $0xf] sm:$0xff]
      %v525 = vld [vmem:[#allocation2 + $0x17] sm:$0xff]
      %v526 = vld [vmem:[#allocation2 + $0x1f] sm:$0xff]
      %v527 = vld [vmem:[#allocation2 + $0x27] sm:$0xff]
      %v528 = vld [vmem:[#allocation2 + $0x2f] sm:$0xff]
      %v529 = vld [vmem:[#allocation2 + $0x37] sm:$0xff]
      %v530 = vld [vmem:[#allocation2 + $0x3f] sm:$0xff]
      %v531 = vld [vmem:[#allocation2 + $0x47] sm:$0xff]
      %v532 = vld [vmem:[#allocation2 + $0x4f] sm:$0xff]
      %v533 = vld [vmem:[#allocation2 + $0x57] sm:$0xff]
      %v534 = vld [vmem:[#allocation2 + $0x5f] sm:$0xff]
      %v535 = vld [vmem:[#allocation2 + $0x67] sm:$0xff]
      %v536 = vld [vmem:[#allocation2 + $0x6f] sm:$0xff]
      %v537 = vld [vmem:[#allocation2 + $0x77] sm:$0xff]
      %v538 = vld [vmem:[#allocation2 + $0x7f] sm:$0xff]
      %v539 = vld [vmem:[#allocation2 + $0x87] sm:$0xff]
      %v540 = vld [vmem:[#allocation2 + $0x8f] sm:$0xff]
      %v541 = vld [vmem:[#allocation2 + $0x97] sm:$0xff]
      %v542 = vld [vmem:[#allocation2 + $0x9f] sm:$0xff]
      %v543 = vld [vmem:[#allocation2 + $0xa7] sm:$0xff]
      %v544 = vld [vmem:[#allocation2 + $0xaf] sm:$0xff]
      %v545 = vld [vmem:[#allocation2 + $0xb7] sm:$0xff]
      %v546 = vld [vmem:[#allocation2 + $0xbf] sm:$0xff]
      %v547 = vld [vmem:[#allocation2 + $0xc7] sm:$0xff]
      %v548 = vpack.c.bf16 %v524, %v523
      %v549 = vpack.c.bf16 %v526, %v525
      %v550 = vpack.c.bf16 %v528, %v527
      %v551 = vpack.c.bf16 %v530, %v529
      %v552 = vpack.c.bf16 %v532, %v531
      %v553 = vpack.c.bf16 %v534, %v533
      %v554 = vpack.c.bf16 %v536, %v535
      %v555 = vpack.c.bf16 %v538, %v537
      %v556 = vpack.c.bf16 %v540, %v539
      %v557 = vpack.c.bf16 %v542, %v541
      %v558 = vpack.c.bf16 %v544, %v543
      %v559 = vpack.c.bf16 %v546, %v545
      %v560 = vpack.c.bf16 %v547, %v547
      %v574 = vunpack.c.l.b16 %v548
      %v575 = vunpack.c.h.b16 %v548
      %v576 = vunpack.c.l.b16 %v549
      %v577 = vunpack.c.h.b16 %v549
      %v578 = vunpack.c.l.b16 %v550
      %v579 = vunpack.c.h.b16 %v550
      %v580 = vunpack.c.l.b16 %v551
      %v581 = vunpack.c.h.b16 %v551
      %v582 = vunpack.c.l.b16 %v552
      %v583 = vunpack.c.h.b16 %v552
      %v584 = vunpack.c.l.b16 %v553
      %v585 = vunpack.c.h.b16 %v553
      %v586 = vunpack.c.l.b16 %v554
      %v587 = vunpack.c.h.b16 %v554
      %v588 = vunpack.c.l.b16 %v555
      %v589 = vunpack.c.h.b16 %v555
      %v590 = vunpack.c.l.b16 %v556
      %v591 = vunpack.c.h.b16 %v556
      %v592 = vunpack.c.l.b16 %v557
      %v593 = vunpack.c.h.b16 %v557
      %v594 = vunpack.c.l.b16 %v558
      %v595 = vunpack.c.h.b16 %v558
      %v596 = vunpack.c.l.b16 %v559
      %v597 = vunpack.c.h.b16 %v559
      %v598 = vunpack.c.l.b16 %v560
      %v599 = vpack.c.b16 %v574, %v574
      %v600 = vpack.c.b16 %v575, %v575
      %v601 = vpack.c.b16 %v576, %v576
      %v602 = vpack.c.b16 %v577, %v577
      %v603 = vpack.c.b16 %v578, %v578
      %v604 = vpack.c.b16 %v579, %v579
      %v605 = vpack.c.b16 %v580, %v580
      %v606 = vpack.c.b16 %v581, %v581
      %v607 = vpack.c.b16 %v582, %v582
      %v608 = vpack.c.b16 %v583, %v583
      %v609 = vpack.c.b16 %v584, %v584
      %v610 = vpack.c.b16 %v585, %v585
      %v611 = vpack.c.b16 %v586, %v586
      %v612 = vpack.c.b16 %v587, %v587
      %v613 = vpack.c.b16 %v588, %v588
      %v614 = vpack.c.b16 %v589, %v589
      %v615 = vpack.c.b16 %v590, %v590
      %v616 = vpack.c.b16 %v591, %v591
      %v617 = vpack.c.b16 %v592, %v592
      %v618 = vpack.c.b16 %v593, %v593
      %v619 = vpack.c.b16 %v594, %v594
      %v620 = vpack.c.b16 %v595, %v595
      %v621 = vpack.c.b16 %v596, %v596
      %v622 = vpack.c.b16 %v597, %v597
      %v623 = vpack.c.b16 %v598, %v598
      %649 = vst.msk [vmem:[#allocation4 + $0x4] sm:$0xf] %vm295, %v599
      %650 = vst.msk [vmem:[#allocation4 + $0x18] sm:$0xf] %vm295, %v600
      %651 = vst.msk [vmem:[#allocation4 + $0x2c] sm:$0xf] %vm295, %v601
      %652 = vst.msk [vmem:[#allocation4 + $0x40] sm:$0xf] %vm295, %v602
      %653 = vst.msk [vmem:[#allocation4 + $0x54] sm:$0xf] %vm295, %v603
      %654 = vst.msk [vmem:[#allocation4 + $0x68] sm:$0xf] %vm295, %v604
      %655 = vst.msk [vmem:[#allocation4 + $0x7c] sm:$0xf] %vm295, %v605
      %656 = vst.msk [vmem:[#allocation4 + $0x90] sm:$0xf] %vm295, %v606
      %657 = vst.msk [vmem:[#allocation4 + $0xa4] sm:$0xf] %vm295, %v607
      %658 = vst.msk [vmem:[#allocation4 + $0xb8] sm:$0xf] %vm295, %v608
      %659 = vst.msk [vmem:[#allocation4 + $0xcc] sm:$0xf] %vm295, %v609
      %660 = vst.msk [vmem:[#allocation4 + $0xe0] sm:$0xf] %vm295, %v610
      %661 = vst.msk [vmem:[#allocation4 + $0xf4] sm:$0xf] %vm295, %v611
      %662 = vst.msk [vmem:[#allocation4 + $0x108] sm:$0xf] %vm295, %v612
      %663 = vst.msk [vmem:[#allocation4 + $0x11c] sm:$0xf] %vm295, %v613
      %664 = vst.msk [vmem:[#allocation4 + $0x130] sm:$0xf] %vm295, %v614
      %665 = vst.msk [vmem:[#allocation4 + $0x144] sm:$0xf] %vm295, %v615
      %666 = vst.msk [vmem:[#allocation4 + $0x158] sm:$0xf] %vm295, %v616
      %667 = vst.msk [vmem:[#allocation4 + $0x16c] sm:$0xf] %vm295, %v617
      %668 = vst.msk [vmem:[#allocation4 + $0x180] sm:$0xf] %vm295, %v618
      %669 = vst.msk [vmem:[#allocation4 + $0x194] sm:$0xf] %vm295, %v619
      %670 = vst.msk [vmem:[#allocation4 + $0x1a8] sm:$0xf] %vm295, %v620
      %671 = vst.msk [vmem:[#allocation4 + $0x1bc] sm:$0xf] %vm295, %v621
      %672 = vst.msk [vmem:[#allocation4 + $0x1d0] sm:$0xf] %vm295, %v622
      %673 = vst.msk [vmem:[#allocation4 + $0x1e4] sm:$0xf] %vm295, %v623
      %v674 = vld [vmem:[#allocation2 + $0xf] sm:$0xff]
      %v675 = vld [vmem:[#allocation2 + $0x17] sm:$0xff]
      %v676 = vld [vmem:[#allocation2 + $0x1f] sm:$0xff]
      %v677 = vld [vmem:[#allocation2 + $0x27] sm:$0xff]
      %v678 = vld [vmem:[#allocation2 + $0x2f] sm:$0xff]
      %v679 = vld [vmem:[#allocation2 + $0x37] sm:$0xff]
      %v680 = vld [vmem:[#allocation2 + $0x3f] sm:$0xff]
      %v681 = vld [vmem:[#allocation2 + $0x47] sm:$0xff]
      %v682 = vld [vmem:[#allocation2 + $0x4f] sm:$0xff]
      %v683 = vld [vmem:[#allocation2 + $0x57] sm:$0xff]
      %v684 = vld [vmem:[#allocation2 + $0x5f] sm:$0xff]
      %v685 = vld [vmem:[#allocation2 + $0x67] sm:$0xff]
      %v686 = vld [vmem:[#allocation2 + $0x6f] sm:$0xff]
      %v687 = vld [vmem:[#allocation2 + $0x77] sm:$0xff]
      %v688 = vld [vmem:[#allocation2 + $0x7f] sm:$0xff]
      %v689 = vld [vmem:[#allocation2 + $0x87] sm:$0xff]
      %v690 = vld [vmem:[#allocation2 + $0x8f] sm:$0xff]
      %v691 = vld [vmem:[#allocation2 + $0x97] sm:$0xff]
      %v692 = vld [vmem:[#allocation2 + $0x9f] sm:$0xff]
      %v693 = vld [vmem:[#allocation2 + $0xa7] sm:$0xff]
      %v694 = vld [vmem:[#allocation2 + $0xaf] sm:$0xff]
      %v695 = vld [vmem:[#allocation2 + $0xb7] sm:$0xff]
      %v696 = vld [vmem:[#allocation2 + $0xbf] sm:$0xff]
      %v697 = vld [vmem:[#allocation2 + $0xc7] sm:$0xff]
      %v698 = vld [vmem:[#allocation2 + $0xcf] sm:$0xff]
      %v699 = vpack.c.bf16 %v675, %v674
      %v700 = vpack.c.bf16 %v677, %v676
      %v701 = vpack.c.bf16 %v679, %v678
      %v702 = vpack.c.bf16 %v681, %v680
      %v703 = vpack.c.bf16 %v683, %v682
      %v704 = vpack.c.bf16 %v685, %v684
      %v705 = vpack.c.bf16 %v687, %v686
      %v706 = vpack.c.bf16 %v689, %v688
      %v707 = vpack.c.bf16 %v691, %v690
      %v708 = vpack.c.bf16 %v693, %v692
      %v709 = vpack.c.bf16 %v695, %v694
      %v710 = vpack.c.bf16 %v697, %v696
      %v711 = vpack.c.bf16 %v698, %v698
      %v725 = vunpack.c.l.b16 %v699
      %v726 = vunpack.c.h.b16 %v699
      %v727 = vunpack.c.l.b16 %v700
      %v728 = vunpack.c.h.b16 %v700
      %v729 = vunpack.c.l.b16 %v701
      %v730 = vunpack.c.h.b16 %v701
      %v731 = vunpack.c.l.b16 %v702
      %v732 = vunpack.c.h.b16 %v702
      %v733 = vunpack.c.l.b16 %v703
      %v734 = vunpack.c.h.b16 %v703
      %v735 = vunpack.c.l.b16 %v704
      %v736 = vunpack.c.h.b16 %v704
      %v737 = vunpack.c.l.b16 %v705
      %v738 = vunpack.c.h.b16 %v705
      %v739 = vunpack.c.l.b16 %v706
      %v740 = vunpack.c.h.b16 %v706
      %v741 = vunpack.c.l.b16 %v707
      %v742 = vunpack.c.h.b16 %v707
      %v743 = vunpack.c.l.b16 %v708
      %v744 = vunpack.c.h.b16 %v708
      %v745 = vunpack.c.l.b16 %v709
      %v746 = vunpack.c.h.b16 %v709
      %v747 = vunpack.c.l.b16 %v710
      %v748 = vunpack.c.h.b16 %v710
      %v749 = vunpack.c.l.b16 %v711
      %v750 = vpack.c.b16 %v725, %v725
      %v751 = vpack.c.b16 %v726, %v726
      %v752 = vpack.c.b16 %v727, %v727
      %v753 = vpack.c.b16 %v728, %v728
      %v754 = vpack.c.b16 %v729, %v729
      %v755 = vpack.c.b16 %v730, %v730
      %v756 = vpack.c.b16 %v731, %v731
      %v757 = vpack.c.b16 %v732, %v732
      %v758 = vpack.c.b16 %v733, %v733
      %v759 = vpack.c.b16 %v734, %v734
      %v760 = vpack.c.b16 %v735, %v735
      %v761 = vpack.c.b16 %v736, %v736
      %v762 = vpack.c.b16 %v737, %v737
      %v763 = vpack.c.b16 %v738, %v738
      %v764 = vpack.c.b16 %v739, %v739
      %v765 = vpack.c.b16 %v740, %v740
      %v766 = vpack.c.b16 %v741, %v741
      %v767 = vpack.c.b16 %v742, %v742
      %v768 = vpack.c.b16 %v743, %v743
      %v769 = vpack.c.b16 %v744, %v744
      %v770 = vpack.c.b16 %v745, %v745
      %v771 = vpack.c.b16 %v746, %v746
      %v772 = vpack.c.b16 %v747, %v747
      %v773 = vpack.c.b16 %v748, %v748
      %v774 = vpack.c.b16 %v749, %v749
      %775 = vrot.lane.b32.xlu0 %v750, 64
      %v776 = vpop.permute.xlu0 %775
      %777 = vrot.lane.b32.xlu0 %v751, 64
      %v778 = vpop.permute.xlu0 %777
      %779 = vrot.lane.b32.xlu0 %v752, 64
      %v780 = vpop.permute.xlu0 %779
      %781 = vrot.lane.b32.xlu0 %v753, 64
      %v782 = vpop.permute.xlu0 %781
      %783 = vrot.lane.b32.xlu0 %v754, 64
      %v784 = vpop.permute.xlu0 %783
      %785 = vrot.lane.b32.xlu0 %v755, 64
      %v786 = vpop.permute.xlu0 %785
      %787 = vrot.lane.b32.xlu0 %v756, 64
      %v788 = vpop.permute.xlu0 %787
      %789 = vrot.lane.b32.xlu0 %v757, 64
      %v790 = vpop.permute.xlu0 %789
      %791 = vrot.lane.b32.xlu0 %v758, 64
      %v792 = vpop.permute.xlu0 %791
      %793 = vrot.lane.b32.xlu0 %v759, 64
      %v794 = vpop.permute.xlu0 %793
      %795 = vrot.lane.b32.xlu0 %v760, 64
      %v796 = vpop.permute.xlu0 %795
      %797 = vrot.lane.b32.xlu0 %v761, 64
      %v798 = vpop.permute.xlu0 %797
      %799 = vrot.lane.b32.xlu0 %v762, 64
      %v800 = vpop.permute.xlu0 %799
      %801 = vrot.lane.b32.xlu0 %v763, 64
      %v802 = vpop.permute.xlu0 %801
      %803 = vrot.lane.b32.xlu0 %v764, 64
      %v804 = vpop.permute.xlu0 %803
      %805 = vrot.lane.b32.xlu0 %v765, 64
      %v806 = vpop.permute.xlu0 %805
      %807 = vrot.lane.b32.xlu0 %v766, 64
      %v808 = vpop.permute.xlu0 %807
      %809 = vrot.lane.b32.xlu0 %v767, 64
      %v810 = vpop.permute.xlu0 %809
      %811 = vrot.lane.b32.xlu0 %v768, 64
      %v812 = vpop.permute.xlu0 %811
      %813 = vrot.lane.b32.xlu0 %v769, 64
      %v814 = vpop.permute.xlu0 %813
      %815 = vrot.lane.b32.xlu0 %v770, 64
      %v816 = vpop.permute.xlu0 %815
      %817 = vrot.lane.b32.xlu0 %v771, 64
      %v818 = vpop.permute.xlu0 %817
      %819 = vrot.lane.b32.xlu0 %v772, 64
      %v820 = vpop.permute.xlu0 %819
      %821 = vrot.lane.b32.xlu0 %v773, 64
      %v822 = vpop.permute.xlu0 %821
      %823 = vrot.lane.b32.xlu0 %v774, 64
      %v824 = vpop.permute.xlu0 %823
      %850 = vst.msk [vmem:[#allocation4 + $0x4] sm:$0xf] %vm497, %v776
      %851 = vst.msk [vmem:[#allocation4 + $0x18] sm:$0xf] %vm497, %v778
      %852 = vst.msk [vmem:[#allocation4 + $0x2c] sm:$0xf] %vm497, %v780
      %853 = vst.msk [vmem:[#allocation4 + $0x40] sm:$0xf] %vm497, %v782
      %854 = vst.msk [vmem:[#allocation4 + $0x54] sm:$0xf] %vm497, %v784
      %855 = vst.msk [vmem:[#allocation4 + $0x68] sm:$0xf] %vm497, %v786
      %856 = vst.msk [vmem:[#allocation4 + $0x7c] sm:$0xf] %vm497, %v788
      %857 = vst.msk [vmem:[#allocation4 + $0x90] sm:$0xf] %vm497, %v790
      %858 = vst.msk [vmem:[#allocation4 + $0xa4] sm:$0xf] %vm497, %v792
      %859 = vst.msk [vmem:[#allocation4 + $0xb8] sm:$0xf] %vm497, %v794
      %860 = vst.msk [vmem:[#allocation4 + $0xcc] sm:$0xf] %vm497, %v796
      %861 = vst.msk [vmem:[#allocation4 + $0xe0] sm:$0xf] %vm497, %v798
      %862 = vst.msk [vmem:[#allocation4 + $0xf4] sm:$0xf] %vm497, %v800
      %863 = vst.msk [vmem:[#allocation4 + $0x108] sm:$0xf] %vm497, %v802
      %864 = vst.msk [vmem:[#allocation4 + $0x11c] sm:$0xf] %vm497, %v804
      %865 = vst.msk [vmem:[#allocation4 + $0x130] sm:$0xf] %vm497, %v806
      %866 = vst.msk [vmem:[#allocation4 + $0x144] sm:$0xf] %vm497, %v808
      %867 = vst.msk [vmem:[#allocation4 + $0x158] sm:$0xf] %vm497, %v810
      %868 = vst.msk [vmem:[#allocation4 + $0x16c] sm:$0xf] %vm497, %v812
      %869 = vst.msk [vmem:[#allocation4 + $0x180] sm:$0xf] %vm497, %v814
      %870 = vst.msk [vmem:[#allocation4 + $0x194] sm:$0xf] %vm497, %v816
      %871 = vst.msk [vmem:[#allocation4 + $0x1a8] sm:$0xf] %vm497, %v818
      %872 = vst.msk [vmem:[#allocation4 + $0x1bc] sm:$0xf] %vm497, %v820
      %873 = vst.msk [vmem:[#allocation4 + $0x1d0] sm:$0xf] %vm497, %v822
      %874 = vst.msk [vmem:[#allocation4 + $0x1e4] sm:$0xf] %vm497, %v824
      %v875 = vld [vmem:[#allocation2 + $0x10] sm:$0xff]
      %v876 = vld [vmem:[#allocation2 + $0x18] sm:$0xff]
      %v877 = vld [vmem:[#allocation2 + $0x20] sm:$0xff]
      %v878 = vld [vmem:[#allocation2 + $0x28] sm:$0xff]
      %v879 = vld [vmem:[#allocation2 + $0x30] sm:$0xff]
      %v880 = vld [vmem:[#allocation2 + $0x38] sm:$0xff]
      %v881 = vld [vmem:[#allocation2 + $0x40] sm:$0xff]
      %v882 = vld [vmem:[#allocation2 + $0x48] sm:$0xff]
      %v883 = vld [vmem:[#allocation2 + $0x50] sm:$0xff]
      %v884 = vld [vmem:[#allocation2 + $0x58] sm:$0xff]
      %v885 = vld [vmem:[#allocation2 + $0x60] sm:$0xff]
      %v886 = vld [vmem:[#allocation2 + $0x68] sm:$0xff]
      %v887 = vld [vmem:[#allocation2 + $0x70] sm:$0xff]
      %v888 = vld [vmem:[#allocation2 + $0x78] sm:$0xff]
      %v889 = vld [vmem:[#allocation2 + $0x80] sm:$0xff]
      %v890 = vld [vmem:[#allocation2 + $0x88] sm:$0xff]
      %v891 = vld [vmem:[#allocation2 + $0x90] sm:$0xff]
      %v892 = vld [vmem:[#allocation2 + $0x98] sm:$0xff]
      %v893 = vld [vmem:[#allocation2 + $0xa0] sm:$0xff]
      %v894 = vld [vmem:[#allocation2 + $0xa8] sm:$0xff]
      %v895 = vld [vmem:[#allocation2 + $0xb0] sm:$0xff]
      %v896 = vld [vmem:[#allocation2 + $0xb8] sm:$0xff]
      %v897 = vld [vmem:[#allocation2 + $0xc0] sm:$0xff]
      %v898 = vld [vmem:[#allocation2 + $0xc8] sm:$0xff]
      %v899 = vld [vmem:[#allocation2 + $0xd0] sm:$0xff]
      %v900 = vpack.c.bf16 %v876, %v875
      %v901 = vpack.c.bf16 %v878, %v877
      %v902 = vpack.c.bf16 %v880, %v879
      %v903 = vpack.c.bf16 %v882, %v881
      %v904 = vpack.c.bf16 %v884, %v883
      %v905 = vpack.c.bf16 %v886, %v885
      %v906 = vpack.c.bf16 %v888, %v887
      %v907 = vpack.c.bf16 %v890, %v889
      %v908 = vpack.c.bf16 %v892, %v891
      %v909 = vpack.c.bf16 %v894, %v893
      %v910 = vpack.c.bf16 %v896, %v895
      %v911 = vpack.c.bf16 %v898, %v897
      %v912 = vpack.c.bf16 %v899, %v899
      %v926 = vunpack.c.l.b16 %v900
      %v927 = vunpack.c.h.b16 %v900
      %v928 = vunpack.c.l.b16 %v901
      %v929 = vunpack.c.h.b16 %v901
      %v930 = vunpack.c.l.b16 %v902
      %v931 = vunpack.c.h.b16 %v902
      %v932 = vunpack.c.l.b16 %v903
      %v933 = vunpack.c.h.b16 %v903
      %v934 = vunpack.c.l.b16 %v904
      %v935 = vunpack.c.h.b16 %v904
      %v936 = vunpack.c.l.b16 %v905
      %v937 = vunpack.c.h.b16 %v905
      %v938 = vunpack.c.l.b16 %v906
      %v939 = vunpack.c.h.b16 %v906
      %v940 = vunpack.c.l.b16 %v907
      %v941 = vunpack.c.h.b16 %v907
      %v942 = vunpack.c.l.b16 %v908
      %v943 = vunpack.c.h.b16 %v908
      %v944 = vunpack.c.l.b16 %v909
      %v945 = vunpack.c.h.b16 %v909
      %v946 = vunpack.c.l.b16 %v910
      %v947 = vunpack.c.h.b16 %v910
      %v948 = vunpack.c.l.b16 %v911
      %v949 = vunpack.c.h.b16 %v911
      %v950 = vunpack.c.l.b16 %v912
      %v951 = vpack.c.b16 %v926, %v926
      %v952 = vpack.c.b16 %v927, %v927
      %v953 = vpack.c.b16 %v928, %v928
      %v954 = vpack.c.b16 %v929, %v929
      %v955 = vpack.c.b16 %v930, %v930
      %v956 = vpack.c.b16 %v931, %v931
      %v957 = vpack.c.b16 %v932, %v932
      %v958 = vpack.c.b16 %v933, %v933
      %v959 = vpack.c.b16 %v934, %v934
      %v960 = vpack.c.b16 %v935, %v935
      %v961 = vpack.c.b16 %v936, %v936
      %v962 = vpack.c.b16 %v937, %v937
      %v963 = vpack.c.b16 %v938, %v938
      %v964 = vpack.c.b16 %v939, %v939
      %v965 = vpack.c.b16 %v940, %v940
      %v966 = vpack.c.b16 %v941, %v941
      %v967 = vpack.c.b16 %v942, %v942
      %v968 = vpack.c.b16 %v943, %v943
      %v969 = vpack.c.b16 %v944, %v944
      %v970 = vpack.c.b16 %v945, %v945
      %v971 = vpack.c.b16 %v946, %v946
      %v972 = vpack.c.b16 %v947, %v947
      %v973 = vpack.c.b16 %v948, %v948
      %v974 = vpack.c.b16 %v949, %v949
      %v975 = vpack.c.b16 %v950, %v950
      %1001 = vst.msk [vmem:[#allocation4 + $0x8] sm:$0xf] %vm295, %v951
      %1002 = vst.msk [vmem:[#allocation4 + $0x1c] sm:$0xf] %vm295, %v952
      %1003 = vst.msk [vmem:[#allocation4 + $0x30] sm:$0xf] %vm295, %v953
      %1004 = vst.msk [vmem:[#allocation4 + $0x44] sm:$0xf] %vm295, %v954
      %1005 = vst.msk [vmem:[#allocation4 + $0x58] sm:$0xf] %vm295, %v955
      %1006 = vst.msk [vmem:[#allocation4 + $0x6c] sm:$0xf] %vm295, %v956
      %1007 = vst.msk [vmem:[#allocation4 + $0x80] sm:$0xf] %vm295, %v957
      %1008 = vst.msk [vmem:[#allocation4 + $0x94] sm:$0xf] %vm295, %v958
      %1009 = vst.msk [vmem:[#allocation4 + $0xa8] sm:$0xf] %vm295, %v959
      %1010 = vst.msk [vmem:[#allocation4 + $0xbc] sm:$0xf] %vm295, %v960
      %1011 = vst.msk [vmem:[#allocation4 + $0xd0] sm:$0xf] %vm295, %v961
      %1012 = vst.msk [vmem:[#allocation4 + $0xe4] sm:$0xf] %vm295, %v962
      %1013 = vst.msk [vmem:[#allocation4 + $0xf8] sm:$0xf] %vm295, %v963
      %1014 = vst.msk [vmem:[#allocation4 + $0x10c] sm:$0xf] %vm295, %v964
      %1015 = vst.msk [vmem:[#allocation4 + $0x120] sm:$0xf] %vm295, %v965
      %1016 = vst.msk [vmem:[#allocation4 + $0x134] sm:$0xf] %vm295, %v966
      %1017 = vst.msk [vmem:[#allocation4 + $0x148] sm:$0xf] %vm295, %v967
      %1018 = vst.msk [vmem:[#allocation4 + $0x15c] sm:$0xf] %vm295, %v968
      %1019 = vst.msk [vmem:[#allocation4 + $0x170] sm:$0xf] %vm295, %v969
      %1020 = vst.msk [vmem:[#allocation4 + $0x184] sm:$0xf] %vm295, %v970
      %1021 = vst.msk [vmem:[#allocation4 + $0x198] sm:$0xf] %vm295, %v971
      %1022 = vst.msk [vmem:[#allocation4 + $0x1ac] sm:$0xf] %vm295, %v972
      %1023 = vst.msk [vmem:[#allocation4 + $0x1c0] sm:$0xf] %vm295, %v973
      %1024 = vst.msk [vmem:[#allocation4 + $0x1d4] sm:$0xf] %vm295, %v974
      %1025 = vst.msk [vmem:[#allocation4 + $0x1e8] sm:$0xf] %vm295, %v975
      %v1026 = vld [vmem:[#allocation2 + $0x11] sm:$0xff]
      %v1027 = vld [vmem:[#allocation2 + $0x19] sm:$0xff]
      %v1028 = vld [vmem:[#allocation2 + $0x21] sm:$0xff]
      %v1029 = vld [vmem:[#allocation2 + $0x29] sm:$0xff]
      %v1030 = vld [vmem:[#allocation2 + $0x31] sm:$0xff]
      %v1031 = vld [vmem:[#allocation2 + $0x39] sm:$0xff]
      %v1032 = vld [vmem:[#allocation2 + $0x41] sm:$0xff]
      %v1033 = vld [vmem:[#allocation2 + $0x49] sm:$0xff]
      %v1034 = vld [vmem:[#allocation2 + $0x51] sm:$0xff]
      %v1035 = vld [vmem:[#allocation2 + $0x59] sm:$0xff]
      %v1036 = vld [vmem:[#allocation2 + $0x61] sm:$0xff]
      %v1037 = vld [vmem:[#allocation2 + $0x69] sm:$0xff]
      %v1038 = vld [vmem:[#allocation2 + $0x71] sm:$0xff]
      %v1039 = vld [vmem:[#allocation2 + $0x79] sm:$0xff]
      %v1040 = vld [vmem:[#allocation2 + $0x81] sm:$0xff]
      %v1041 = vld [vmem:[#allocation2 + $0x89] sm:$0xff]
      %v1042 = vld [vmem:[#allocation2 + $0x91] sm:$0xff]
      %v1043 = vld [vmem:[#allocation2 + $0x99] sm:$0xff]
      %v1044 = vld [vmem:[#allocation2 + $0xa1] sm:$0xff]
      %v1045 = vld [vmem:[#allocation2 + $0xa9] sm:$0xff]
      %v1046 = vld [vmem:[#allocation2 + $0xb1] sm:$0xff]
      %v1047 = vld [vmem:[#allocation2 + $0xb9] sm:$0xff]
      %v1048 = vld [vmem:[#allocation2 + $0xc1] sm:$0xff]
      %v1049 = vld [vmem:[#allocation2 + $0xc9] sm:$0xff]
      %v1050 = vld [vmem:[#allocation2 + $0xd1] sm:$0xff]
      %v1051 = vpack.c.bf16 %v1027, %v1026
      %v1052 = vpack.c.bf16 %v1029, %v1028
      %v1053 = vpack.c.bf16 %v1031, %v1030
      %v1054 = vpack.c.bf16 %v1033, %v1032
      %v1055 = vpack.c.bf16 %v1035, %v1034
      %v1056 = vpack.c.bf16 %v1037, %v1036
      %v1057 = vpack.c.bf16 %v1039, %v1038
      %v1058 = vpack.c.bf16 %v1041, %v1040
      %v1059 = vpack.c.bf16 %v1043, %v1042
      %v1060 = vpack.c.bf16 %v1045, %v1044
      %v1061 = vpack.c.bf16 %v1047, %v1046
      %v1062 = vpack.c.bf16 %v1049, %v1048
      %v1063 = vpack.c.bf16 %v1050, %v1050
      %v1077 = vunpack.c.l.b16 %v1051
      %v1078 = vunpack.c.h.b16 %v1051
      %v1079 = vunpack.c.l.b16 %v1052
      %v1080 = vunpack.c.h.b16 %v1052
      %v1081 = vunpack.c.l.b16 %v1053
      %v1082 = vunpack.c.h.b16 %v1053
      %v1083 = vunpack.c.l.b16 %v1054
      %v1084 = vunpack.c.h.b16 %v1054
      %v1085 = vunpack.c.l.b16 %v1055
      %v1086 = vunpack.c.h.b16 %v1055
      %v1087 = vunpack.c.l.b16 %v1056
      %v1088 = vunpack.c.h.b16 %v1056
      %v1089 = vunpack.c.l.b16 %v1057
      %v1090 = vunpack.c.h.b16 %v1057
      %v1091 = vunpack.c.l.b16 %v1058
      %v1092 = vunpack.c.h.b16 %v1058
      %v1093 = vunpack.c.l.b16 %v1059
      %v1094 = vunpack.c.h.b16 %v1059
      %v1095 = vunpack.c.l.b16 %v1060
      %v1096 = vunpack.c.h.b16 %v1060
      %v1097 = vunpack.c.l.b16 %v1061
      %v1098 = vunpack.c.h.b16 %v1061
      %v1099 = vunpack.c.l.b16 %v1062
      %v1100 = vunpack.c.h.b16 %v1062
      %v1101 = vunpack.c.l.b16 %v1063
      %v1102 = vpack.c.b16 %v1077, %v1077
      %v1103 = vpack.c.b16 %v1078, %v1078
      %v1104 = vpack.c.b16 %v1079, %v1079
      %v1105 = vpack.c.b16 %v1080, %v1080
      %v1106 = vpack.c.b16 %v1081, %v1081
      %v1107 = vpack.c.b16 %v1082, %v1082
      %v1108 = vpack.c.b16 %v1083, %v1083
      %v1109 = vpack.c.b16 %v1084, %v1084
      %v1110 = vpack.c.b16 %v1085, %v1085
      %v1111 = vpack.c.b16 %v1086, %v1086
      %v1112 = vpack.c.b16 %v1087, %v1087
      %v1113 = vpack.c.b16 %v1088, %v1088
      %v1114 = vpack.c.b16 %v1089, %v1089
      %v1115 = vpack.c.b16 %v1090, %v1090
      %v1116 = vpack.c.b16 %v1091, %v1091
      %v1117 = vpack.c.b16 %v1092, %v1092
      %v1118 = vpack.c.b16 %v1093, %v1093
      %v1119 = vpack.c.b16 %v1094, %v1094
      %v1120 = vpack.c.b16 %v1095, %v1095
      %v1121 = vpack.c.b16 %v1096, %v1096
      %v1122 = vpack.c.b16 %v1097, %v1097
      %v1123 = vpack.c.b16 %v1098, %v1098
      %v1124 = vpack.c.b16 %v1099, %v1099
      %v1125 = vpack.c.b16 %v1100, %v1100
      %v1126 = vpack.c.b16 %v1101, %v1101
      %1127 = vrot.lane.b32.xlu0 %v1102, 64
      %v1128 = vpop.permute.xlu0 %1127
      %1129 = vrot.lane.b32.xlu0 %v1103, 64
      %v1130 = vpop.permute.xlu0 %1129
      %1131 = vrot.lane.b32.xlu0 %v1104, 64
      %v1132 = vpop.permute.xlu0 %1131
      %1133 = vrot.lane.b32.xlu0 %v1105, 64
      %v1134 = vpop.permute.xlu0 %1133
      %1135 = vrot.lane.b32.xlu0 %v1106, 64
      %v1136 = vpop.permute.xlu0 %1135
      %1137 = vrot.lane.b32.xlu0 %v1107, 64
      %v1138 = vpop.permute.xlu0 %1137
      %1139 = vrot.lane.b32.xlu0 %v1108, 64
      %v1140 = vpop.permute.xlu0 %1139
      %1141 = vrot.lane.b32.xlu0 %v1109, 64
      %v1142 = vpop.permute.xlu0 %1141
      %1143 = vrot.lane.b32.xlu0 %v1110, 64
      %v1144 = vpop.permute.xlu0 %1143
      %1145 = vrot.lane.b32.xlu0 %v1111, 64
      %v1146 = vpop.permute.xlu0 %1145
      %1147 = vrot.lane.b32.xlu0 %v1112, 64
      %v1148 = vpop.permute.xlu0 %1147
      %1149 = vrot.lane.b32.xlu0 %v1113, 64
      %v1150 = vpop.permute.xlu0 %1149
      %1151 = vrot.lane.b32.xlu0 %v1114, 64
      %v1152 = vpop.permute.xlu0 %1151
      %1153 = vrot.lane.b32.xlu0 %v1115, 64
      %v1154 = vpop.permute.xlu0 %1153
      %1155 = vrot.lane.b32.xlu0 %v1116, 64
      %v1156 = vpop.permute.xlu0 %1155
      %1157 = vrot.lane.b32.xlu0 %v1117, 64
      %v1158 = vpop.permute.xlu0 %1157
      %1159 = vrot.lane.b32.xlu0 %v1118, 64
      %v1160 = vpop.permute.xlu0 %1159
      %1161 = vrot.lane.b32.xlu0 %v1119, 64
      %v1162 = vpop.permute.xlu0 %1161
      %1163 = vrot.lane.b32.xlu0 %v1120, 64
      %v1164 = vpop.permute.xlu0 %1163
      %1165 = vrot.lane.b32.xlu0 %v1121, 64
      %v1166 = vpop.permute.xlu0 %1165
      %1167 = vrot.lane.b32.xlu0 %v1122, 64
      %v1168 = vpop.permute.xlu0 %1167
      %1169 = vrot.lane.b32.xlu0 %v1123, 64
      %v1170 = vpop.permute.xlu0 %1169
      %1171 = vrot.lane.b32.xlu0 %v1124, 64
      %v1172 = vpop.permute.xlu0 %1171
      %1173 = vrot.lane.b32.xlu0 %v1125, 64
      %v1174 = vpop.permute.xlu0 %1173
      %1175 = vrot.lane.b32.xlu0 %v1126, 64
      %v1176 = vpop.permute.xlu0 %1175
      %1202 = vst.msk [vmem:[#allocation4 + $0x8] sm:$0xf] %vm497, %v1128
      %1203 = vst.msk [vmem:[#allocation4 + $0x1c] sm:$0xf] %vm497, %v1130
      %1204 = vst.msk [vmem:[#allocation4 + $0x30] sm:$0xf] %vm497, %v1132
      %1205 = vst.msk [vmem:[#allocation4 + $0x44] sm:$0xf] %vm497, %v1134
      %1206 = vst.msk [vmem:[#allocation4 + $0x58] sm:$0xf] %vm497, %v1136
      %1207 = vst.msk [vmem:[#allocation4 + $0x6c] sm:$0xf] %vm497, %v1138
      %1208 = vst.msk [vmem:[#allocation4 + $0x80] sm:$0xf] %vm497, %v1140
      %1209 = vst.msk [vmem:[#allocation4 + $0x94] sm:$0xf] %vm497, %v1142
      %1210 = vst.msk [vmem:[#allocation4 + $0xa8] sm:$0xf] %vm497, %v1144
      %1211 = vst.msk [vmem:[#allocation4 + $0xbc] sm:$0xf] %vm497, %v1146
      %1212 = vst.msk [vmem:[#allocation4 + $0xd0] sm:$0xf] %vm497, %v1148
      %1213 = vst.msk [vmem:[#allocation4 + $0xe4] sm:$0xf] %vm497, %v1150
      %1214 = vst.msk [vmem:[#allocation4 + $0xf8] sm:$0xf] %vm497, %v1152
      %1215 = vst.msk [vmem:[#allocation4 + $0x10c] sm:$0xf] %vm497, %v1154
      %1216 = vst.msk [vmem:[#allocation4 + $0x120] sm:$0xf] %vm497, %v1156
      %1217 = vst.msk [vmem:[#allocation4 + $0x134] sm:$0xf] %vm497, %v1158
      %1218 = vst.msk [vmem:[#allocation4 + $0x148] sm:$0xf] %vm497, %v1160
      %1219 = vst.msk [vmem:[#allocation4 + $0x15c] sm:$0xf] %vm497, %v1162
      %1220 = vst.msk [vmem:[#allocation4 + $0x170] sm:$0xf] %vm497, %v1164
      %1221 = vst.msk [vmem:[#allocation4 + $0x184] sm:$0xf] %vm497, %v1166
      %1222 = vst.msk [vmem:[#allocation4 + $0x198] sm:$0xf] %vm497, %v1168
      %1223 = vst.msk [vmem:[#allocation4 + $0x1ac] sm:$0xf] %vm497, %v1170
      %1224 = vst.msk [vmem:[#allocation4 + $0x1c0] sm:$0xf] %vm497, %v1172
      %1225 = vst.msk [vmem:[#allocation4 + $0x1d4] sm:$0xf] %vm497, %v1174
      %1226 = vst.msk [vmem:[#allocation4 + $0x1e8] sm:$0xf] %vm497, %v1176
      %v1227 = vld [vmem:[#allocation2 + $0x19] sm:$0xff]
      %v1228 = vld [vmem:[#allocation2 + $0x21] sm:$0xff]
      %v1229 = vld [vmem:[#allocation2 + $0x29] sm:$0xff]
      %v1230 = vld [vmem:[#allocation2 + $0x31] sm:$0xff]
      %v1231 = vld [vmem:[#allocation2 + $0x39] sm:$0xff]
      %v1232 = vld [vmem:[#allocation2 + $0x41] sm:$0xff]
      %v1233 = vld [vmem:[#allocation2 + $0x49] sm:$0xff]
      %v1234 = vld [vmem:[#allocation2 + $0x51] sm:$0xff]
      %v1235 = vld [vmem:[#allocation2 + $0x59] sm:$0xff]
      %v1236 = vld [vmem:[#allocation2 + $0x61] sm:$0xff]
      %v1237 = vld [vmem:[#allocation2 + $0x69] sm:$0xff]
      %v1238 = vld [vmem:[#allocation2 + $0x71] sm:$0xff]
      %v1239 = vld [vmem:[#allocation2 + $0x79] sm:$0xff]
      %v1240 = vld [vmem:[#allocation2 + $0x81] sm:$0xff]
      %v1241 = vld [vmem:[#allocation2 + $0x89] sm:$0xff]
      %v1242 = vld [vmem:[#allocation2 + $0x91] sm:$0xff]
      %v1243 = vld [vmem:[#allocation2 + $0x99] sm:$0xff]
      %v1244 = vld [vmem:[#allocation2 + $0xa1] sm:$0xff]
      %v1245 = vld [vmem:[#allocation2 + $0xa9] sm:$0xff]
      %v1246 = vld [vmem:[#allocation2 + $0xb1] sm:$0xff]
      %v1247 = vld [vmem:[#allocation2 + $0xb9] sm:$0xff]
      %v1248 = vld [vmem:[#allocation2 + $0xc1] sm:$0xff]
      %v1249 = vld [vmem:[#allocation2 + $0xc9] sm:$0xff]
      %v1250 = vld [vmem:[#allocation2 + $0xd1] sm:$0xff]
      %v1251 = vld [vmem:[#allocation2 + $0xd9] sm:$0xff]
      %v1252 = vpack.c.bf16 %v1228, %v1227
      %v1253 = vpack.c.bf16 %v1230, %v1229
      %v1254 = vpack.c.bf16 %v1232, %v1231
      %v1255 = vpack.c.bf16 %v1234, %v1233
      %v1256 = vpack.c.bf16 %v1236, %v1235
      %v1257 = vpack.c.bf16 %v1238, %v1237
      %v1258 = vpack.c.bf16 %v1240, %v1239
      %v1259 = vpack.c.bf16 %v1242, %v1241
      %v1260 = vpack.c.bf16 %v1244, %v1243
      %v1261 = vpack.c.bf16 %v1246, %v1245
      %v1262 = vpack.c.bf16 %v1248, %v1247
      %v1263 = vpack.c.bf16 %v1250, %v1249
      %v1264 = vpack.c.bf16 %v1251, %v1251
      %v1278 = vunpack.c.l.b16 %v1252
      %v1279 = vunpack.c.h.b16 %v1252
      %v1280 = vunpack.c.l.b16 %v1253
      %v1281 = vunpack.c.h.b16 %v1253
      %v1282 = vunpack.c.l.b16 %v1254
      %v1283 = vunpack.c.h.b16 %v1254
      %v1284 = vunpack.c.l.b16 %v1255
      %v1285 = vunpack.c.h.b16 %v1255
      %v1286 = vunpack.c.l.b16 %v1256
      %v1287 = vunpack.c.h.b16 %v1256
      %v1288 = vunpack.c.l.b16 %v1257
      %v1289 = vunpack.c.h.b16 %v1257
      %v1290 = vunpack.c.l.b16 %v1258
      %v1291 = vunpack.c.h.b16 %v1258
      %v1292 = vunpack.c.l.b16 %v1259
      %v1293 = vunpack.c.h.b16 %v1259
      %v1294 = vunpack.c.l.b16 %v1260
      %v1295 = vunpack.c.h.b16 %v1260
      %v1296 = vunpack.c.l.b16 %v1261
      %v1297 = vunpack.c.h.b16 %v1261
      %v1298 = vunpack.c.l.b16 %v1262
      %v1299 = vunpack.c.h.b16 %v1262
      %v1300 = vunpack.c.l.b16 %v1263
      %v1301 = vunpack.c.h.b16 %v1263
      %v1302 = vunpack.c.l.b16 %v1264
      %v1303 = vpack.c.b16 %v1278, %v1278
      %v1304 = vpack.c.b16 %v1279, %v1279
      %v1305 = vpack.c.b16 %v1280, %v1280
      %v1306 = vpack.c.b16 %v1281, %v1281
      %v1307 = vpack.c.b16 %v1282, %v1282
      %v1308 = vpack.c.b16 %v1283, %v1283
      %v1309 = vpack.c.b16 %v1284, %v1284
      %v1310 = vpack.c.b16 %v1285, %v1285
      %v1311 = vpack.c.b16 %v1286, %v1286
      %v1312 = vpack.c.b16 %v1287, %v1287
      %v1313 = vpack.c.b16 %v1288, %v1288
      %v1314 = vpack.c.b16 %v1289, %v1289
      %v1315 = vpack.c.b16 %v1290, %v1290
      %v1316 = vpack.c.b16 %v1291, %v1291
      %v1317 = vpack.c.b16 %v1292, %v1292
      %v1318 = vpack.c.b16 %v1293, %v1293
      %v1319 = vpack.c.b16 %v1294, %v1294
      %v1320 = vpack.c.b16 %v1295, %v1295
      %v1321 = vpack.c.b16 %v1296, %v1296
      %v1322 = vpack.c.b16 %v1297, %v1297
      %v1323 = vpack.c.b16 %v1298, %v1298
      %v1324 = vpack.c.b16 %v1299, %v1299
      %v1325 = vpack.c.b16 %v1300, %v1300
      %v1326 = vpack.c.b16 %v1301, %v1301
      %v1327 = vpack.c.b16 %v1302, %v1302
      %1353 = vst.msk [vmem:[#allocation4 + $0xc] sm:$0xf] %vm295, %v1303
      %1354 = vst.msk [vmem:[#allocation4 + $0x20] sm:$0xf] %vm295, %v1304
      %1355 = vst.msk [vmem:[#allocation4 + $0x34] sm:$0xf] %vm295, %v1305
      %1356 = vst.msk [vmem:[#allocation4 + $0x48] sm:$0xf] %vm295, %v1306
      %1357 = vst.msk [vmem:[#allocation4 + $0x5c] sm:$0xf] %vm295, %v1307
      %1358 = vst.msk [vmem:[#allocation4 + $0x70] sm:$0xf] %vm295, %v1308
      %1359 = vst.msk [vmem:[#allocation4 + $0x84] sm:$0xf] %vm295, %v1309
      %1360 = vst.msk [vmem:[#allocation4 + $0x98] sm:$0xf] %vm295, %v1310
      %1361 = vst.msk [vmem:[#allocation4 + $0xac] sm:$0xf] %vm295, %v1311
      %1362 = vst.msk [vmem:[#allocation4 + $0xc0] sm:$0xf] %vm295, %v1312
      %1363 = vst.msk [vmem:[#allocation4 + $0xd4] sm:$0xf] %vm295, %v1313
      %1364 = vst.msk [vmem:[#allocation4 + $0xe8] sm:$0xf] %vm295, %v1314
      %1365 = vst.msk [vmem:[#allocation4 + $0xfc] sm:$0xf] %vm295, %v1315
      %1366 = vst.msk [vmem:[#allocation4 + $0x110] sm:$0xf] %vm295, %v1316
      %1367 = vst.msk [vmem:[#allocation4 + $0x124] sm:$0xf] %vm295, %v1317
      %1368 = vst.msk [vmem:[#allocation4 + $0x138] sm:$0xf] %vm295, %v1318
      %1369 = vst.msk [vmem:[#allocation4 + $0x14c] sm:$0xf] %vm295, %v1319
      %1370 = vst.msk [vmem:[#allocation4 + $0x160] sm:$0xf] %vm295, %v1320
      %1371 = vst.msk [vmem:[#allocation4 + $0x174] sm:$0xf] %vm295, %v1321
      %1372 = vst.msk [vmem:[#allocation4 + $0x188] sm:$0xf] %vm295, %v1322
      %1373 = vst.msk [vmem:[#allocation4 + $0x19c] sm:$0xf] %vm295, %v1323
      %1374 = vst.msk [vmem:[#allocation4 + $0x1b0] sm:$0xf] %vm295, %v1324
      %1375 = vst.msk [vmem:[#allocation4 + $0x1c4] sm:$0xf] %vm295, %v1325
      %1376 = vst.msk [vmem:[#allocation4 + $0x1d8] sm:$0xf] %vm295, %v1326
      %1377 = vst.msk [vmem:[#allocation4 + $0x1ec] sm:$0xf] %vm295, %v1327
      %v1378 = vld [vmem:[#allocation2 + $0x1a] sm:$0xff]
      %v1379 = vld [vmem:[#allocation2 + $0x22] sm:$0xff]
      %v1380 = vld [vmem:[#allocation2 + $0x2a] sm:$0xff]
      %v1381 = vld [vmem:[#allocation2 + $0x32] sm:$0xff]
      %v1382 = vld [vmem:[#allocation2 + $0x3a] sm:$0xff]
      %v1383 = vld [vmem:[#allocation2 + $0x42] sm:$0xff]
      %v1384 = vld [vmem:[#allocation2 + $0x4a] sm:$0xff]
      %v1385 = vld [vmem:[#allocation2 + $0x52] sm:$0xff]
      %v1386 = vld [vmem:[#allocation2 + $0x5a] sm:$0xff]
      %v1387 = vld [vmem:[#allocation2 + $0x62] sm:$0xff]
      %v1388 = vld [vmem:[#allocation2 + $0x6a] sm:$0xff]
      %v1389 = vld [vmem:[#allocation2 + $0x72] sm:$0xff]
      %v1390 = vld [vmem:[#allocation2 + $0x7a] sm:$0xff]
      %v1391 = vld [vmem:[#allocation2 + $0x82] sm:$0xff]
      %v1392 = vld [vmem:[#allocation2 + $0x8a] sm:$0xff]
      %v1393 = vld [vmem:[#allocation2 + $0x92] sm:$0xff]
      %v1394 = vld [vmem:[#allocation2 + $0x9a] sm:$0xff]
      %v1395 = vld [vmem:[#allocation2 + $0xa2] sm:$0xff]
      %v1396 = vld [vmem:[#allocation2 + $0xaa] sm:$0xff]
      %v1397 = vld [vmem:[#allocation2 + $0xb2] sm:$0xff]
      %v1398 = vld [vmem:[#allocation2 + $0xba] sm:$0xff]
      %v1399 = vld [vmem:[#allocation2 + $0xc2] sm:$0xff]
      %v1400 = vld [vmem:[#allocation2 + $0xca] sm:$0xff]
      %v1401 = vld [vmem:[#allocation2 + $0xd2] sm:$0xff]
      %v1402 = vld [vmem:[#allocation2 + $0xda] sm:$0xff]
      %v1403 = vpack.c.bf16 %v1379, %v1378
      %v1404 = vpack.c.bf16 %v1381, %v1380
      %v1405 = vpack.c.bf16 %v1383, %v1382
      %v1406 = vpack.c.bf16 %v1385, %v1384
      %v1407 = vpack.c.bf16 %v1387, %v1386
      %v1408 = vpack.c.bf16 %v1389, %v1388
      %v1409 = vpack.c.bf16 %v1391, %v1390
      %v1410 = vpack.c.bf16 %v1393, %v1392
      %v1411 = vpack.c.bf16 %v1395, %v1394
      %v1412 = vpack.c.bf16 %v1397, %v1396
      %v1413 = vpack.c.bf16 %v1399, %v1398
      %v1414 = vpack.c.bf16 %v1401, %v1400
      %v1415 = vpack.c.bf16 %v1402, %v1402
      %v1429 = vunpack.c.l.b16 %v1403
      %v1430 = vunpack.c.h.b16 %v1403
      %v1431 = vunpack.c.l.b16 %v1404
      %v1432 = vunpack.c.h.b16 %v1404
      %v1433 = vunpack.c.l.b16 %v1405
      %v1434 = vunpack.c.h.b16 %v1405
      %v1435 = vunpack.c.l.b16 %v1406
      %v1436 = vunpack.c.h.b16 %v1406
      %v1437 = vunpack.c.l.b16 %v1407
      %v1438 = vunpack.c.h.b16 %v1407
      %v1439 = vunpack.c.l.b16 %v1408
      %v1440 = vunpack.c.h.b16 %v1408
      %v1441 = vunpack.c.l.b16 %v1409
      %v1442 = vunpack.c.h.b16 %v1409
      %v1443 = vunpack.c.l.b16 %v1410
      %v1444 = vunpack.c.h.b16 %v1410
      %v1445 = vunpack.c.l.b16 %v1411
      %v1446 = vunpack.c.h.b16 %v1411
      %v1447 = vunpack.c.l.b16 %v1412
      %v1448 = vunpack.c.h.b16 %v1412
      %v1449 = vunpack.c.l.b16 %v1413
      %v1450 = vunpack.c.h.b16 %v1413
      %v1451 = vunpack.c.l.b16 %v1414
      %v1452 = vunpack.c.h.b16 %v1414
      %v1453 = vunpack.c.l.b16 %v1415
      %v1454 = vpack.c.b16 %v1429, %v1429
      %v1455 = vpack.c.b16 %v1430, %v1430
      %v1456 = vpack.c.b16 %v1431, %v1431
      %v1457 = vpack.c.b16 %v1432, %v1432
      %v1458 = vpack.c.b16 %v1433, %v1433
      %v1459 = vpack.c.b16 %v1434, %v1434
      %v1460 = vpack.c.b16 %v1435, %v1435
      %v1461 = vpack.c.b16 %v1436, %v1436
      %v1462 = vpack.c.b16 %v1437, %v1437
      %v1463 = vpack.c.b16 %v1438, %v1438
      %v1464 = vpack.c.b16 %v1439, %v1439
      %v1465 = vpack.c.b16 %v1440, %v1440
      %v1466 = vpack.c.b16 %v1441, %v1441
      %v1467 = vpack.c.b16 %v1442, %v1442
      %v1468 = vpack.c.b16 %v1443, %v1443
      %v1469 = vpack.c.b16 %v1444, %v1444
      %v1470 = vpack.c.b16 %v1445, %v1445
      %v1471 = vpack.c.b16 %v1446, %v1446
      %v1472 = vpack.c.b16 %v1447, %v1447
      %v1473 = vpack.c.b16 %v1448, %v1448
      %v1474 = vpack.c.b16 %v1449, %v1449
      %v1475 = vpack.c.b16 %v1450, %v1450
      %v1476 = vpack.c.b16 %v1451, %v1451
      %v1477 = vpack.c.b16 %v1452, %v1452
      %v1478 = vpack.c.b16 %v1453, %v1453
      %1479 = vrot.lane.b32.xlu0 %v1454, 64
      %v1480 = vpop.permute.xlu0 %1479
      %1481 = vrot.lane.b32.xlu0 %v1455, 64
      %v1482 = vpop.permute.xlu0 %1481
      %1483 = vrot.lane.b32.xlu0 %v1456, 64
      %v1484 = vpop.permute.xlu0 %1483
      %1485 = vrot.lane.b32.xlu0 %v1457, 64
      %v1486 = vpop.permute.xlu0 %1485
      %1487 = vrot.lane.b32.xlu0 %v1458, 64
      %v1488 = vpop.permute.xlu0 %1487
      %1489 = vrot.lane.b32.xlu0 %v1459, 64
      %v1490 = vpop.permute.xlu0 %1489
      %1491 = vrot.lane.b32.xlu0 %v1460, 64
      %v1492 = vpop.permute.xlu0 %1491
      %1493 = vrot.lane.b32.xlu0 %v1461, 64
      %v1494 = vpop.permute.xlu0 %1493
      %1495 = vrot.lane.b32.xlu0 %v1462, 64
      %v1496 = vpop.permute.xlu0 %1495
      %1497 = vrot.lane.b32.xlu0 %v1463, 64
      %v1498 = vpop.permute.xlu0 %1497
      %1499 = vrot.lane.b32.xlu0 %v1464, 64
      %v1500 = vpop.permute.xlu0 %1499
      %1501 = vrot.lane.b32.xlu0 %v1465, 64
      %v1502 = vpop.permute.xlu0 %1501
      %1503 = vrot.lane.b32.xlu0 %v1466, 64
      %v1504 = vpop.permute.xlu0 %1503
      %1505 = vrot.lane.b32.xlu0 %v1467, 64
      %v1506 = vpop.permute.xlu0 %1505
      %1507 = vrot.lane.b32.xlu0 %v1468, 64
      %v1508 = vpop.permute.xlu0 %1507
      %1509 = vrot.lane.b32.xlu0 %v1469, 64
      %v1510 = vpop.permute.xlu0 %1509
      %1511 = vrot.lane.b32.xlu0 %v1470, 64
      %v1512 = vpop.permute.xlu0 %1511
      %1513 = vrot.lane.b32.xlu0 %v1471, 64
      %v1514 = vpop.permute.xlu0 %1513
      %1515 = vrot.lane.b32.xlu0 %v1472, 64
      %v1516 = vpop.permute.xlu0 %1515
      %1517 = vrot.lane.b32.xlu0 %v1473, 64
      %v1518 = vpop.permute.xlu0 %1517
      %1519 = vrot.lane.b32.xlu0 %v1474, 64
      %v1520 = vpop.permute.xlu0 %1519
      %1521 = vrot.lane.b32.xlu0 %v1475, 64
      %v1522 = vpop.permute.xlu0 %1521
      %1523 = vrot.lane.b32.xlu0 %v1476, 64
      %v1524 = vpop.permute.xlu0 %1523
      %1525 = vrot.lane.b32.xlu0 %v1477, 64
      %v1526 = vpop.permute.xlu0 %1525
      %1527 = vrot.lane.b32.xlu0 %v1478, 64
      %v1528 = vpop.permute.xlu0 %1527
      %1554 = vst.msk [vmem:[#allocation4 + $0xc] sm:$0xf] %vm497, %v1480
      %1555 = vst.msk [vmem:[#allocation4 + $0x20] sm:$0xf] %vm497, %v1482
      %1556 = vst.msk [vmem:[#allocation4 + $0x34] sm:$0xf] %vm497, %v1484
      %1557 = vst.msk [vmem:[#allocation4 + $0x48] sm:$0xf] %vm497, %v1486
      %1558 = vst.msk [vmem:[#allocation4 + $0x5c] sm:$0xf] %vm497, %v1488
      %1559 = vst.msk [vmem:[#allocation4 + $0x70] sm:$0xf] %vm497, %v1490
      %1560 = vst.msk [vmem:[#allocation4 + $0x84] sm:$0xf] %vm497, %v1492
      %1561 = vst.msk [vmem:[#allocation4 + $0x98] sm:$0xf] %vm497, %v1494
      %1562 = vst.msk [vmem:[#allocation4 + $0xac] sm:$0xf] %vm497, %v1496
      %1563 = vst.msk [vmem:[#allocation4 + $0xc0] sm:$0xf] %vm497, %v1498
      %1564 = vst.msk [vmem:[#allocation4 + $0xd4] sm:$0xf] %vm497, %v1500
      %1565 = vst.msk [vmem:[#allocation4 + $0xe8] sm:$0xf] %vm497, %v1502
      %1566 = vst.msk [vmem:[#allocation4 + $0xfc] sm:$0xf] %vm497, %v1504
      %1567 = vst.msk [vmem:[#allocation4 + $0x110] sm:$0xf] %vm497, %v1506
      %1568 = vst.msk [vmem:[#allocation4 + $0x124] sm:$0xf] %vm497, %v1508
      %1569 = vst.msk [vmem:[#allocation4 + $0x138] sm:$0xf] %vm497, %v1510
      %1570 = vst.msk [vmem:[#allocation4 + $0x14c] sm:$0xf] %vm497, %v1512
      %1571 = vst.msk [vmem:[#allocation4 + $0x160] sm:$0xf] %vm497, %v1514
      %1572 = vst.msk [vmem:[#allocation4 + $0x174] sm:$0xf] %vm497, %v1516
      %1573 = vst.msk [vmem:[#allocation4 + $0x188] sm:$0xf] %vm497, %v1518
      %1574 = vst.msk [vmem:[#allocation4 + $0x19c] sm:$0xf] %vm497, %v1520
      %1575 = vst.msk [vmem:[#allocation4 + $0x1b0] sm:$0xf] %vm497, %v1522
      %1576 = vst.msk [vmem:[#allocation4 + $0x1c4] sm:$0xf] %vm497, %v1524
      %1577 = vst.msk [vmem:[#allocation4 + $0x1d8] sm:$0xf] %vm497, %v1526
      %1578 = vst.msk [vmem:[#allocation4 + $0x1ec] sm:$0xf] %vm497, %v1528
      %v1579 = vld [vmem:[#allocation2 + $0x1b] sm:$0xff]
      %v1580 = vld [vmem:[#allocation2 + $0x23] sm:$0xff]
      %v1581 = vld [vmem:[#allocation2 + $0x2b] sm:$0xff]
      %v1582 = vld [vmem:[#allocation2 + $0x33] sm:$0xff]
      %v1583 = vld [vmem:[#allocation2 + $0x3b] sm:$0xff]
      %v1584 = vld [vmem:[#allocation2 + $0x43] sm:$0xff]
      %v1585 = vld [vmem:[#allocation2 + $0x4b] sm:$0xff]
      %v1586 = vld [vmem:[#allocation2 + $0x53] sm:$0xff]
      %v1587 = vld [vmem:[#allocation2 + $0x5b] sm:$0xff]
      %v1588 = vld [vmem:[#allocation2 + $0x63] sm:$0xff]
      %v1589 = vld [vmem:[#allocation2 + $0x6b] sm:$0xff]
      %v1590 = vld [vmem:[#allocation2 + $0x73] sm:$0xff]
      %v1591 = vld [vmem:[#allocation2 + $0x7b] sm:$0xff]
      %v1592 = vld [vmem:[#allocation2 + $0x83] sm:$0xff]
      %v1593 = vld [vmem:[#allocation2 + $0x8b] sm:$0xff]
      %v1594 = vld [vmem:[#allocation2 + $0x93] sm:$0xff]
      %v1595 = vld [vmem:[#allocation2 + $0x9b] sm:$0xff]
      %v1596 = vld [vmem:[#allocation2 + $0xa3] sm:$0xff]
      %v1597 = vld [vmem:[#allocation2 + $0xab] sm:$0xff]
      %v1598 = vld [vmem:[#allocation2 + $0xb3] sm:$0xff]
      %v1599 = vld [vmem:[#allocation2 + $0xbb] sm:$0xff]
      %v1600 = vld [vmem:[#allocation2 + $0xc3] sm:$0xff]
      %v1601 = vld [vmem:[#allocation2 + $0xcb] sm:$0xff]
      %v1602 = vld [vmem:[#allocation2 + $0xd3] sm:$0xff]
      %v1603 = vld [vmem:[#allocation2 + $0xdb] sm:$0xff]
      %v1604 = vpack.c.bf16 %v1580, %v1579
      %v1605 = vpack.c.bf16 %v1582, %v1581
      %v1606 = vpack.c.bf16 %v1584, %v1583
      %v1607 = vpack.c.bf16 %v1586, %v1585
      %v1608 = vpack.c.bf16 %v1588, %v1587
      %v1609 = vpack.c.bf16 %v1590, %v1589
      %v1610 = vpack.c.bf16 %v1592, %v1591
      %v1611 = vpack.c.bf16 %v1594, %v1593
      %v1612 = vpack.c.bf16 %v1596, %v1595
      %v1613 = vpack.c.bf16 %v1598, %v1597
      %v1614 = vpack.c.bf16 %v1600, %v1599
      %v1615 = vpack.c.bf16 %v1602, %v1601
      %v1616 = vpack.c.bf16 %v1603, %v1603
      %v1630 = vunpack.c.l.b16 %v1604
      %v1631 = vunpack.c.h.b16 %v1604
      %v1632 = vunpack.c.l.b16 %v1605
      %v1633 = vunpack.c.h.b16 %v1605
      %v1634 = vunpack.c.l.b16 %v1606
      %v1635 = vunpack.c.h.b16 %v1606
      %v1636 = vunpack.c.l.b16 %v1607
      %v1637 = vunpack.c.h.b16 %v1607
      %v1638 = vunpack.c.l.b16 %v1608
      %v1639 = vunpack.c.h.b16 %v1608
      %v1640 = vunpack.c.l.b16 %v1609
      %v1641 = vunpack.c.h.b16 %v1609
      %v1642 = vunpack.c.l.b16 %v1610
      %v1643 = vunpack.c.h.b16 %v1610
      %v1644 = vunpack.c.l.b16 %v1611
      %v1645 = vunpack.c.h.b16 %v1611
      %v1646 = vunpack.c.l.b16 %v1612
      %v1647 = vunpack.c.h.b16 %v1612
      %v1648 = vunpack.c.l.b16 %v1613
      %v1649 = vunpack.c.h.b16 %v1613
      %v1650 = vunpack.c.l.b16 %v1614
      %v1651 = vunpack.c.h.b16 %v1614
      %v1652 = vunpack.c.l.b16 %v1615
      %v1653 = vunpack.c.h.b16 %v1615
      %v1654 = vunpack.c.l.b16 %v1616
      %v1655 = vpack.c.b16 %v1630, %v1630
      %v1656 = vpack.c.b16 %v1631, %v1631
      %v1657 = vpack.c.b16 %v1632, %v1632
      %v1658 = vpack.c.b16 %v1633, %v1633
      %v1659 = vpack.c.b16 %v1634, %v1634
      %v1660 = vpack.c.b16 %v1635, %v1635
      %v1661 = vpack.c.b16 %v1636, %v1636
      %v1662 = vpack.c.b16 %v1637, %v1637
      %v1663 = vpack.c.b16 %v1638, %v1638
      %v1664 = vpack.c.b16 %v1639, %v1639
      %v1665 = vpack.c.b16 %v1640, %v1640
      %v1666 = vpack.c.b16 %v1641, %v1641
      %v1667 = vpack.c.b16 %v1642, %v1642
      %v1668 = vpack.c.b16 %v1643, %v1643
      %v1669 = vpack.c.b16 %v1644, %v1644
      %v1670 = vpack.c.b16 %v1645, %v1645
      %v1671 = vpack.c.b16 %v1646, %v1646
      %v1672 = vpack.c.b16 %v1647, %v1647
      %v1673 = vpack.c.b16 %v1648, %v1648
      %v1674 = vpack.c.b16 %v1649, %v1649
      %v1675 = vpack.c.b16 %v1650, %v1650
      %v1676 = vpack.c.b16 %v1651, %v1651
      %v1677 = vpack.c.b16 %v1652, %v1652
      %v1678 = vpack.c.b16 %v1653, %v1653
      %v1679 = vpack.c.b16 %v1654, %v1654
      %1705 = vst.msk [vmem:[#allocation4 + $0x10] sm:$0xf] %vm295, %v1655
      %1706 = vst.msk [vmem:[#allocation4 + $0x24] sm:$0xf] %vm295, %v1656
      %1707 = vst.msk [vmem:[#allocation4 + $0x38] sm:$0xf] %vm295, %v1657
      %1708 = vst.msk [vmem:[#allocation4 + $0x4c] sm:$0xf] %vm295, %v1658
      %1709 = vst.msk [vmem:[#allocation4 + $0x60] sm:$0xf] %vm295, %v1659
      %1710 = vst.msk [vmem:[#allocation4 + $0x74] sm:$0xf] %vm295, %v1660
      %1711 = vst.msk [vmem:[#allocation4 + $0x88] sm:$0xf] %vm295, %v1661
      %1712 = vst.msk [vmem:[#allocation4 + $0x9c] sm:$0xf] %vm295, %v1662
      %1713 = vst.msk [vmem:[#allocation4 + $0xb0] sm:$0xf] %vm295, %v1663
      %1714 = vst.msk [vmem:[#allocation4 + $0xc4] sm:$0xf] %vm295, %v1664
      %1715 = vst.msk [vmem:[#allocation4 + $0xd8] sm:$0xf] %vm295, %v1665
      %1716 = vst.msk [vmem:[#allocation4 + $0xec] sm:$0xf] %vm295, %v1666
      %1717 = vst.msk [vmem:[#allocation4 + $0x100] sm:$0xf] %vm295, %v1667
      %1718 = vst.msk [vmem:[#allocation4 + $0x114] sm:$0xf] %vm295, %v1668
      %1719 = vst.msk [vmem:[#allocation4 + $0x128] sm:$0xf] %vm295, %v1669
      %1720 = vst.msk [vmem:[#allocation4 + $0x13c] sm:$0xf] %vm295, %v1670
      %1721 = vst.msk [vmem:[#allocation4 + $0x150] sm:$0xf] %vm295, %v1671
      %1722 = vst.msk [vmem:[#allocation4 + $0x164] sm:$0xf] %vm295, %v1672
      %1723 = vst.msk [vmem:[#allocation4 + $0x178] sm:$0xf] %vm295, %v1673
      %1724 = vst.msk [vmem:[#allocation4 + $0x18c] sm:$0xf] %vm295, %v1674
      %1725 = vst.msk [vmem:[#allocation4 + $0x1a0] sm:$0xf] %vm295, %v1675
      %1726 = vst.msk [vmem:[#allocation4 + $0x1b4] sm:$0xf] %vm295, %v1676
      %1727 = vst.msk [vmem:[#allocation4 + $0x1c8] sm:$0xf] %vm295, %v1677
      %1728 = vst.msk [vmem:[#allocation4 + $0x1dc] sm:$0xf] %vm295, %v1678
      %1729 = vst.msk [vmem:[#allocation4 + $0x1f0] sm:$0xf] %vm295, %v1679
      %v1730 = vld [vmem:[#allocation4] sm:$0xff]
      %v1731 = vld [vmem:[#allocation4 + $0x8] sm:$0xff]
      %v1732 = vld [vmem:[#allocation4 + $0x10] sm:$0xf]
      %v1733 = vld [vmem:[#allocation4 + $0x14] sm:$0xff]
      %v1734 = vld [vmem:[#allocation4 + $0x1c] sm:$0xff]
      %v1735 = vld [vmem:[#allocation4 + $0x24] sm:$0xf]
      %v1736 = vld [vmem:[#allocation4 + $0x28] sm:$0xff]
      %v1737 = vld [vmem:[#allocation4 + $0x30] sm:$0xff]
      %v1738 = vld [vmem:[#allocation4 + $0x38] sm:$0xf]
      %v1739 = vld [vmem:[#allocation4 + $0x3c] sm:$0xff]
      %v1740 = vld [vmem:[#allocation4 + $0x44] sm:$0xff]
      %v1741 = vld [vmem:[#allocation4 + $0x4c] sm:$0xf]
      %v1742 = vld [vmem:[#allocation4 + $0x50] sm:$0xff]
      %v1743 = vld [vmem:[#allocation4 + $0x58] sm:$0xff]
      %v1744 = vld [vmem:[#allocation4 + $0x60] sm:$0xf]
      %v1745 = vld [vmem:[#allocation4 + $0x64] sm:$0xff]
      %v1746 = vld [vmem:[#allocation4 + $0x6c] sm:$0xff]
      %v1747 = vld [vmem:[#allocation4 + $0x74] sm:$0xf]
      %v1748 = vld [vmem:[#allocation4 + $0x78] sm:$0xff]
      %v1749 = vld [vmem:[#allocation4 + $0x80] sm:$0xff]
      %v1750 = vld [vmem:[#allocation4 + $0x88] sm:$0xf]
      %v1751 = vld [vmem:[#allocation4 + $0x8c] sm:$0xff]
      %v1752 = vld [vmem:[#allocation4 + $0x94] sm:$0xff]
      %v1753 = vld [vmem:[#allocation4 + $0x9c] sm:$0xf]
      %v1754 = vld [vmem:[#allocation4 + $0xa0] sm:$0xff]
      %v1755 = vld [vmem:[#allocation4 + $0xa8] sm:$0xff]
      %v1756 = vld [vmem:[#allocation4 + $0xb0] sm:$0xf]
      %v1757 = vld [vmem:[#allocation4 + $0xb4] sm:$0xff]
      %v1758 = vld [vmem:[#allocation4 + $0xbc] sm:$0xff]
      %v1759 = vld [vmem:[#allocation4 + $0xc4] sm:$0xf]
      %v1760 = vld [vmem:[#allocation4 + $0xc8] sm:$0xff]
      %v1761 = vld [vmem:[#allocation4 + $0xd0] sm:$0xff]
      %v1762 = vld [vmem:[#allocation4 + $0xd8] sm:$0xf]
      %v1763 = vld [vmem:[#allocation4 + $0xdc] sm:$0xff]
      %v1764 = vld [vmem:[#allocation4 + $0xe4] sm:$0xff]
      %v1765 = vld [vmem:[#allocation4 + $0xec] sm:$0xf]
      %v1766 = vld [vmem:[#allocation4 + $0xf0] sm:$0xff]
      %v1767 = vld [vmem:[#allocation4 + $0xf8] sm:$0xff]
      %v1768 = vld [vmem:[#allocation4 + $0x100] sm:$0xf]
      %v1769 = vld [vmem:[#allocation4 + $0x104] sm:$0xff]
      %v1770 = vld [vmem:[#allocation4 + $0x10c] sm:$0xff]
      %v1771 = vld [vmem:[#allocation4 + $0x114] sm:$0xf]
      %v1772 = vld [vmem:[#allocation4 + $0x118] sm:$0xff]
      %v1773 = vld [vmem:[#allocation4 + $0x120] sm:$0xff]
      %v1774 = vld [vmem:[#allocation4 + $0x128] sm:$0xf]
      %v1775 = vld [vmem:[#allocation4 + $0x12c] sm:$0xff]
      %v1776 = vld [vmem:[#allocation4 + $0x134] sm:$0xff]
      %v1777 = vld [vmem:[#allocation4 + $0x13c] sm:$0xf]
      %v1778 = vld [vmem:[#allocation4 + $0x140] sm:$0xff]
      %v1779 = vld [vmem:[#allocation4 + $0x148] sm:$0xff]
      %v1780 = vld [vmem:[#allocation4 + $0x150] sm:$0xf]
      %v1781 = vld [vmem:[#allocation4 + $0x154] sm:$0xff]
      %v1782 = vld [vmem:[#allocation4 + $0x15c] sm:$0xff]
      %v1783 = vld [vmem:[#allocation4 + $0x164] sm:$0xf]
      %v1784 = vld [vmem:[#allocation4 + $0x168] sm:$0xff]
      %v1785 = vld [vmem:[#allocation4 + $0x170] sm:$0xff]
      %v1786 = vld [vmem:[#allocation4 + $0x178] sm:$0xf]
      %v1787 = vld [vmem:[#allocation4 + $0x17c] sm:$0xff]
      %v1788 = vld [vmem:[#allocation4 + $0x184] sm:$0xff]
      %v1789 = vld [vmem:[#allocation4 + $0x18c] sm:$0xf]
      %v1790 = vld [vmem:[#allocation4 + $0x190] sm:$0xff]
      %v1791 = vld [vmem:[#allocation4 + $0x198] sm:$0xff]
      %v1792 = vld [vmem:[#allocation4 + $0x1a0] sm:$0xf]
      %v1793 = vld [vmem:[#allocation4 + $0x1a4] sm:$0xff]
      %v1794 = vld [vmem:[#allocation4 + $0x1ac] sm:$0xff]
      %v1795 = vld [vmem:[#allocation4 + $0x1b4] sm:$0xf]
      %v1796 = vld [vmem:[#allocation4 + $0x1b8] sm:$0xff]
      %v1797 = vld [vmem:[#allocation4 + $0x1c0] sm:$0xff]
      %v1798 = vld [vmem:[#allocation4 + $0x1c8] sm:$0xf]
      %v1799 = vld [vmem:[#allocation4 + $0x1cc] sm:$0xff]
      %v1800 = vld [vmem:[#allocation4 + $0x1d4] sm:$0xff]
      %v1801 = vld [vmem:[#allocation4 + $0x1dc] sm:$0xf]
      %v1802 = vld [vmem:[#allocation4 + $0x1e0] sm:$0xff]
      %v1803 = vld [vmem:[#allocation4 + $0x1e8] sm:$0xff]
      %v1804 = vld [vmem:[#allocation4 + $0x1f0] sm:$0xf]
      %s1805 = smul.u32 %s168, 72
      %s1806 = smul.addr %s1805, 4
      %s1807 = scalar_lea.vmem %s1, %s1806
      %v1808 = vld [vmem:[%s1807] sm:$0xf]
      %v1809 = vld [vmem:[%s1807 + $0x4] sm:$0xf]
      %v1810 = vld [vmem:[%s1807 + $0x8] sm:$0xf]
      %v1811 = vld [vmem:[%s1807 + $0xc] sm:$0xf]
      %v1812 = vld [vmem:[%s1807 + $0x10] sm:$0xf]
      %v1813 = vld [vmem:[%s1807 + $0x14] sm:$0xf]
      %v1814 = vld [vmem:[%s1807 + $0x18] sm:$0xf]
      %v1815 = vld [vmem:[%s1807 + $0x1c] sm:$0xf]
      %v1816 = vld [vmem:[%s1807 + $0x20] sm:$0xf]
      %v1817 = vld [vmem:[%s1807 + $0x24] sm:$0xf]
      %v1818 = vld [vmem:[%s1807 + $0x28] sm:$0xf]
      %v1819 = vld [vmem:[%s1807 + $0x2c] sm:$0xf]
      %v1820 = vld [vmem:[%s1807 + $0x30] sm:$0xf]
      %v1821 = vld [vmem:[%s1807 + $0x34] sm:$0xf]
      %v1822 = vld [vmem:[%s1807 + $0x38] sm:$0xf]
      %v1823 = vld [vmem:[%s1807 + $0x3c] sm:$0xf]
      %v1824 = vld [vmem:[%s1807 + $0x40] sm:$0xf]
      %v1825 = vld [vmem:[%s1807 + $0x44] sm:$0xf]
      %v1826 = vld [vmem:[%s1807 + $0x48] sm:$0xf]
      %v1827 = vld [vmem:[%s1807 + $0x4c] sm:$0xf]
      %v1828 = vld [vmem:[%s1807 + $0x50] sm:$0xf]
      %v1829 = vld [vmem:[%s1807 + $0x54] sm:$0xf]
      %v1830 = vld [vmem:[%s1807 + $0x58] sm:$0xf]
      %v1831 = vld [vmem:[%s1807 + $0x5c] sm:$0xf]
      %v1832 = vld [vmem:[%s1807 + $0x60] sm:$0xf]
      %v1833 = vld [vmem:[%s1807 + $0x64] sm:$0xf]
      %v1834 = vld [vmem:[%s1807 + $0x68] sm:$0xf]
      %v1835 = vld [vmem:[%s1807 + $0x6c] sm:$0xf]
      %v1836 = vld [vmem:[%s1807 + $0x70] sm:$0xf]
      %v1837 = vld [vmem:[%s1807 + $0x74] sm:$0xf]
      %v1838 = vld [vmem:[%s1807 + $0x78] sm:$0xf]
      %v1839 = vld [vmem:[%s1807 + $0x7c] sm:$0xf]
      %v1840 = vld [vmem:[%s1807 + $0x80] sm:$0xf]
      %v1841 = vld [vmem:[%s1807 + $0x84] sm:$0xf]
      %v1842 = vld [vmem:[%s1807 + $0x88] sm:$0xf]
      %v1843 = vld [vmem:[%s1807 + $0x8c] sm:$0xf]
      %v1844 = vld [vmem:[%s1807 + $0x90] sm:$0xf]
      %v1845 = vld [vmem:[%s1807 + $0x94] sm:$0xf]
      %v1846 = vld [vmem:[%s1807 + $0x98] sm:$0xf]
      %v1847 = vld [vmem:[%s1807 + $0x9c] sm:$0xf]
      %v1848 = vld [vmem:[%s1807 + $0xa0] sm:$0xf]
      %v1849 = vld [vmem:[%s1807 + $0xa4] sm:$0xf]
      %v1850 = vld [vmem:[%s1807 + $0xa8] sm:$0xf]
      %v1851 = vld [vmem:[%s1807 + $0xac] sm:$0xf]
      %v1852 = vld [vmem:[%s1807 + $0xb0] sm:$0xf]
      %v1853 = vld [vmem:[%s1807 + $0xb4] sm:$0xf]
      %v1854 = vld [vmem:[%s1807 + $0xb8] sm:$0xf]
      %v1855 = vld [vmem:[%s1807 + $0xbc] sm:$0xf]
      %v1856 = vld [vmem:[%s1807 + $0xc0] sm:$0xf]
      %v1857 = vld [vmem:[%s1807 + $0xc4] sm:$0xf]
      %v1858 = vld [vmem:[%s1807 + $0xc8] sm:$0xf]
      %v1859 = vld [vmem:[%s1807 + $0xcc] sm:$0xf]
      %v1860 = vld [vmem:[%s1807 + $0xd0] sm:$0xf]
      %v1861 = vld [vmem:[%s1807 + $0xd4] sm:$0xf]
      %v1862 = vld [vmem:[%s1807 + $0xd8] sm:$0xf]
      %v1863 = vld [vmem:[%s1807 + $0xdc] sm:$0xf]
      %v1864 = vld [vmem:[%s1807 + $0xe0] sm:$0xf]
      %v1865 = vld [vmem:[%s1807 + $0xe4] sm:$0xf]
      %v1866 = vld [vmem:[%s1807 + $0xe8] sm:$0xf]
      %v1867 = vld [vmem:[%s1807 + $0xec] sm:$0xf]
      %v1868 = vld [vmem:[%s1807 + $0xf0] sm:$0xf]
      %v1869 = vld [vmem:[%s1807 + $0xf4] sm:$0xf]
      %v1870 = vld [vmem:[%s1807 + $0xf8] sm:$0xf]
      %v1871 = vld [vmem:[%s1807 + $0xfc] sm:$0xf]
      %v1872 = vld [vmem:[%s1807 + $0x100] sm:$0xf]
      %v1873 = vld [vmem:[%s1807 + $0x104] sm:$0xf]
      %v1874 = vld [vmem:[%s1807 + $0x108] sm:$0xf]
      %v1875 = vld [vmem:[%s1807 + $0x10c] sm:$0xf]
      %v1876 = vld [vmem:[%s1807 + $0x110] sm:$0xf]
      %v1877 = vld [vmem:[%s1807 + $0x114] sm:$0xf]
      %v1878 = vld [vmem:[%s1807 + $0x118] sm:$0xf]
      %v1879 = vld [vmem:[%s1807 + $0x11c] sm:$0xf]
      %s1880 = scalar_lea.vmem %s2, %s168
      %v1881 = vld [vmem:[%s1880] sm:$0x1]
      %v1883 = vlaneseq
      %v1884 = vshrl.u32 %v1883, 7
      %v1885 = vsub.s32 0, %v1884
      %v1886 = vrot.slane %v1881, %v1885
      %v1963 = vunpack.c.l.b16 %v1730
      %v1964 = vunpack.c.h.b16 %v1730
      %v1965 = vunpack.c.l.b16 %v1731
      %v1966 = vunpack.c.h.b16 %v1731
      %v1967 = vunpack.c.l.b16 %v1732
      %v1968 = vunpack.c.l.b16 %v1733
      %v1969 = vunpack.c.h.b16 %v1733
      %v1970 = vunpack.c.l.b16 %v1734
      %v1971 = vunpack.c.h.b16 %v1734
      %v1972 = vunpack.c.l.b16 %v1735
      %v1973 = vunpack.c.l.b16 %v1736
      %v1974 = vunpack.c.h.b16 %v1736
      %v1975 = vunpack.c.l.b16 %v1737
      %v1976 = vunpack.c.h.b16 %v1737
      %v1977 = vunpack.c.l.b16 %v1738
      %v1978 = vunpack.c.l.b16 %v1739
      %v1979 = vunpack.c.h.b16 %v1739
      %v1980 = vunpack.c.l.b16 %v1740
      %v1981 = vunpack.c.h.b16 %v1740
      %v1982 = vunpack.c.l.b16 %v1741
      %v1983 = vunpack.c.l.b16 %v1742
      %v1984 = vunpack.c.h.b16 %v1742
      %v1985 = vunpack.c.l.b16 %v1743
      %v1986 = vunpack.c.h.b16 %v1743
      %v1987 = vunpack.c.l.b16 %v1744
      %v1988 = vunpack.c.l.b16 %v1745
      %v1989 = vunpack.c.h.b16 %v1745
      %v1990 = vunpack.c.l.b16 %v1746
      %v1991 = vunpack.c.h.b16 %v1746
      %v1992 = vunpack.c.l.b16 %v1747
      %v1993 = vunpack.c.l.b16 %v1748
      %v1994 = vunpack.c.h.b16 %v1748
      %v1995 = vunpack.c.l.b16 %v1749
      %v1996 = vunpack.c.h.b16 %v1749
      %v1997 = vunpack.c.l.b16 %v1750
      %v1998 = vunpack.c.l.b16 %v1751
      %v1999 = vunpack.c.h.b16 %v1751
      %v2000 = vunpack.c.l.b16 %v1752
      %v2001 = vunpack.c.h.b16 %v1752
      %v2002 = vunpack.c.l.b16 %v1753
      %v2003 = vunpack.c.l.b16 %v1754
      %v2004 = vunpack.c.h.b16 %v1754
      %v2005 = vunpack.c.l.b16 %v1755
      %v2006 = vunpack.c.h.b16 %v1755
      %v2007 = vunpack.c.l.b16 %v1756
      %v2008 = vunpack.c.l.b16 %v1757
      %v2009 = vunpack.c.h.b16 %v1757
      %v2010 = vunpack.c.l.b16 %v1758
      %v2011 = vunpack.c.h.b16 %v1758
      %v2012 = vunpack.c.l.b16 %v1759
      %v2013 = vunpack.c.l.b16 %v1760
      %v2014 = vunpack.c.h.b16 %v1760
      %v2015 = vunpack.c.l.b16 %v1761
      %v2016 = vunpack.c.h.b16 %v1761
      %v2017 = vunpack.c.l.b16 %v1762
      %v2018 = vunpack.c.l.b16 %v1763
      %v2019 = vunpack.c.h.b16 %v1763
      %v2020 = vunpack.c.l.b16 %v1764
      %v2021 = vunpack.c.h.b16 %v1764
      %v2022 = vunpack.c.l.b16 %v1765
      %v2023 = vunpack.c.l.b16 %v1766
      %v2024 = vunpack.c.h.b16 %v1766
      %v2025 = vunpack.c.l.b16 %v1767
      %v2026 = vunpack.c.h.b16 %v1767
      %v2027 = vunpack.c.l.b16 %v1768
      %v2028 = vunpack.c.l.b16 %v1769
      %v2029 = vunpack.c.h.b16 %v1769
      %v2030 = vunpack.c.l.b16 %v1770
      %v2031 = vunpack.c.h.b16 %v1770
      %v2032 = vunpack.c.l.b16 %v1771
      %v2033 = vunpack.c.l.b16 %v1772
      %v2034 = vunpack.c.h.b16 %v1772
      %v2035 = vunpack.c.l.b16 %v1773
      %v2036 = vunpack.c.h.b16 %v1773
      %v2037 = vunpack.c.l.b16 %v1774
      %v2038 = vunpack.c.l.b16 %v1775
      %v2039 = vunpack.c.h.b16 %v1775
      %v2040 = vunpack.c.l.b16 %v1776
      %v2041 = vunpack.c.h.b16 %v1776
      %v2042 = vunpack.c.l.b16 %v1777
      %v2043 = vunpack.c.l.b16 %v1778
      %v2044 = vunpack.c.h.b16 %v1778
      %v2045 = vunpack.c.l.b16 %v1779
      %v2046 = vunpack.c.h.b16 %v1779
      %v2047 = vunpack.c.l.b16 %v1780
      %v2048 = vunpack.c.l.b16 %v1781
      %v2049 = vunpack.c.h.b16 %v1781
      %v2050 = vunpack.c.l.b16 %v1782
      %v2051 = vunpack.c.h.b16 %v1782
      %v2052 = vunpack.c.l.b16 %v1783
      %v2053 = vunpack.c.l.b16 %v1784
      %v2054 = vunpack.c.h.b16 %v1784
      %v2055 = vunpack.c.l.b16 %v1785
      %v2056 = vunpack.c.h.b16 %v1785
      %v2057 = vunpack.c.l.b16 %v1786
      %v2058 = vunpack.c.l.b16 %v1787
      %v2059 = vunpack.c.h.b16 %v1787
      %v2060 = vunpack.c.l.b16 %v1788
      %v2061 = vunpack.c.h.b16 %v1788
      %v2062 = vunpack.c.l.b16 %v1789
      %v2063 = vunpack.c.l.b16 %v1790
      %v2064 = vunpack.c.h.b16 %v1790
      %v2065 = vunpack.c.l.b16 %v1791
      %v2066 = vunpack.c.h.b16 %v1791
      %v2067 = vunpack.c.l.b16 %v1792
      %v2068 = vunpack.c.l.b16 %v1793
      %v2069 = vunpack.c.h.b16 %v1793
      %v2070 = vunpack.c.l.b16 %v1794
      %v2071 = vunpack.c.h.b16 %v1794
      %v2072 = vunpack.c.l.b16 %v1795
      %v2073 = vunpack.c.l.b16 %v1796
      %v2074 = vunpack.c.h.b16 %v1796
      %v2075 = vunpack.c.l.b16 %v1797
      %v2076 = vunpack.c.h.b16 %v1797
      %v2077 = vunpack.c.l.b16 %v1798
      %v2078 = vunpack.c.l.b16 %v1799
      %v2079 = vunpack.c.h.b16 %v1799
      %v2080 = vunpack.c.l.b16 %v1800
      %v2081 = vunpack.c.h.b16 %v1800
      %v2082 = vunpack.c.l.b16 %v1801
      %v2083 = vunpack.c.l.b16 %v1802
      %v2084 = vunpack.c.h.b16 %v1802
      %v2085 = vunpack.c.l.b16 %v1803
      %v2086 = vunpack.c.h.b16 %v1803
      %v2087 = vunpack.c.l.b16 %v1804
      %v2088 = vpack.c.b16 %v1968, %v1963
      %v2089 = vpack.c.b16 %v1969, %v1964
      %v2090 = vpack.c.b16 %v1970, %v1965
      %v2091 = vpack.c.b16 %v1971, %v1966
      %v2092 = vpack.c.b16 %v1972, %v1967
      %v2093 = vpack.c.b16 %v1978, %v1973
      %v2094 = vpack.c.b16 %v1979, %v1974
      %v2095 = vpack.c.b16 %v1980, %v1975
      %v2096 = vpack.c.b16 %v1981, %v1976
      %v2097 = vpack.c.b16 %v1982, %v1977
      %v2098 = vpack.c.b16 %v1988, %v1983
      %v2099 = vpack.c.b16 %v1989, %v1984
      %v2100 = vpack.c.b16 %v1990, %v1985
      %v2101 = vpack.c.b16 %v1991, %v1986
      %v2102 = vpack.c.b16 %v1992, %v1987
      %v2103 = vpack.c.b16 %v1998, %v1993
      %v2104 = vpack.c.b16 %v1999, %v1994
      %v2105 = vpack.c.b16 %v2000, %v1995
      %v2106 = vpack.c.b16 %v2001, %v1996
      %v2107 = vpack.c.b16 %v2002, %v1997
      %v2108 = vpack.c.b16 %v2008, %v2003
      %v2109 = vpack.c.b16 %v2009, %v2004
      %v2110 = vpack.c.b16 %v2010, %v2005
      %v2111 = vpack.c.b16 %v2011, %v2006
      %v2112 = vpack.c.b16 %v2012, %v2007
      %v2113 = vpack.c.b16 %v2018, %v2013
      %v2114 = vpack.c.b16 %v2019, %v2014
      %v2115 = vpack.c.b16 %v2020, %v2015
      %v2116 = vpack.c.b16 %v2021, %v2016
      %v2117 = vpack.c.b16 %v2022, %v2017
      %v2118 = vpack.c.b16 %v2028, %v2023
      %v2119 = vpack.c.b16 %v2029, %v2024
      %v2120 = vpack.c.b16 %v2030, %v2025
      %v2121 = vpack.c.b16 %v2031, %v2026
      %v2122 = vpack.c.b16 %v2032, %v2027
      %v2123 = vpack.c.b16 %v2038, %v2033
      %v2124 = vpack.c.b16 %v2039, %v2034
      %v2125 = vpack.c.b16 %v2040, %v2035
      %v2126 = vpack.c.b16 %v2041, %v2036
      %v2127 = vpack.c.b16 %v2042, %v2037
      %v2128 = vpack.c.b16 %v2048, %v2043
      %v2129 = vpack.c.b16 %v2049, %v2044
      %v2130 = vpack.c.b16 %v2050, %v2045
      %v2131 = vpack.c.b16 %v2051, %v2046
      %v2132 = vpack.c.b16 %v2052, %v2047
      %v2133 = vpack.c.b16 %v2058, %v2053
      %v2134 = vpack.c.b16 %v2059, %v2054
      %v2135 = vpack.c.b16 %v2060, %v2055
      %v2136 = vpack.c.b16 %v2061, %v2056
      %v2137 = vpack.c.b16 %v2062, %v2057
      %v2138 = vpack.c.b16 %v2068, %v2063
      %v2139 = vpack.c.b16 %v2069, %v2064
      %v2140 = vpack.c.b16 %v2070, %v2065
      %v2141 = vpack.c.b16 %v2071, %v2066
      %v2142 = vpack.c.b16 %v2072, %v2067
      %v2143 = vpack.c.b16 %v2078, %v2073
      %v2144 = vpack.c.b16 %v2079, %v2074
      %v2145 = vpack.c.b16 %v2080, %v2075
      %v2146 = vpack.c.b16 %v2081, %v2076
      %v2147 = vpack.c.b16 %v2082, %v2077
      %v2148 = vpack.c.b16 %v2083, %v2083
      %v2149 = vpack.c.b16 %v2084, %v2084
      %v2150 = vpack.c.b16 %v2085, %v2085
      %v2151 = vpack.c.b16 %v2086, %v2086
      %v2152 = vpack.c.b16 %v2087, %v2087
      %v2277 = vunpack.c.l.b16 %v1808
      %v2278 = vunpack.c.l.b16 %v1809
      %v2279 = vunpack.c.l.b16 %v1810
      %v2280 = vunpack.c.l.b16 %v1811
      %v2281 = vunpack.c.l.b16 %v1812
      %v2282 = vunpack.c.l.b16 %v1813
      %v2283 = vunpack.c.l.b16 %v1814
      %v2284 = vunpack.c.l.b16 %v1815
      %v2285 = vunpack.c.l.b16 %v1816
      %v2286 = vunpack.c.l.b16 %v1817
      %v2287 = vunpack.c.l.b16 %v1818
      %v2288 = vunpack.c.l.b16 %v1819
      %v2289 = vunpack.c.l.b16 %v1820
      %v2290 = vunpack.c.l.b16 %v1821
      %v2291 = vunpack.c.l.b16 %v1822
      %v2292 = vunpack.c.l.b16 %v1823
      %v2293 = vunpack.c.l.b16 %v1824
      %v2294 = vunpack.c.l.b16 %v1825
      %v2295 = vunpack.c.l.b16 %v1826
      %v2296 = vunpack.c.l.b16 %v1827
      %v2297 = vunpack.c.l.b16 %v1828
      %v2298 = vunpack.c.l.b16 %v1829
      %v2299 = vunpack.c.l.b16 %v1830
      %v2300 = vunpack.c.l.b16 %v1831
      %v2301 = vunpack.c.l.b16 %v1832
      %v2302 = vunpack.c.l.b16 %v1833
      %v2303 = vunpack.c.l.b16 %v1834
      %v2304 = vunpack.c.l.b16 %v1835
      %v2305 = vunpack.c.l.b16 %v1836
      %v2306 = vunpack.c.l.b16 %v1837
      %v2307 = vunpack.c.l.b16 %v1838
      %v2308 = vunpack.c.l.b16 %v1839
      %v2309 = vunpack.c.l.b16 %v1840
      %v2310 = vunpack.c.l.b16 %v1841
      %v2311 = vunpack.c.l.b16 %v1842
      %v2312 = vunpack.c.l.b16 %v1843
      %v2313 = vunpack.c.l.b16 %v1844
      %v2314 = vunpack.c.l.b16 %v1845
      %v2315 = vunpack.c.l.b16 %v1846
      %v2316 = vunpack.c.l.b16 %v1847
      %v2317 = vunpack.c.l.b16 %v1848
      %v2318 = vunpack.c.l.b16 %v1849
      %v2319 = vunpack.c.l.b16 %v1850
      %v2320 = vunpack.c.l.b16 %v1851
      %v2321 = vunpack.c.l.b16 %v1852
      %v2322 = vunpack.c.l.b16 %v1853
      %v2323 = vunpack.c.l.b16 %v1854
      %v2324 = vunpack.c.l.b16 %v1855
      %v2325 = vunpack.c.l.b16 %v1856
      %v2326 = vunpack.c.l.b16 %v1857
      %v2327 = vunpack.c.l.b16 %v1858
      %v2328 = vunpack.c.l.b16 %v1859
      %v2329 = vunpack.c.l.b16 %v1860
      %v2330 = vunpack.c.l.b16 %v1861
      %v2331 = vunpack.c.l.b16 %v1862
      %v2332 = vunpack.c.l.b16 %v1863
      %v2333 = vunpack.c.l.b16 %v1864
      %v2334 = vunpack.c.l.b16 %v1865
      %v2335 = vunpack.c.l.b16 %v1866
      %v2336 = vunpack.c.l.b16 %v1867
      %v2337 = vunpack.c.l.b16 %v1868
      %v2338 = vunpack.c.l.b16 %v1869
      %v2339 = vunpack.c.l.b16 %v1870
      %v2340 = vunpack.c.l.b16 %v1871
      %v2341 = vunpack.c.l.b16 %v1872
      %v2342 = vunpack.c.l.b16 %v1873
      %v2343 = vunpack.c.l.b16 %v1874
      %v2344 = vunpack.c.l.b16 %v1875
      %v2345 = vunpack.c.l.b16 %v1876
      %v2346 = vunpack.c.l.b16 %v1877
      %v2347 = vunpack.c.l.b16 %v1878
      %v2348 = vunpack.c.l.b16 %v1879
      %v2349 = vpack.c.b16 %v2278, %v2277
      %v2350 = vpack.c.b16 %v2280, %v2279
      %v2351 = vpack.c.b16 %v2282, %v2281
      %v2352 = vpack.c.b16 %v2284, %v2283
      %v2353 = vpack.c.b16 %v2286, %v2285
      %v2354 = vpack.c.b16 %v2288, %v2287
      %v2355 = vpack.c.b16 %v2290, %v2289
      %v2356 = vpack.c.b16 %v2292, %v2291
      %v2357 = vpack.c.b16 %v2294, %v2293
      %v2358 = vpack.c.b16 %v2296, %v2295
      %v2359 = vpack.c.b16 %v2298, %v2297
      %v2360 = vpack.c.b16 %v2300, %v2299
      %v2361 = vpack.c.b16 %v2302, %v2301
      %v2362 = vpack.c.b16 %v2304, %v2303
      %v2363 = vpack.c.b16 %v2306, %v2305
      %v2364 = vpack.c.b16 %v2308, %v2307
      %v2365 = vpack.c.b16 %v2310, %v2309
      %v2366 = vpack.c.b16 %v2312, %v2311
      %v2367 = vpack.c.b16 %v2314, %v2313
      %v2368 = vpack.c.b16 %v2316, %v2315
      %v2369 = vpack.c.b16 %v2318, %v2317
      %v2370 = vpack.c.b16 %v2320, %v2319
      %v2371 = vpack.c.b16 %v2322, %v2321
      %v2372 = vpack.c.b16 %v2324, %v2323
      %v2373 = vpack.c.b16 %v2326, %v2325
      %v2374 = vpack.c.b16 %v2328, %v2327
      %v2375 = vpack.c.b16 %v2330, %v2329
      %v2376 = vpack.c.b16 %v2332, %v2331
      %v2377 = vpack.c.b16 %v2334, %v2333
      %v2378 = vpack.c.b16 %v2336, %v2335
      %v2379 = vpack.c.b16 %v2338, %v2337
      %v2380 = vpack.c.b16 %v2340, %v2339
      %v2381 = vpack.c.b16 %v2342, %v2341
      %v2382 = vpack.c.b16 %v2344, %v2343
      %v2383 = vpack.c.b16 %v2346, %v2345
      %v2384 = vpack.c.b16 %v2348, %v2347
      %v2422 = vsel %vm28, %v2092, 0
      %v2425 = vsel %vm28, %v2097, 0
      %v2428 = vsel %vm28, %v2102, 0
      %v2431 = vsel %vm28, %v2107, 0
      %v2434 = vsel %vm28, %v2112, 0
      %v2437 = vsel %vm28, %v2117, 0
      %v2440 = vsel %vm28, %v2122, 0
      %v2443 = vsel %vm28, %v2127, 0
      %v2446 = vsel %vm28, %v2132, 0
      %v2449 = vsel %vm28, %v2137, 0
      %v2452 = vsel %vm28, %v2142, 0
      %v2455 = vsel %vm28, %v2147, 0
      %v2458 = vsel %vm28, %v2152, 0
      %2460 = vmatprep.subr.bf16.mxu0 0
      %2461 = vmatpush1.bf16.msra.mxu0 %v2356
      %2462 = vmatprep.subr.bf16.mxu0 0
      %2463 = vmatpush1.bf16.msra.mxu0 %v2355
      %2464 = vmatprep.subr.bf16.mxu0 0
      %2465 = vmatpush1.bf16.msra.mxu0 %v2354
      %2466 = vmatprep.subr.bf16.mxu0 0
      %2467 = vmatpush1.bf16.msra.mxu0 %v2353
      %2468 = vmatprep.subr.bf16.mxu0 0
      %2469 = vmatpush1.bf16.msra.mxu0 %v2352
      %2470 = vmatprep.subr.bf16.mxu0 0
      %2471 = vmatpush1.bf16.msra.mxu0 %v2351
      %2472 = vmatprep.subr.bf16.mxu0 0
      %2473 = vmatpush1.bf16.msra.mxu0 %v2350
      %2474 = vmatprep.subr.bf16.mxu0 0
      %2475 = vmatpush1.bf16.msra.mxu0 %v2349
      %2476 = vmatprep.subr.bf16.mxu0 0
      %2477 = vmatpush2.bf16.msra.mxu0 %v2364
      %2478 = vmatprep.subr.bf16.mxu0 0
      %2479 = vmatpush2.bf16.msra.mxu0 %v2363
      %2480 = vmatprep.subr.bf16.mxu0 0
      %2481 = vmatpush2.bf16.msra.mxu0 %v2362
      %2482 = vmatprep.subr.bf16.mxu0 0
      %2483 = vmatpush2.bf16.msra.mxu0 %v2361
      %2484 = vmatprep.subr.bf16.mxu0 0
      %2485 = vmatpush2.bf16.msra.mxu0 %v2360
      %2486 = vmatprep.subr.bf16.mxu0 0
      %2487 = vmatpush2.bf16.msra.mxu0 %v2359
      %2488 = vmatprep.subr.bf16.mxu0 0
      %2489 = vmatpush2.bf16.msra.mxu0 %v2358
      %2490 = vmatprep.subr.bf16.mxu0 0
      %2491 = vmatpush2.bf16.msra.mxu0 %v2357
      %2492 = vmatprep.mubr.bf16.mxu0 %v2089
      %2493 = vmatmul.mubr.bf16.gmra.mxu0 %v2088
      %v2494 = vpop.f32.mrf.mxu0
      %v2495 = vadd.f32 %v1886, %v2494
      %v2496 = vpop.f32.mrf.mxu0
      %v2497 = vpop.f32.mrf.mxu0
      %v2498 = vadd.f32 %v1886, %v2497
      %v2499 = vpop.f32.mrf.mxu0
      %2500 = vmatprep.mubr.bf16.mxu0 %v2094
      %2501 = vmatmul.mubr.bf16.gmra.mxu0 %v2093
      %v2502 = vpop.f32.mrf.mxu0
      %v2503 = vadd.f32 %v1886, %v2502
      %v2504 = vpop.f32.mrf.mxu0
      %v2505 = vpop.f32.mrf.mxu0
      %v2506 = vadd.f32 %v1886, %v2505
      %v2507 = vpop.f32.mrf.mxu0
      %2508 = vmatprep.mubr.bf16.mxu0 %v2099
      %2509 = vmatmul.mubr.bf16.gmra.mxu0 %v2098
      %v2510 = vpop.f32.mrf.mxu0
      %v2511 = vadd.f32 %v1886, %v2510
      %v2512 = vpop.f32.mrf.mxu0
      %v2513 = vpop.f32.mrf.mxu0
      %v2514 = vadd.f32 %v1886, %v2513
      %v2515 = vpop.f32.mrf.mxu0
      %2516 = vmatprep.mubr.bf16.mxu0 %v2104
      %2517 = vmatmul.mubr.bf16.gmra.mxu0 %v2103
      %v2518 = vpop.f32.mrf.mxu0
      %v2519 = vadd.f32 %v1886, %v2518
      %v2520 = vpop.f32.mrf.mxu0
      %v2521 = vpop.f32.mrf.mxu0
      %v2522 = vadd.f32 %v1886, %v2521
      %v2523 = vpop.f32.mrf.mxu0
      %2524 = vmatprep.mubr.bf16.mxu0 %v2109
      %2525 = vmatmul.mubr.bf16.gmra.mxu0 %v2108
      %v2526 = vpop.f32.mrf.mxu0
      %v2527 = vadd.f32 %v1886, %v2526
      %v2528 = vpop.f32.mrf.mxu0
      %v2529 = vpop.f32.mrf.mxu0
      %v2530 = vadd.f32 %v1886, %v2529
      %v2531 = vpop.f32.mrf.mxu0
      %2532 = vmatprep.mubr.bf16.mxu0 %v2114
      %2533 = vmatmul.mubr.bf16.gmra.mxu0 %v2113
      %v2534 = vpop.f32.mrf.mxu0
      %v2535 = vadd.f32 %v1886, %v2534
      %v2536 = vpop.f32.mrf.mxu0
      %v2537 = vpop.f32.mrf.mxu0
      %v2538 = vadd.f32 %v1886, %v2537
      %v2539 = vpop.f32.mrf.mxu0
      %2540 = vmatprep.mubr.bf16.mxu0 %v2119
      %2541 = vmatmul.mubr.bf16.gmra.mxu0 %v2118
      %v2542 = vpop.f32.mrf.mxu0
      %v2543 = vadd.f32 %v1886, %v2542
      %v2544 = vpop.f32.mrf.mxu0
      %v2545 = vpop.f32.mrf.mxu0
      %v2546 = vadd.f32 %v1886, %v2545
      %v2547 = vpop.f32.mrf.mxu0
      %2548 = vmatprep.mubr.bf16.mxu0 %v2124
      %2549 = vmatmul.mubr.bf16.gmra.mxu0 %v2123
      %v2550 = vpop.f32.mrf.mxu0
      %v2551 = vadd.f32 %v1886, %v2550
      %v2552 = vpop.f32.mrf.mxu0
      %v2553 = vpop.f32.mrf.mxu0
      %v2554 = vadd.f32 %v1886, %v2553
      %v2555 = vpop.f32.mrf.mxu0
      %2556 = vmatprep.mubr.bf16.mxu0 %v2129
      %2557 = vmatmul.mubr.bf16.gmra.mxu0 %v2128
      %v2558 = vpop.f32.mrf.mxu0
      %v2559 = vadd.f32 %v1886, %v2558
      %v2560 = vpop.f32.mrf.mxu0
      %v2561 = vpop.f32.mrf.mxu0
      %v2562 = vadd.f32 %v1886, %v2561
      %v2563 = vpop.f32.mrf.mxu0
      %2564 = vmatprep.mubr.bf16.mxu0 %v2134
      %2565 = vmatmul.mubr.bf16.gmra.mxu0 %v2133
      %v2566 = vpop.f32.mrf.mxu0
      %v2567 = vadd.f32 %v1886, %v2566
      %v2568 = vpop.f32.mrf.mxu0
      %v2569 = vpop.f32.mrf.mxu0
      %v2570 = vadd.f32 %v1886, %v2569
      %v2571 = vpop.f32.mrf.mxu0
      %2572 = vmatprep.mubr.bf16.mxu0 %v2139
      %2573 = vmatmul.mubr.bf16.gmra.mxu0 %v2138
      %v2574 = vpop.f32.mrf.mxu0
      %v2575 = vadd.f32 %v1886, %v2574
      %v2576 = vpop.f32.mrf.mxu0
      %v2577 = vpop.f32.mrf.mxu0
      %v2578 = vadd.f32 %v1886, %v2577
      %v2579 = vpop.f32.mrf.mxu0
      %2580 = vmatprep.mubr.bf16.mxu0 %v2144
      %2581 = vmatmul.mubr.bf16.gmra.mxu0 %v2143
      %v2582 = vpop.f32.mrf.mxu0
      %v2583 = vadd.f32 %v1886, %v2582
      %v2584 = vpop.f32.mrf.mxu0
      %v2585 = vpop.f32.mrf.mxu0
      %v2586 = vadd.f32 %v1886, %v2585
      %v2587 = vpop.f32.mrf.mxu0
      %2588 = vmatprep.mubr.bf16.mxu0 %v2149
      %2589 = vmatmul.mubr.bf16.gmra.mxu0 %v2148
      %v2590 = vpop.f32.mrf.mxu0
      %v2591 = vadd.f32 %v1886, %v2590
      %v2592 = vpop.f32.mrf.mxu0
      %v2593 = vpop.f32.mrf.mxu0
      %v2594 = vpop.f32.mrf.mxu0
      %2595 = vdwg.mxu0
      %2596 = vmatprep.subr.bf16.mxu0 0
      %2597 = vmatpush1.bf16.msra.mxu0 %v2372
      %2598 = vmatprep.subr.bf16.mxu0 0
      %2599 = vmatpush1.bf16.msra.mxu0 %v2371
      %2600 = vmatprep.subr.bf16.mxu0 0
      %2601 = vmatpush1.bf16.msra.mxu0 %v2370
      %2602 = vmatprep.subr.bf16.mxu0 0
      %2603 = vmatpush1.bf16.msra.mxu0 %v2369
      %2604 = vmatprep.subr.bf16.mxu0 0
      %2605 = vmatpush1.bf16.msra.mxu0 %v2368
      %2606 = vmatprep.subr.bf16.mxu0 0
      %2607 = vmatpush1.bf16.msra.mxu0 %v2367
      %2608 = vmatprep.subr.bf16.mxu0 0
      %2609 = vmatpush1.bf16.msra.mxu0 %v2366
      %2610 = vmatprep.subr.bf16.mxu0 0
      %2611 = vmatpush1.bf16.msra.mxu0 %v2365
      %2612 = vmatprep.subr.bf16.mxu0 0
      %2613 = vmatpush2.bf16.msra.mxu0 %v2380
      %2614 = vmatprep.subr.bf16.mxu0 0
      %2615 = vmatpush2.bf16.msra.mxu0 %v2379
      %2616 = vmatprep.subr.bf16.mxu0 0
      %2617 = vmatpush2.bf16.msra.mxu0 %v2378
      %2618 = vmatprep.subr.bf16.mxu0 0
      %2619 = vmatpush2.bf16.msra.mxu0 %v2377
      %2620 = vmatprep.subr.bf16.mxu0 0
      %2621 = vmatpush2.bf16.msra.mxu0 %v2376
      %2622 = vmatprep.subr.bf16.mxu0 0
      %2623 = vmatpush2.bf16.msra.mxu0 %v2375
      %2624 = vmatprep.subr.bf16.mxu0 0
      %2625 = vmatpush2.bf16.msra.mxu0 %v2374
      %2626 = vmatprep.subr.bf16.mxu0 0
      %2627 = vmatpush2.bf16.msra.mxu0 %v2373
      %2628 = vmatprep.mubr.bf16.mxu0 %v2091
      %2629 = vmatmul.mubr.bf16.gmra.mxu0 %v2090
      %v2630 = vpop.f32.mrf.mxu0
      %v2631 = vadd.f32 %v2495, %v2630
      %v2632 = vpop.f32.mrf.mxu0
      %v2633 = vpop.f32.mrf.mxu0
      %v2634 = vadd.f32 %v2498, %v2633
      %v2635 = vpop.f32.mrf.mxu0
      %2636 = vmatprep.mubr.bf16.mxu0 %v2096
      %2637 = vmatmul.mubr.bf16.gmra.mxu0 %v2095
      %v2638 = vpop.f32.mrf.mxu0
      %v2639 = vadd.f32 %v2503, %v2638
      %v2640 = vpop.f32.mrf.mxu0
      %v2641 = vpop.f32.mrf.mxu0
      %v2642 = vadd.f32 %v2506, %v2641
      %v2643 = vpop.f32.mrf.mxu0
      %2644 = vmatprep.mubr.bf16.mxu0 %v2101
      %2645 = vmatmul.mubr.bf16.gmra.mxu0 %v2100
      %v2646 = vpop.f32.mrf.mxu0
      %v2647 = vadd.f32 %v2511, %v2646
      %v2648 = vpop.f32.mrf.mxu0
      %v2649 = vpop.f32.mrf.mxu0
      %v2650 = vadd.f32 %v2514, %v2649
      %v2651 = vpop.f32.mrf.mxu0
      %2652 = vmatprep.mubr.bf16.mxu0 %v2106
      %2653 = vmatmul.mubr.bf16.gmra.mxu0 %v2105
      %v2654 = vpop.f32.mrf.mxu0
      %v2655 = vadd.f32 %v2519, %v2654
      %v2656 = vpop.f32.mrf.mxu0
      %v2657 = vpop.f32.mrf.mxu0
      %v2658 = vadd.f32 %v2522, %v2657
      %v2659 = vpop.f32.mrf.mxu0
      %2660 = vmatprep.mubr.bf16.mxu0 %v2111
      %2661 = vmatmul.mubr.bf16.gmra.mxu0 %v2110
      %v2662 = vpop.f32.mrf.mxu0
      %v2663 = vadd.f32 %v2527, %v2662
      %v2664 = vpop.f32.mrf.mxu0
      %v2665 = vpop.f32.mrf.mxu0
      %v2666 = vadd.f32 %v2530, %v2665
      %v2667 = vpop.f32.mrf.mxu0
      %2668 = vmatprep.mubr.bf16.mxu0 %v2116
      %2669 = vmatmul.mubr.bf16.gmra.mxu0 %v2115
      %v2670 = vpop.f32.mrf.mxu0
      %v2671 = vadd.f32 %v2535, %v2670
      %v2672 = vpop.f32.mrf.mxu0
      %v2673 = vpop.f32.mrf.mxu0
      %v2674 = vadd.f32 %v2538, %v2673
      %v2675 = vpop.f32.mrf.mxu0
      %2676 = vmatprep.mubr.bf16.mxu0 %v2121
      %2677 = vmatmul.mubr.bf16.gmra.mxu0 %v2120
      %v2678 = vpop.f32.mrf.mxu0
      %v2679 = vadd.f32 %v2543, %v2678
      %v2680 = vpop.f32.mrf.mxu0
      %v2681 = vpop.f32.mrf.mxu0
      %v2682 = vadd.f32 %v2546, %v2681
      %v2683 = vpop.f32.mrf.mxu0
      %2684 = vmatprep.mubr.bf16.mxu0 %v2126
      %2685 = vmatmul.mubr.bf16.gmra.mxu0 %v2125
      %v2686 = vpop.f32.mrf.mxu0
      %v2687 = vadd.f32 %v2551, %v2686
      %v2688 = vpop.f32.mrf.mxu0
      %v2689 = vpop.f32.mrf.mxu0
      %v2690 = vadd.f32 %v2554, %v2689
      %v2691 = vpop.f32.mrf.mxu0
      %2692 = vmatprep.mubr.bf16.mxu0 %v2131
      %2693 = vmatmul.mubr.bf16.gmra.mxu0 %v2130
      %v2694 = vpop.f32.mrf.mxu0
      %v2695 = vadd.f32 %v2559, %v2694
      %v2696 = vpop.f32.mrf.mxu0
      %v2697 = vpop.f32.mrf.mxu0
      %v2698 = vadd.f32 %v2562, %v2697
      %v2699 = vpop.f32.mrf.mxu0
      %2700 = vmatprep.mubr.bf16.mxu0 %v2136
      %2701 = vmatmul.mubr.bf16.gmra.mxu0 %v2135
      %v2702 = vpop.f32.mrf.mxu0
      %v2703 = vadd.f32 %v2567, %v2702
      %v2704 = vpop.f32.mrf.mxu0
      %v2705 = vpop.f32.mrf.mxu0
      %v2706 = vadd.f32 %v2570, %v2705
      %v2707 = vpop.f32.mrf.mxu0
      %2708 = vmatprep.mubr.bf16.mxu0 %v2141
      %2709 = vmatmul.mubr.bf16.gmra.mxu0 %v2140
      %v2710 = vpop.f32.mrf.mxu0
      %v2711 = vadd.f32 %v2575, %v2710
      %v2712 = vpop.f32.mrf.mxu0
      %v2713 = vpop.f32.mrf.mxu0
      %v2714 = vadd.f32 %v2578, %v2713
      %v2715 = vpop.f32.mrf.mxu0
      %2716 = vmatprep.mubr.bf16.mxu0 %v2146
      %2717 = vmatmul.mubr.bf16.gmra.mxu0 %v2145
      %v2718 = vpop.f32.mrf.mxu0
      %v2719 = vadd.f32 %v2583, %v2718
      %v2720 = vpop.f32.mrf.mxu0
      %v2721 = vpop.f32.mrf.mxu0
      %v2722 = vadd.f32 %v2586, %v2721
      %v2723 = vpop.f32.mrf.mxu0
      %2724 = vmatprep.mubr.bf16.mxu0 %v2151
      %2725 = vmatmul.mubr.bf16.gmra.mxu0 %v2150
      %v2726 = vpop.f32.mrf.mxu0
      %v2727 = vadd.f32 %v2591, %v2726
      %v2728 = vpop.f32.mrf.mxu0
      %v2729 = vpop.f32.mrf.mxu0
      %v2730 = vpop.f32.mrf.mxu0
      %2731 = vdwg.mxu0
      %2732 = vmatprep.subr.bf16.mxu0 0
      %2733 = vmatpush1.bf16.msra.mxu0 0
      %2734 = vmatprep.subr.bf16.mxu0 0
      %2735 = vmatpush1.bf16.msra.mxu0 0
      %2736 = vmatprep.subr.bf16.mxu0 0
      %2737 = vmatpush1.bf16.msra.mxu0 0
      %2738 = vmatprep.subr.bf16.mxu0 0
      %2739 = vmatpush1.bf16.msra.mxu0 0
      %2740 = vmatprep.subr.bf16.mxu0 0
      %2741 = vmatpush1.bf16.msra.mxu0 %v2384
      %2742 = vmatprep.subr.bf16.mxu0 0
      %2743 = vmatpush1.bf16.msra.mxu0 %v2383
      %2744 = vmatprep.subr.bf16.mxu0 0
      %2745 = vmatpush1.bf16.msra.mxu0 %v2382
      %2746 = vmatprep.subr.bf16.mxu0 0
      %2747 = vmatpush1.bf16.msra.mxu0 %v2381
      %2748 = vmatprep.subr.bf16.mxu0 0
      %2749 = vmatpush2.bf16.msra.mxu0 0
      %2750 = vmatprep.subr.bf16.mxu0 0
      %2751 = vmatpush2.bf16.msra.mxu0 0
      %2752 = vmatprep.subr.bf16.mxu0 0
      %2753 = vmatpush2.bf16.msra.mxu0 0
      %2754 = vmatprep.subr.bf16.mxu0 0
      %2755 = vmatpush2.bf16.msra.mxu0 0
      %2756 = vmatprep.subr.bf16.mxu0 0
      %2757 = vmatpush2.bf16.msra.mxu0 0
      %2758 = vmatprep.subr.bf16.mxu0 0
      %2759 = vmatpush2.bf16.msra.mxu0 0
      %2760 = vmatprep.subr.bf16.mxu0 0
      %2761 = vmatpush2.bf16.msra.mxu0 0
      %2762 = vmatprep.subr.bf16.mxu0 0
      %2763 = vmatpush2.bf16.msra.mxu0 0
      %2764 = vmatprep.mubr.bf16.mxu0 0
      %2765 = vmatmul.mubr.bf16.gmra.mxu0 %v2422
      %v2766 = vpop.f32.mrf.mxu0
      %v2767 = vadd.f32 %v2631, %v2766
      %v2768 = vpop.f32.mrf.mxu0
      %v2769 = vpop.f32.mrf.mxu0
      %v2770 = vadd.f32 %v2634, %v2769
      %v2771 = vpop.f32.mrf.mxu0
      %2772 = vmatprep.mubr.bf16.mxu0 0
      %2773 = vmatmul.mubr.bf16.gmra.mxu0 %v2425
      %v2774 = vpop.f32.mrf.mxu0
      %v2775 = vadd.f32 %v2639, %v2774
      %v2776 = vpop.f32.mrf.mxu0
      %v2777 = vpop.f32.mrf.mxu0
      %v2778 = vadd.f32 %v2642, %v2777
      %v2779 = vpop.f32.mrf.mxu0
      %2780 = vmatprep.mubr.bf16.mxu0 0
      %2781 = vmatmul.mubr.bf16.gmra.mxu0 %v2428
      %v2782 = vpop.f32.mrf.mxu0
      %v2783 = vadd.f32 %v2647, %v2782
      %v2784 = vpop.f32.mrf.mxu0
      %v2785 = vpop.f32.mrf.mxu0
      %v2786 = vadd.f32 %v2650, %v2785
      %v2787 = vpop.f32.mrf.mxu0
      %2788 = vmatprep.mubr.bf16.mxu0 0
      %2789 = vmatmul.mubr.bf16.gmra.mxu0 %v2431
      %v2790 = vpop.f32.mrf.mxu0
      %v2791 = vadd.f32 %v2655, %v2790
      %v2792 = vpop.f32.mrf.mxu0
      %v2793 = vpop.f32.mrf.mxu0
      %v2794 = vadd.f32 %v2658, %v2793
      %v2795 = vpop.f32.mrf.mxu0
      %2796 = vmatprep.mubr.bf16.mxu0 0
      %2797 = vmatmul.mubr.bf16.gmra.mxu0 %v2434
      %v2798 = vpop.f32.mrf.mxu0
      %v2799 = vadd.f32 %v2663, %v2798
      %v2800 = vpop.f32.mrf.mxu0
      %v2801 = vpop.f32.mrf.mxu0
      %v2802 = vadd.f32 %v2666, %v2801
      %v2803 = vpop.f32.mrf.mxu0
      %2804 = vmatprep.mubr.bf16.mxu0 0
      %2805 = vmatmul.mubr.bf16.gmra.mxu0 %v2437
      %v2806 = vpop.f32.mrf.mxu0
      %v2807 = vadd.f32 %v2671, %v2806
      %v2808 = vpop.f32.mrf.mxu0
      %v2809 = vpop.f32.mrf.mxu0
      %v2810 = vadd.f32 %v2674, %v2809
      %v2811 = vpop.f32.mrf.mxu0
      %2812 = vmatprep.mubr.bf16.mxu0 0
      %2813 = vmatmul.mubr.bf16.gmra.mxu0 %v2440
      %v2814 = vpop.f32.mrf.mxu0
      %v2815 = vadd.f32 %v2679, %v2814
      %v2816 = vpop.f32.mrf.mxu0
      %v2817 = vpop.f32.mrf.mxu0
      %v2818 = vadd.f32 %v2682, %v2817
      %v2819 = vpop.f32.mrf.mxu0
      %2820 = vmatprep.mubr.bf16.mxu0 0
      %2821 = vmatmul.mubr.bf16.gmra.mxu0 %v2443
      %v2822 = vpop.f32.mrf.mxu0
      %v2823 = vadd.f32 %v2687, %v2822
      %v2824 = vpop.f32.mrf.mxu0
      %v2825 = vpop.f32.mrf.mxu0
      %v2826 = vadd.f32 %v2690, %v2825
      %v2827 = vpop.f32.mrf.mxu0
      %2828 = vmatprep.mubr.bf16.mxu0 0
      %2829 = vmatmul.mubr.bf16.gmra.mxu0 %v2446
      %v2830 = vpop.f32.mrf.mxu0
      %v2831 = vadd.f32 %v2695, %v2830
      %v2832 = vpop.f32.mrf.mxu0
      %v2833 = vpop.f32.mrf.mxu0
      %v2834 = vadd.f32 %v2698, %v2833
      %v2835 = vpop.f32.mrf.mxu0
      %2836 = vmatprep.mubr.bf16.mxu0 0
      %2837 = vmatmul.mubr.bf16.gmra.mxu0 %v2449
      %v2838 = vpop.f32.mrf.mxu0
      %v2839 = vadd.f32 %v2703, %v2838
      %v2840 = vpop.f32.mrf.mxu0
      %v2841 = vpop.f32.mrf.mxu0
      %v2842 = vadd.f32 %v2706, %v2841
      %v2843 = vpop.f32.mrf.mxu0
      %2844 = vmatprep.mubr.bf16.mxu0 0
      %2845 = vmatmul.mubr.bf16.gmra.mxu0 %v2452
      %v2846 = vpop.f32.mrf.mxu0
      %v2847 = vadd.f32 %v2711, %v2846
      %v2848 = vpop.f32.mrf.mxu0
      %v2849 = vpop.f32.mrf.mxu0
      %v2850 = vadd.f32 %v2714, %v2849
      %v2851 = vpop.f32.mrf.mxu0
      %2852 = vmatprep.mubr.bf16.mxu0 0
      %2853 = vmatmul.mubr.bf16.gmra.mxu0 %v2455
      %v2854 = vpop.f32.mrf.mxu0
      %v2855 = vadd.f32 %v2719, %v2854
      %v2856 = vpop.f32.mrf.mxu0
      %v2857 = vpop.f32.mrf.mxu0
      %v2858 = vadd.f32 %v2722, %v2857
      %v2859 = vpop.f32.mrf.mxu0
      %2860 = vmatprep.mubr.bf16.mxu0 0
      %2861 = vmatmul.mubr.bf16.gmra.mxu0 %v2458
      %v2862 = vpop.f32.mrf.mxu0
      %v2863 = vadd.f32 %v2727, %v2862
      %v2864 = vpop.f32.mrf.mxu0
      %v2865 = vpop.f32.mrf.mxu0
      %v2866 = vpop.f32.mrf.mxu0
      %2867 = vdwg.mxu0
      %v2868 = vmax.f32 %v2767, 0.0
      %v2869 = vmax.f32 %v2770, 0.0
      %v2870 = vmax.f32 %v2775, 0.0
      %v2871 = vmax.f32 %v2778, 0.0
      %v2872 = vmax.f32 %v2783, 0.0
      %v2873 = vmax.f32 %v2786, 0.0
      %v2874 = vmax.f32 %v2791, 0.0
      %v2875 = vmax.f32 %v2794, 0.0
      %v2876 = vmax.f32 %v2799, 0.0
      %v2877 = vmax.f32 %v2802, 0.0
      %v2878 = vmax.f32 %v2807, 0.0
      %v2879 = vmax.f32 %v2810, 0.0
      %v2880 = vmax.f32 %v2815, 0.0
      %v2881 = vmax.f32 %v2818, 0.0
      %v2882 = vmax.f32 %v2823, 0.0
      %v2883 = vmax.f32 %v2826, 0.0
      %v2884 = vmax.f32 %v2831, 0.0
      %v2885 = vmax.f32 %v2834, 0.0
      %v2886 = vmax.f32 %v2839, 0.0
      %v2887 = vmax.f32 %v2842, 0.0
      %v2888 = vmax.f32 %v2847, 0.0
      %v2889 = vmax.f32 %v2850, 0.0
      %v2890 = vmax.f32 %v2855, 0.0
      %v2891 = vmax.f32 %v2858, 0.0
      %v2892 = vmax.f32 %v2863, 0.0
      %v2893 = vmul.f32 %v2868, %v137
      %v2894 = vmul.f32 %v2869, %v138
      %v2895 = vmul.f32 %v2870, %v139
      %v2896 = vmul.f32 %v2871, %v140
      %v2897 = vmul.f32 %v2872, %v141
      %v2898 = vmul.f32 %v2873, %v142
      %v2899 = vmul.f32 %v2874, %v143
      %v2900 = vmul.f32 %v2875, %v144
      %v2901 = vmul.f32 %v2876, %v145
      %v2902 = vmul.f32 %v2877, %v146
      %v2903 = vmul.f32 %v2878, %v147
      %v2904 = vmul.f32 %v2879, %v148
      %v2905 = vmul.f32 %v2880, %v149
      %v2906 = vmul.f32 %v2881, %v150
      %v2907 = vmul.f32 %v2882, %v151
      %v2908 = vmul.f32 %v2883, %v152
      %v2909 = vmul.f32 %v2884, %v153
      %v2910 = vmul.f32 %v2885, %v154
      %v2911 = vmul.f32 %v2886, %v155
      %v2912 = vmul.f32 %v2887, %v156
      %v2913 = vmul.f32 %v2888, %v157
      %v2914 = vmul.f32 %v2889, %v158
      %v2915 = vmul.f32 %v2890, %v159
      %v2916 = vmul.f32 %v2891, %v160
      %v2917 = vmul.f32 %v2892, %v161
      %2918 = vst.msk [vmem:[#allocation3 + $0x10] sm:$0xff] %vm28, %v2893
      %2919 = vst.msk [vmem:[#allocation3 + $0x18] sm:$0xff] %vm28, %v2894
      %2920 = vst.msk [vmem:[#allocation3 + $0x20] sm:$0xff] %vm28, %v2895
      %2921 = vst.msk [vmem:[#allocation3 + $0x28] sm:$0xff] %vm28, %v2896
      %2922 = vst.msk [vmem:[#allocation3 + $0x30] sm:$0xff] %vm28, %v2897
      %2923 = vst.msk [vmem:[#allocation3 + $0x38] sm:$0xff] %vm28, %v2898
      %2924 = vst.msk [vmem:[#allocation3 + $0x40] sm:$0xff] %vm28, %v2899
      %2925 = vst.msk [vmem:[#allocation3 + $0x48] sm:$0xff] %vm28, %v2900
      %2926 = vst.msk [vmem:[#allocation3 + $0x50] sm:$0xff] %vm28, %v2901
      %2927 = vst.msk [vmem:[#allocation3 + $0x58] sm:$0xff] %vm28, %v2902
      %2928 = vst.msk [vmem:[#allocation3 + $0x60] sm:$0xff] %vm28, %v2903
      %2929 = vst.msk [vmem:[#allocation3 + $0x68] sm:$0xff] %vm28, %v2904
      %2930 = vst.msk [vmem:[#allocation3 + $0x70] sm:$0xff] %vm28, %v2905
      %2931 = vst.msk [vmem:[#allocation3 + $0x78] sm:$0xff] %vm28, %v2906
      %2932 = vst.msk [vmem:[#allocation3 + $0x80] sm:$0xff] %vm28, %v2907
      %2933 = vst.msk [vmem:[#allocation3 + $0x88] sm:$0xff] %vm28, %v2908
      %2934 = vst.msk [vmem:[#allocation3 + $0x90] sm:$0xff] %vm28, %v2909
      %2935 = vst.msk [vmem:[#allocation3 + $0x98] sm:$0xff] %vm28, %v2910
      %2936 = vst.msk [vmem:[#allocation3 + $0xa0] sm:$0xff] %vm28, %v2911
      %2937 = vst.msk [vmem:[#allocation3 + $0xa8] sm:$0xff] %vm28, %v2912
      %2938 = vst.msk [vmem:[#allocation3 + $0xb0] sm:$0xff] %vm28, %v2913
      %2939 = vst.msk [vmem:[#allocation3 + $0xb8] sm:$0xff] %vm28, %v2914
      %2940 = vst.msk [vmem:[#allocation3 + $0xc0] sm:$0xff] %vm28, %v2915
      %2941 = vst.msk [vmem:[#allocation3 + $0xc8] sm:$0xff] %vm28, %v2916
      %2942 = vst.msk [vmem:[#allocation3 + $0xd0] sm:$0xff] %vm28, %v2917
      %s2943 = sadd.s32 %s168, 1
      %v2944 = vld [vmem:[#allocation3 + $0x5] sm:$0xff]
      %v2945 = vld [vmem:[#allocation3 + $0xd] sm:$0xff]
      %v2946 = vld [vmem:[#allocation3 + $0x15] sm:$0xff]
      %v2947 = vld [vmem:[#allocation3 + $0x1d] sm:$0xff]
      %v2948 = vld [vmem:[#allocation3 + $0x25] sm:$0xff]
      %v2949 = vld [vmem:[#allocation3 + $0x2d] sm:$0xff]
      %v2950 = vld [vmem:[#allocation3 + $0x35] sm:$0xff]
      %v2951 = vld [vmem:[#allocation3 + $0x3d] sm:$0xff]
      %v2952 = vld [vmem:[#allocation3 + $0x45] sm:$0xff]
      %v2953 = vld [vmem:[#allocation3 + $0x4d] sm:$0xff]
      %v2954 = vld [vmem:[#allocation3 + $0x55] sm:$0xff]
      %v2955 = vld [vmem:[#allocation3 + $0x5d] sm:$0xff]
      %v2956 = vld [vmem:[#allocation3 + $0x65] sm:$0xff]
      %v2957 = vld [vmem:[#allocation3 + $0x6d] sm:$0xff]
      %v2958 = vld [vmem:[#allocation3 + $0x75] sm:$0xff]
      %v2959 = vld [vmem:[#allocation3 + $0x7d] sm:$0xff]
      %v2960 = vld [vmem:[#allocation3 + $0x85] sm:$0xff]
      %v2961 = vld [vmem:[#allocation3 + $0x8d] sm:$0xff]
      %v2962 = vld [vmem:[#allocation3 + $0x95] sm:$0xff]
      %v2963 = vld [vmem:[#allocation3 + $0x9d] sm:$0xff]
      %v2964 = vld [vmem:[#allocation3 + $0xa5] sm:$0xff]
      %v2965 = vld [vmem:[#allocation3 + $0xad] sm:$0xff]
      %v2966 = vld [vmem:[#allocation3 + $0xb5] sm:$0xff]
      %v2967 = vld [vmem:[#allocation3 + $0xbd] sm:$0xff]
      %v2968 = vld [vmem:[#allocation3 + $0xc5] sm:$0xff]
      %v2969 = vpack.c.bf16 %v2945, %v2944
      %v2970 = vpack.c.bf16 %v2947, %v2946
      %v2971 = vpack.c.bf16 %v2949, %v2948
      %v2972 = vpack.c.bf16 %v2951, %v2950
      %v2973 = vpack.c.bf16 %v2953, %v2952
      %v2974 = vpack.c.bf16 %v2955, %v2954
      %v2975 = vpack.c.bf16 %v2957, %v2956
      %v2976 = vpack.c.bf16 %v2959, %v2958
      %v2977 = vpack.c.bf16 %v2961, %v2960
      %v2978 = vpack.c.bf16 %v2963, %v2962
      %v2979 = vpack.c.bf16 %v2965, %v2964
      %v2980 = vpack.c.bf16 %v2967, %v2966
      %v2981 = vpack.c.bf16 %v2968, %v2968
      %v2995 = vunpack.c.l.b16 %v2969
      %v2996 = vunpack.c.h.b16 %v2969
      %v2997 = vunpack.c.l.b16 %v2970
      %v2998 = vunpack.c.h.b16 %v2970
      %v2999 = vunpack.c.l.b16 %v2971
      %v3000 = vunpack.c.h.b16 %v2971
      %v3001 = vunpack.c.l.b16 %v2972
      %v3002 = vunpack.c.h.b16 %v2972
      %v3003 = vunpack.c.l.b16 %v2973
      %v3004 = vunpack.c.h.b16 %v2973
      %v3005 = vunpack.c.l.b16 %v2974
      %v3006 = vunpack.c.h.b16 %v2974
      %v3007 = vunpack.c.l.b16 %v2975
      %v3008 = vunpack.c.h.b16 %v2975
      %v3009 = vunpack.c.l.b16 %v2976
      %v3010 = vunpack.c.h.b16 %v2976
      %v3011 = vunpack.c.l.b16 %v2977
      %v3012 = vunpack.c.h.b16 %v2977
      %v3013 = vunpack.c.l.b16 %v2978
      %v3014 = vunpack.c.h.b16 %v2978
      %v3015 = vunpack.c.l.b16 %v2979
      %v3016 = vunpack.c.h.b16 %v2979
      %v3017 = vunpack.c.l.b16 %v2980
      %v3018 = vunpack.c.h.b16 %v2980
      %v3019 = vunpack.c.l.b16 %v2981
      %v3020 = vpack.c.b16 %v2995, %v2995
      %v3021 = vpack.c.b16 %v2996, %v2996
      %v3022 = vpack.c.b16 %v2997, %v2997
      %v3023 = vpack.c.b16 %v2998, %v2998
      %v3024 = vpack.c.b16 %v2999, %v2999
      %v3025 = vpack.c.b16 %v3000, %v3000
      %v3026 = vpack.c.b16 %v3001, %v3001
      %v3027 = vpack.c.b16 %v3002, %v3002
      %v3028 = vpack.c.b16 %v3003, %v3003
      %v3029 = vpack.c.b16 %v3004, %v3004
      %v3030 = vpack.c.b16 %v3005, %v3005
      %v3031 = vpack.c.b16 %v3006, %v3006
      %v3032 = vpack.c.b16 %v3007, %v3007
      %v3033 = vpack.c.b16 %v3008, %v3008
      %v3034 = vpack.c.b16 %v3009, %v3009
      %v3035 = vpack.c.b16 %v3010, %v3010
      %v3036 = vpack.c.b16 %v3011, %v3011
      %v3037 = vpack.c.b16 %v3012, %v3012
      %v3038 = vpack.c.b16 %v3013, %v3013
      %v3039 = vpack.c.b16 %v3014, %v3014
      %v3040 = vpack.c.b16 %v3015, %v3015
      %v3041 = vpack.c.b16 %v3016, %v3016
      %v3042 = vpack.c.b16 %v3017, %v3017
      %v3043 = vpack.c.b16 %v3018, %v3018
      %v3044 = vpack.c.b16 %v3019, %v3019
      %3070 = vst.msk [vmem:[#allocation4] sm:$0xf] %vm295, %v3020
      %3071 = vst.msk [vmem:[#allocation4 + $0x14] sm:$0xf] %vm295, %v3021
      %3072 = vst.msk [vmem:[#allocation4 + $0x28] sm:$0xf] %vm295, %v3022
      %3073 = vst.msk [vmem:[#allocation4 + $0x3c] sm:$0xf] %vm295, %v3023
      %3074 = vst.msk [vmem:[#allocation4 + $0x50] sm:$0xf] %vm295, %v3024
      %3075 = vst.msk [vmem:[#allocation4 + $0x64] sm:$0xf] %vm295, %v3025
      %3076 = vst.msk [vmem:[#allocation4 + $0x78] sm:$0xf] %vm295, %v3026
      %3077 = vst.msk [vmem:[#allocation4 + $0x8c] sm:$0xf] %vm295, %v3027
      %3078 = vst.msk [vmem:[#allocation4 + $0xa0] sm:$0xf] %vm295, %v3028
      %3079 = vst.msk [vmem:[#allocation4 + $0xb4] sm:$0xf] %vm295, %v3029
      %3080 = vst.msk [vmem:[#allocation4 + $0xc8] sm:$0xf] %vm295, %v3030
      %3081 = vst.msk [vmem:[#allocation4 + $0xdc] sm:$0xf] %vm295, %v3031
      %3082 = vst.msk [vmem:[#allocation4 + $0xf0] sm:$0xf] %vm295, %v3032
      %3083 = vst.msk [vmem:[#allocation4 + $0x104] sm:$0xf] %vm295, %v3033
      %3084 = vst.msk [vmem:[#allocation4 + $0x118] sm:$0xf] %vm295, %v3034
      %3085 = vst.msk [vmem:[#allocation4 + $0x12c] sm:$0xf] %vm295, %v3035
      %3086 = vst.msk [vmem:[#allocation4 + $0x140] sm:$0xf] %vm295, %v3036
      %3087 = vst.msk [vmem:[#allocation4 + $0x154] sm:$0xf] %vm295, %v3037
      %3088 = vst.msk [vmem:[#allocation4 + $0x168] sm:$0xf] %vm295, %v3038
      %3089 = vst.msk [vmem:[#allocation4 + $0x17c] sm:$0xf] %vm295, %v3039
      %3090 = vst.msk [vmem:[#allocation4 + $0x190] sm:$0xf] %vm295, %v3040
      %3091 = vst.msk [vmem:[#allocation4 + $0x1a4] sm:$0xf] %vm295, %v3041
      %3092 = vst.msk [vmem:[#allocation4 + $0x1b8] sm:$0xf] %vm295, %v3042
      %3093 = vst.msk [vmem:[#allocation4 + $0x1cc] sm:$0xf] %vm295, %v3043
      %3094 = vst.msk [vmem:[#allocation4 + $0x1e0] sm:$0xf] %vm295, %v3044
      %v3095 = vld [vmem:[#allocation3 + $0x6] sm:$0xff]
      %v3096 = vld [vmem:[#allocation3 + $0xe] sm:$0xff]
      %v3097 = vld [vmem:[#allocation3 + $0x16] sm:$0xff]
      %v3098 = vld [vmem:[#allocation3 + $0x1e] sm:$0xff]
      %v3099 = vld [vmem:[#allocation3 + $0x26] sm:$0xff]
      %v3100 = vld [vmem:[#allocation3 + $0x2e] sm:$0xff]
      %v3101 = vld [vmem:[#allocation3 + $0x36] sm:$0xff]
      %v3102 = vld [vmem:[#allocation3 + $0x3e] sm:$0xff]
      %v3103 = vld [vmem:[#allocation3 + $0x46] sm:$0xff]
      %v3104 = vld [vmem:[#allocation3 + $0x4e] sm:$0xff]
      %v3105 = vld [vmem:[#allocation3 + $0x56] sm:$0xff]
      %v3106 = vld [vmem:[#allocation3 + $0x5e] sm:$0xff]
      %v3107 = vld [vmem:[#allocation3 + $0x66] sm:$0xff]
      %v3108 = vld [vmem:[#allocation3 + $0x6e] sm:$0xff]
      %v3109 = vld [vmem:[#allocation3 + $0x76] sm:$0xff]
      %v3110 = vld [vmem:[#allocation3 + $0x7e] sm:$0xff]
      %v3111 = vld [vmem:[#allocation3 + $0x86] sm:$0xff]
      %v3112 = vld [vmem:[#allocation3 + $0x8e] sm:$0xff]
      %v3113 = vld [vmem:[#allocation3 + $0x96] sm:$0xff]
      %v3114 = vld [vmem:[#allocation3 + $0x9e] sm:$0xff]
      %v3115 = vld [vmem:[#allocation3 + $0xa6] sm:$0xff]
      %v3116 = vld [vmem:[#allocation3 + $0xae] sm:$0xff]
      %v3117 = vld [vmem:[#allocation3 + $0xb6] sm:$0xff]
      %v3118 = vld [vmem:[#allocation3 + $0xbe] sm:$0xff]
      %v3119 = vld [vmem:[#allocation3 + $0xc6] sm:$0xff]
      %v3120 = vpack.c.bf16 %v3096, %v3095
      %v3121 = vpack.c.bf16 %v3098, %v3097
      %v3122 = vpack.c.bf16 %v3100, %v3099
      %v3123 = vpack.c.bf16 %v3102, %v3101
      %v3124 = vpack.c.bf16 %v3104, %v3103
      %v3125 = vpack.c.bf16 %v3106, %v3105
      %v3126 = vpack.c.bf16 %v3108, %v3107
      %v3127 = vpack.c.bf16 %v3110, %v3109
      %v3128 = vpack.c.bf16 %v3112, %v3111
      %v3129 = vpack.c.bf16 %v3114, %v3113
      %v3130 = vpack.c.bf16 %v3116, %v3115
      %v3131 = vpack.c.bf16 %v3118, %v3117
      %v3132 = vpack.c.bf16 %v3119, %v3119
      %v3146 = vunpack.c.l.b16 %v3120
      %v3147 = vunpack.c.h.b16 %v3120
      %v3148 = vunpack.c.l.b16 %v3121
      %v3149 = vunpack.c.h.b16 %v3121
      %v3150 = vunpack.c.l.b16 %v3122
      %v3151 = vunpack.c.h.b16 %v3122
      %v3152 = vunpack.c.l.b16 %v3123
      %v3153 = vunpack.c.h.b16 %v3123
      %v3154 = vunpack.c.l.b16 %v3124
      %v3155 = vunpack.c.h.b16 %v3124
      %v3156 = vunpack.c.l.b16 %v3125
      %v3157 = vunpack.c.h.b16 %v3125
      %v3158 = vunpack.c.l.b16 %v3126
      %v3159 = vunpack.c.h.b16 %v3126
      %v3160 = vunpack.c.l.b16 %v3127
      %v3161 = vunpack.c.h.b16 %v3127
      %v3162 = vunpack.c.l.b16 %v3128
      %v3163 = vunpack.c.h.b16 %v3128
      %v3164 = vunpack.c.l.b16 %v3129
      %v3165 = vunpack.c.h.b16 %v3129
      %v3166 = vunpack.c.l.b16 %v3130
      %v3167 = vunpack.c.h.b16 %v3130
      %v3168 = vunpack.c.l.b16 %v3131
      %v3169 = vunpack.c.h.b16 %v3131
      %v3170 = vunpack.c.l.b16 %v3132
      %v3171 = vpack.c.b16 %v3146, %v3146
      %v3172 = vpack.c.b16 %v3147, %v3147
      %v3173 = vpack.c.b16 %v3148, %v3148
      %v3174 = vpack.c.b16 %v3149, %v3149
      %v3175 = vpack.c.b16 %v3150, %v3150
      %v3176 = vpack.c.b16 %v3151, %v3151
      %v3177 = vpack.c.b16 %v3152, %v3152
      %v3178 = vpack.c.b16 %v3153, %v3153
      %v3179 = vpack.c.b16 %v3154, %v3154
      %v3180 = vpack.c.b16 %v3155, %v3155
      %v3181 = vpack.c.b16 %v3156, %v3156
      %v3182 = vpack.c.b16 %v3157, %v3157
      %v3183 = vpack.c.b16 %v3158, %v3158
      %v3184 = vpack.c.b16 %v3159, %v3159
      %v3185 = vpack.c.b16 %v3160, %v3160
      %v3186 = vpack.c.b16 %v3161, %v3161
      %v3187 = vpack.c.b16 %v3162, %v3162
      %v3188 = vpack.c.b16 %v3163, %v3163
      %v3189 = vpack.c.b16 %v3164, %v3164
      %v3190 = vpack.c.b16 %v3165, %v3165
      %v3191 = vpack.c.b16 %v3166, %v3166
      %v3192 = vpack.c.b16 %v3167, %v3167
      %v3193 = vpack.c.b16 %v3168, %v3168
      %v3194 = vpack.c.b16 %v3169, %v3169
      %v3195 = vpack.c.b16 %v3170, %v3170
      %3196 = vrot.lane.b32.xlu0 %v3171, 64
      %v3197 = vpop.permute.xlu0 %3196
      %3198 = vrot.lane.b32.xlu0 %v3172, 64
      %v3199 = vpop.permute.xlu0 %3198
      %3200 = vrot.lane.b32.xlu0 %v3173, 64
      %v3201 = vpop.permute.xlu0 %3200
      %3202 = vrot.lane.b32.xlu0 %v3174, 64
      %v3203 = vpop.permute.xlu0 %3202
      %3204 = vrot.lane.b32.xlu0 %v3175, 64
      %v3205 = vpop.permute.xlu0 %3204
      %3206 = vrot.lane.b32.xlu0 %v3176, 64
      %v3207 = vpop.permute.xlu0 %3206
      %3208 = vrot.lane.b32.xlu0 %v3177, 64
      %v3209 = vpop.permute.xlu0 %3208
      %3210 = vrot.lane.b32.xlu0 %v3178, 64
      %v3211 = vpop.permute.xlu0 %3210
      %3212 = vrot.lane.b32.xlu0 %v3179, 64
      %v3213 = vpop.permute.xlu0 %3212
      %3214 = vrot.lane.b32.xlu0 %v3180, 64
      %v3215 = vpop.permute.xlu0 %3214
      %3216 = vrot.lane.b32.xlu0 %v3181, 64
      %v3217 = vpop.permute.xlu0 %3216
      %3218 = vrot.lane.b32.xlu0 %v3182, 64
      %v3219 = vpop.permute.xlu0 %3218
      %3220 = vrot.lane.b32.xlu0 %v3183, 64
      %v3221 = vpop.permute.xlu0 %3220
      %3222 = vrot.lane.b32.xlu0 %v3184, 64
      %v3223 = vpop.permute.xlu0 %3222
      %3224 = vrot.lane.b32.xlu0 %v3185, 64
      %v3225 = vpop.permute.xlu0 %3224
      %3226 = vrot.lane.b32.xlu0 %v3186, 64
      %v3227 = vpop.permute.xlu0 %3226
      %3228 = vrot.lane.b32.xlu0 %v3187, 64
      %v3229 = vpop.permute.xlu0 %3228
      %3230 = vrot.lane.b32.xlu0 %v3188, 64
      %v3231 = vpop.permute.xlu0 %3230
      %3232 = vrot.lane.b32.xlu0 %v3189, 64
      %v3233 = vpop.permute.xlu0 %3232
      %3234 = vrot.lane.b32.xlu0 %v3190, 64
      %v3235 = vpop.permute.xlu0 %3234
      %3236 = vrot.lane.b32.xlu0 %v3191, 64
      %v3237 = vpop.permute.xlu0 %3236
      %3238 = vrot.lane.b32.xlu0 %v3192, 64
      %v3239 = vpop.permute.xlu0 %3238
      %3240 = vrot.lane.b32.xlu0 %v3193, 64
      %v3241 = vpop.permute.xlu0 %3240
      %3242 = vrot.lane.b32.xlu0 %v3194, 64
      %v3243 = vpop.permute.xlu0 %3242
      %3244 = vrot.lane.b32.xlu0 %v3195, 64
      %v3245 = vpop.permute.xlu0 %3244
      %3271 = vst.msk [vmem:[#allocation4] sm:$0xf] %vm497, %v3197
      %3272 = vst.msk [vmem:[#allocation4 + $0x14] sm:$0xf] %vm497, %v3199
      %3273 = vst.msk [vmem:[#allocation4 + $0x28] sm:$0xf] %vm497, %v3201
      %3274 = vst.msk [vmem:[#allocation4 + $0x3c] sm:$0xf] %vm497, %v3203
      %3275 = vst.msk [vmem:[#allocation4 + $0x50] sm:$0xf] %vm497, %v3205
      %3276 = vst.msk [vmem:[#allocation4 + $0x64] sm:$0xf] %vm497, %v3207
      %3277 = vst.msk [vmem:[#allocation4 + $0x78] sm:$0xf] %vm497, %v3209
      %3278 = vst.msk [vmem:[#allocation4 + $0x8c] sm:$0xf] %vm497, %v3211
      %3279 = vst.msk [vmem:[#allocation4 + $0xa0] sm:$0xf] %vm497, %v3213
      %3280 = vst.msk [vmem:[#allocation4 + $0xb4] sm:$0xf] %vm497, %v3215
      %3281 = vst.msk [vmem:[#allocation4 + $0xc8] sm:$0xf] %vm497, %v3217
      %3282 = vst.msk [vmem:[#allocation4 + $0xdc] sm:$0xf] %vm497, %v3219
      %3283 = vst.msk [vmem:[#allocation4 + $0xf0] sm:$0xf] %vm497, %v3221
      %3284 = vst.msk [vmem:[#allocation4 + $0x104] sm:$0xf] %vm497, %v3223
      %3285 = vst.msk [vmem:[#allocation4 + $0x118] sm:$0xf] %vm497, %v3225
      %3286 = vst.msk [vmem:[#allocation4 + $0x12c] sm:$0xf] %vm497, %v3227
      %3287 = vst.msk [vmem:[#allocation4 + $0x140] sm:$0xf] %vm497, %v3229
      %3288 = vst.msk [vmem:[#allocation4 + $0x154] sm:$0xf] %vm497, %v3231
      %3289 = vst.msk [vmem:[#allocation4 + $0x168] sm:$0xf] %vm497, %v3233
      %3290 = vst.msk [vmem:[#allocation4 + $0x17c] sm:$0xf] %vm497, %v3235
      %3291 = vst.msk [vmem:[#allocation4 + $0x190] sm:$0xf] %vm497, %v3237
      %3292 = vst.msk [vmem:[#allocation4 + $0x1a4] sm:$0xf] %vm497, %v3239
      %3293 = vst.msk [vmem:[#allocation4 + $0x1b8] sm:$0xf] %vm497, %v3241
      %3294 = vst.msk [vmem:[#allocation4 + $0x1cc] sm:$0xf] %vm497, %v3243
      %3295 = vst.msk [vmem:[#allocation4 + $0x1e0] sm:$0xf] %vm497, %v3245
      %v3296 = vld [vmem:[#allocation3 + $0x7] sm:$0xff]
      %v3297 = vld [vmem:[#allocation3 + $0xf] sm:$0xff]
      %v3298 = vld [vmem:[#allocation3 + $0x17] sm:$0xff]
      %v3299 = vld [vmem:[#allocation3 + $0x1f] sm:$0xff]
      %v3300 = vld [vmem:[#allocation3 + $0x27] sm:$0xff]
      %v3301 = vld [vmem:[#allocation3 + $0x2f] sm:$0xff]
      %v3302 = vld [vmem:[#allocation3 + $0x37] sm:$0xff]
      %v3303 = vld [vmem:[#allocation3 + $0x3f] sm:$0xff]
      %v3304 = vld [vmem:[#allocation3 + $0x47] sm:$0xff]
      %v3305 = vld [vmem:[#allocation3 + $0x4f] sm:$0xff]
      %v3306 = vld [vmem:[#allocation3 + $0x57] sm:$0xff]
      %v3307 = vld [vmem:[#allocation3 + $0x5f] sm:$0xff]
      %v3308 = vld [vmem:[#allocation3 + $0x67] sm:$0xff]
      %v3309 = vld [vmem:[#allocation3 + $0x6f] sm:$0xff]
      %v3310 = vld [vmem:[#allocation3 + $0x77] sm:$0xff]
      %v3311 = vld [vmem:[#allocation3 + $0x7f] sm:$0xff]
      %v3312 = vld [vmem:[#allocation3 + $0x87] sm:$0xff]
      %v3313 = vld [vmem:[#allocation3 + $0x8f] sm:$0xff]
      %v3314 = vld [vmem:[#allocation3 + $0x97] sm:$0xff]
      %v3315 = vld [vmem:[#allocation3 + $0x9f] sm:$0xff]
      %v3316 = vld [vmem:[#allocation3 + $0xa7] sm:$0xff]
      %v3317 = vld [vmem:[#allocation3 + $0xaf] sm:$0xff]
      %v3318 = vld [vmem:[#allocation3 + $0xb7] sm:$0xff]
      %v3319 = vld [vmem:[#allocation3 + $0xbf] sm:$0xff]
      %v3320 = vld [vmem:[#allocation3 + $0xc7] sm:$0xff]
      %v3321 = vpack.c.bf16 %v3297, %v3296
      %v3322 = vpack.c.bf16 %v3299, %v3298
      %v3323 = vpack.c.bf16 %v3301, %v3300
      %v3324 = vpack.c.bf16 %v3303, %v3302
      %v3325 = vpack.c.bf16 %v3305, %v3304
      %v3326 = vpack.c.bf16 %v3307, %v3306
      %v3327 = vpack.c.bf16 %v3309, %v3308
      %v3328 = vpack.c.bf16 %v3311, %v3310
      %v3329 = vpack.c.bf16 %v3313, %v3312
      %v3330 = vpack.c.bf16 %v3315, %v3314
      %v3331 = vpack.c.bf16 %v3317, %v3316
      %v3332 = vpack.c.bf16 %v3319, %v3318
      %v3333 = vpack.c.bf16 %v3320, %v3320
      %v3347 = vunpack.c.l.b16 %v3321
      %v3348 = vunpack.c.h.b16 %v3321
      %v3349 = vunpack.c.l.b16 %v3322
      %v3350 = vunpack.c.h.b16 %v3322
      %v3351 = vunpack.c.l.b16 %v3323
      %v3352 = vunpack.c.h.b16 %v3323
      %v3353 = vunpack.c.l.b16 %v3324
      %v3354 = vunpack.c.h.b16 %v3324
      %v3355 = vunpack.c.l.b16 %v3325
      %v3356 = vunpack.c.h.b16 %v3325
      %v3357 = vunpack.c.l.b16 %v3326
      %v3358 = vunpack.c.h.b16 %v3326
      %v3359 = vunpack.c.l.b16 %v3327
      %v3360 = vunpack.c.h.b16 %v3327
      %v3361 = vunpack.c.l.b16 %v3328
      %v3362 = vunpack.c.h.b16 %v3328
      %v3363 = vunpack.c.l.b16 %v3329
      %v3364 = vunpack.c.h.b16 %v3329
      %v3365 = vunpack.c.l.b16 %v3330
      %v3366 = vunpack.c.h.b16 %v3330
      %v3367 = vunpack.c.l.b16 %v3331
      %v3368 = vunpack.c.h.b16 %v3331
      %v3369 = vunpack.c.l.b16 %v3332
      %v3370 = vunpack.c.h.b16 %v3332
      %v3371 = vunpack.c.l.b16 %v3333
      %v3372 = vpack.c.b16 %v3347, %v3347
      %v3373 = vpack.c.b16 %v3348, %v3348
      %v3374 = vpack.c.b16 %v3349, %v3349
      %v3375 = vpack.c.b16 %v3350, %v3350
      %v3376 = vpack.c.b16 %v3351, %v3351
      %v3377 = vpack.c.b16 %v3352, %v3352
      %v3378 = vpack.c.b16 %v3353, %v3353
      %v3379 = vpack.c.b16 %v3354, %v3354
      %v3380 = vpack.c.b16 %v3355, %v3355
      %v3381 = vpack.c.b16 %v3356, %v3356
      %v3382 = vpack.c.b16 %v3357, %v3357
      %v3383 = vpack.c.b16 %v3358, %v3358
      %v3384 = vpack.c.b16 %v3359, %v3359
      %v3385 = vpack.c.b16 %v3360, %v3360
      %v3386 = vpack.c.b16 %v3361, %v3361
      %v3387 = vpack.c.b16 %v3362, %v3362
      %v3388 = vpack.c.b16 %v3363, %v3363
      %v3389 = vpack.c.b16 %v3364, %v3364
      %v3390 = vpack.c.b16 %v3365, %v3365
      %v3391 = vpack.c.b16 %v3366, %v3366
      %v3392 = vpack.c.b16 %v3367, %v3367
      %v3393 = vpack.c.b16 %v3368, %v3368
      %v3394 = vpack.c.b16 %v3369, %v3369
      %v3395 = vpack.c.b16 %v3370, %v3370
      %v3396 = vpack.c.b16 %v3371, %v3371
      %3422 = vst.msk [vmem:[#allocation4 + $0x4] sm:$0xf] %vm295, %v3372
      %3423 = vst.msk [vmem:[#allocation4 + $0x18] sm:$0xf] %vm295, %v3373
      %3424 = vst.msk [vmem:[#allocation4 + $0x2c] sm:$0xf] %vm295, %v3374
      %3425 = vst.msk [vmem:[#allocation4 + $0x40] sm:$0xf] %vm295, %v3375
      %3426 = vst.msk [vmem:[#allocation4 + $0x54] sm:$0xf] %vm295, %v3376
      %3427 = vst.msk [vmem:[#allocation4 + $0x68] sm:$0xf] %vm295, %v3377
      %3428 = vst.msk [vmem:[#allocation4 + $0x7c] sm:$0xf] %vm295, %v3378
      %3429 = vst.msk [vmem:[#allocation4 + $0x90] sm:$0xf] %vm295, %v3379
      %3430 = vst.msk [vmem:[#allocation4 + $0xa4] sm:$0xf] %vm295, %v3380
      %3431 = vst.msk [vmem:[#allocation4 + $0xb8] sm:$0xf] %vm295, %v3381
      %3432 = vst.msk [vmem:[#allocation4 + $0xcc] sm:$0xf] %vm295, %v3382
      %3433 = vst.msk [vmem:[#allocation4 + $0xe0] sm:$0xf] %vm295, %v3383
      %3434 = vst.msk [vmem:[#allocation4 + $0xf4] sm:$0xf] %vm295, %v3384
      %3435 = vst.msk [vmem:[#allocation4 + $0x108] sm:$0xf] %vm295, %v3385
      %3436 = vst.msk [vmem:[#allocation4 + $0x11c] sm:$0xf] %vm295, %v3386
      %3437 = vst.msk [vmem:[#allocation4 + $0x130] sm:$0xf] %vm295, %v3387
      %3438 = vst.msk [vmem:[#allocation4 + $0x144] sm:$0xf] %vm295, %v3388
      %3439 = vst.msk [vmem:[#allocation4 + $0x158] sm:$0xf] %vm295, %v3389
      %3440 = vst.msk [vmem:[#allocation4 + $0x16c] sm:$0xf] %vm295, %v3390
      %3441 = vst.msk [vmem:[#allocation4 + $0x180] sm:$0xf] %vm295, %v3391
      %3442 = vst.msk [vmem:[#allocation4 + $0x194] sm:$0xf] %vm295, %v3392
      %3443 = vst.msk [vmem:[#allocation4 + $0x1a8] sm:$0xf] %vm295, %v3393
      %3444 = vst.msk [vmem:[#allocation4 + $0x1bc] sm:$0xf] %vm295, %v3394
      %3445 = vst.msk [vmem:[#allocation4 + $0x1d0] sm:$0xf] %vm295, %v3395
      %3446 = vst.msk [vmem:[#allocation4 + $0x1e4] sm:$0xf] %vm295, %v3396
      %v3447 = vld [vmem:[#allocation3 + $0xf] sm:$0xff]
      %v3448 = vld [vmem:[#allocation3 + $0x17] sm:$0xff]
      %v3449 = vld [vmem:[#allocation3 + $0x1f] sm:$0xff]
      %v3450 = vld [vmem:[#allocation3 + $0x27] sm:$0xff]
      %v3451 = vld [vmem:[#allocation3 + $0x2f] sm:$0xff]
      %v3452 = vld [vmem:[#allocation3 + $0x37] sm:$0xff]
      %v3453 = vld [vmem:[#allocation3 + $0x3f] sm:$0xff]
      %v3454 = vld [vmem:[#allocation3 + $0x47] sm:$0xff]
      %v3455 = vld [vmem:[#allocation3 + $0x4f] sm:$0xff]
      %v3456 = vld [vmem:[#allocation3 + $0x57] sm:$0xff]
      %v3457 = vld [vmem:[#allocation3 + $0x5f] sm:$0xff]
      %v3458 = vld [vmem:[#allocation3 + $0x67] sm:$0xff]
      %v3459 = vld [vmem:[#allocation3 + $0x6f] sm:$0xff]
      %v3460 = vld [vmem:[#allocation3 + $0x77] sm:$0xff]
      %v3461 = vld [vmem:[#allocation3 + $0x7f] sm:$0xff]
      %v3462 = vld [vmem:[#allocation3 + $0x87] sm:$0xff]
      %v3463 = vld [vmem:[#allocation3 + $0x8f] sm:$0xff]
      %v3464 = vld [vmem:[#allocation3 + $0x97] sm:$0xff]
      %v3465 = vld [vmem:[#allocation3 + $0x9f] sm:$0xff]
      %v3466 = vld [vmem:[#allocation3 + $0xa7] sm:$0xff]
      %v3467 = vld [vmem:[#allocation3 + $0xaf] sm:$0xff]
      %v3468 = vld [vmem:[#allocation3 + $0xb7] sm:$0xff]
      %v3469 = vld [vmem:[#allocation3 + $0xbf] sm:$0xff]
      %v3470 = vld [vmem:[#allocation3 + $0xc7] sm:$0xff]
      %v3471 = vld [vmem:[#allocation3 + $0xcf] sm:$0xff]
      %v3472 = vpack.c.bf16 %v3448, %v3447
      %v3473 = vpack.c.bf16 %v3450, %v3449
      %v3474 = vpack.c.bf16 %v3452, %v3451
      %v3475 = vpack.c.bf16 %v3454, %v3453
      %v3476 = vpack.c.bf16 %v3456, %v3455
      %v3477 = vpack.c.bf16 %v3458, %v3457
      %v3478 = vpack.c.bf16 %v3460, %v3459
      %v3479 = vpack.c.bf16 %v3462, %v3461
      %v3480 = vpack.c.bf16 %v3464, %v3463
      %v3481 = vpack.c.bf16 %v3466, %v3465
      %v3482 = vpack.c.bf16 %v3468, %v3467
      %v3483 = vpack.c.bf16 %v3470, %v3469
      %v3484 = vpack.c.bf16 %v3471, %v3471
      %v3498 = vunpack.c.l.b16 %v3472
      %v3499 = vunpack.c.h.b16 %v3472
      %v3500 = vunpack.c.l.b16 %v3473
      %v3501 = vunpack.c.h.b16 %v3473
      %v3502 = vunpack.c.l.b16 %v3474
      %v3503 = vunpack.c.h.b16 %v3474
      %v3504 = vunpack.c.l.b16 %v3475
      %v3505 = vunpack.c.h.b16 %v3475
      %v3506 = vunpack.c.l.b16 %v3476
      %v3507 = vunpack.c.h.b16 %v3476
      %v3508 = vunpack.c.l.b16 %v3477
      %v3509 = vunpack.c.h.b16 %v3477
      %v3510 = vunpack.c.l.b16 %v3478
      %v3511 = vunpack.c.h.b16 %v3478
      %v3512 = vunpack.c.l.b16 %v3479
      %v3513 = vunpack.c.h.b16 %v3479
      %v3514 = vunpack.c.l.b16 %v3480
      %v3515 = vunpack.c.h.b16 %v3480
      %v3516 = vunpack.c.l.b16 %v3481
      %v3517 = vunpack.c.h.b16 %v3481
      %v3518 = vunpack.c.l.b16 %v3482
      %v3519 = vunpack.c.h.b16 %v3482
      %v3520 = vunpack.c.l.b16 %v3483
      %v3521 = vunpack.c.h.b16 %v3483
      %v3522 = vunpack.c.l.b16 %v3484
      %v3523 = vpack.c.b16 %v3498, %v3498
      %v3524 = vpack.c.b16 %v3499, %v3499
      %v3525 = vpack.c.b16 %v3500, %v3500
      %v3526 = vpack.c.b16 %v3501, %v3501
      %v3527 = vpack.c.b16 %v3502, %v3502
      %v3528 = vpack.c.b16 %v3503, %v3503
      %v3529 = vpack.c.b16 %v3504, %v3504
      %v3530 = vpack.c.b16 %v3505, %v3505
      %v3531 = vpack.c.b16 %v3506, %v3506
      %v3532 = vpack.c.b16 %v3507, %v3507
      %v3533 = vpack.c.b16 %v3508, %v3508
      %v3534 = vpack.c.b16 %v3509, %v3509
      %v3535 = vpack.c.b16 %v3510, %v3510
      %v3536 = vpack.c.b16 %v3511, %v3511
      %v3537 = vpack.c.b16 %v3512, %v3512
      %v3538 = vpack.c.b16 %v3513, %v3513
      %v3539 = vpack.c.b16 %v3514, %v3514
      %v3540 = vpack.c.b16 %v3515, %v3515
      %v3541 = vpack.c.b16 %v3516, %v3516
      %v3542 = vpack.c.b16 %v3517, %v3517
      %v3543 = vpack.c.b16 %v3518, %v3518
      %v3544 = vpack.c.b16 %v3519, %v3519
      %v3545 = vpack.c.b16 %v3520, %v3520
      %v3546 = vpack.c.b16 %v3521, %v3521
      %v3547 = vpack.c.b16 %v3522, %v3522
      %3548 = vrot.lane.b32.xlu0 %v3523, 64
      %v3549 = vpop.permute.xlu0 %3548
      %3550 = vrot.lane.b32.xlu0 %v3524, 64
      %v3551 = vpop.permute.xlu0 %3550
      %3552 = vrot.lane.b32.xlu0 %v3525, 64
      %v3553 = vpop.permute.xlu0 %3552
      %3554 = vrot.lane.b32.xlu0 %v3526, 64
      %v3555 = vpop.permute.xlu0 %3554
      %3556 = vrot.lane.b32.xlu0 %v3527, 64
      %v3557 = vpop.permute.xlu0 %3556
      %3558 = vrot.lane.b32.xlu0 %v3528, 64
      %v3559 = vpop.permute.xlu0 %3558
      %3560 = vrot.lane.b32.xlu0 %v3529, 64
      %v3561 = vpop.permute.xlu0 %3560
      %3562 = vrot.lane.b32.xlu0 %v3530, 64
      %v3563 = vpop.permute.xlu0 %3562
      %3564 = vrot.lane.b32.xlu0 %v3531, 64
      %v3565 = vpop.permute.xlu0 %3564
      %3566 = vrot.lane.b32.xlu0 %v3532, 64
      %v3567 = vpop.permute.xlu0 %3566
      %3568 = vrot.lane.b32.xlu0 %v3533, 64
      %v3569 = vpop.permute.xlu0 %3568
      %3570 = vrot.lane.b32.xlu0 %v3534, 64
      %v3571 = vpop.permute.xlu0 %3570
      %3572 = vrot.lane.b32.xlu0 %v3535, 64
      %v3573 = vpop.permute.xlu0 %3572
      %3574 = vrot.lane.b32.xlu0 %v3536, 64
      %v3575 = vpop.permute.xlu0 %3574
      %3576 = vrot.lane.b32.xlu0 %v3537, 64
      %v3577 = vpop.permute.xlu0 %3576
      %3578 = vrot.lane.b32.xlu0 %v3538, 64
      %v3579 = vpop.permute.xlu0 %3578
      %3580 = vrot.lane.b32.xlu0 %v3539, 64
      %v3581 = vpop.permute.xlu0 %3580
      %3582 = vrot.lane.b32.xlu0 %v3540, 64
      %v3583 = vpop.permute.xlu0 %3582
      %3584 = vrot.lane.b32.xlu0 %v3541, 64
      %v3585 = vpop.permute.xlu0 %3584
      %3586 = vrot.lane.b32.xlu0 %v3542, 64
      %v3587 = vpop.permute.xlu0 %3586
      %3588 = vrot.lane.b32.xlu0 %v3543, 64
      %v3589 = vpop.permute.xlu0 %3588
      %3590 = vrot.lane.b32.xlu0 %v3544, 64
      %v3591 = vpop.permute.xlu0 %3590
      %3592 = vrot.lane.b32.xlu0 %v3545, 64
      %v3593 = vpop.permute.xlu0 %3592
      %3594 = vrot.lane.b32.xlu0 %v3546, 64
      %v3595 = vpop.permute.xlu0 %3594
      %3596 = vrot.lane.b32.xlu0 %v3547, 64
      %v3597 = vpop.permute.xlu0 %3596
      %3623 = vst.msk [vmem:[#allocation4 + $0x4] sm:$0xf] %vm497, %v3549
      %3624 = vst.msk [vmem:[#allocation4 + $0x18] sm:$0xf] %vm497, %v3551
      %3625 = vst.msk [vmem:[#allocation4 + $0x2c] sm:$0xf] %vm497, %v3553
      %3626 = vst.msk [vmem:[#allocation4 + $0x40] sm:$0xf] %vm497, %v3555
      %3627 = vst.msk [vmem:[#allocation4 + $0x54] sm:$0xf] %vm497, %v3557
      %3628 = vst.msk [vmem:[#allocation4 + $0x68] sm:$0xf] %vm497, %v3559
      %3629 = vst.msk [vmem:[#allocation4 + $0x7c] sm:$0xf] %vm497, %v3561
      %3630 = vst.msk [vmem:[#allocation4 + $0x90] sm:$0xf] %vm497, %v3563
      %3631 = vst.msk [vmem:[#allocation4 + $0xa4] sm:$0xf] %vm497, %v3565
      %3632 = vst.msk [vmem:[#allocation4 + $0xb8] sm:$0xf] %vm497, %v3567
      %3633 = vst.msk [vmem:[#allocation4 + $0xcc] sm:$0xf] %vm497, %v3569
      %3634 = vst.msk [vmem:[#allocation4 + $0xe0] sm:$0xf] %vm497, %v3571
      %3635 = vst.msk [vmem:[#allocation4 + $0xf4] sm:$0xf] %vm497, %v3573
      %3636 = vst.msk [vmem:[#allocation4 + $0x108] sm:$0xf] %vm497, %v3575
      %3637 = vst.msk [vmem:[#allocation4 + $0x11c] sm:$0xf] %vm497, %v3577
      %3638 = vst.msk [vmem:[#allocation4 + $0x130] sm:$0xf] %vm497, %v3579
      %3639 = vst.msk [vmem:[#allocation4 + $0x144] sm:$0xf] %vm497, %v3581
      %3640 = vst.msk [vmem:[#allocation4 + $0x158] sm:$0xf] %vm497, %v3583
      %3641 = vst.msk [vmem:[#allocation4 + $0x16c] sm:$0xf] %vm497, %v3585
      %3642 = vst.msk [vmem:[#allocation4 + $0x180] sm:$0xf] %vm497, %v3587
      %3643 = vst.msk [vmem:[#allocation4 + $0x194] sm:$0xf] %vm497, %v3589
      %3644 = vst.msk [vmem:[#allocation4 + $0x1a8] sm:$0xf] %vm497, %v3591
      %3645 = vst.msk [vmem:[#allocation4 + $0x1bc] sm:$0xf] %vm497, %v3593
      %3646 = vst.msk [vmem:[#allocation4 + $0x1d0] sm:$0xf] %vm497, %v3595
      %3647 = vst.msk [vmem:[#allocation4 + $0x1e4] sm:$0xf] %vm497, %v3597
      %v3648 = vld [vmem:[#allocation3 + $0x10] sm:$0xff]
      %v3649 = vld [vmem:[#allocation3 + $0x18] sm:$0xff]
      %v3650 = vld [vmem:[#allocation3 + $0x20] sm:$0xff]
      %v3651 = vld [vmem:[#allocation3 + $0x28] sm:$0xff]
      %v3652 = vld [vmem:[#allocation3 + $0x30] sm:$0xff]
      %v3653 = vld [vmem:[#allocation3 + $0x38] sm:$0xff]
      %v3654 = vld [vmem:[#allocation3 + $0x40] sm:$0xff]
      %v3655 = vld [vmem:[#allocation3 + $0x48] sm:$0xff]
      %v3656 = vld [vmem:[#allocation3 + $0x50] sm:$0xff]
      %v3657 = vld [vmem:[#allocation3 + $0x58] sm:$0xff]
      %v3658 = vld [vmem:[#allocation3 + $0x60] sm:$0xff]
      %v3659 = vld [vmem:[#allocation3 + $0x68] sm:$0xff]
      %v3660 = vld [vmem:[#allocation3 + $0x70] sm:$0xff]
      %v3661 = vld [vmem:[#allocation3 + $0x78] sm:$0xff]
      %v3662 = vld [vmem:[#allocation3 + $0x80] sm:$0xff]
      %v3663 = vld [vmem:[#allocation3 + $0x88] sm:$0xff]
      %v3664 = vld [vmem:[#allocation3 + $0x90] sm:$0xff]
      %v3665 = vld [vmem:[#allocation3 + $0x98] sm:$0xff]
      %v3666 = vld [vmem:[#allocation3 + $0xa0] sm:$0xff]
      %v3667 = vld [vmem:[#allocation3 + $0xa8] sm:$0xff]
      %v3668 = vld [vmem:[#allocation3 + $0xb0] sm:$0xff]
      %v3669 = vld [vmem:[#allocation3 + $0xb8] sm:$0xff]
      %v3670 = vld [vmem:[#allocation3 + $0xc0] sm:$0xff]
      %v3671 = vld [vmem:[#allocation3 + $0xc8] sm:$0xff]
      %v3672 = vld [vmem:[#allocation3 + $0xd0] sm:$0xff]
      %v3673 = vpack.c.bf16 %v3649, %v3648
      %v3674 = vpack.c.bf16 %v3651, %v3650
      %v3675 = vpack.c.bf16 %v3653, %v3652
      %v3676 = vpack.c.bf16 %v3655, %v3654
      %v3677 = vpack.c.bf16 %v3657, %v3656
      %v3678 = vpack.c.bf16 %v3659, %v3658
      %v3679 = vpack.c.bf16 %v3661, %v3660
      %v3680 = vpack.c.bf16 %v3663, %v3662
      %v3681 = vpack.c.bf16 %v3665, %v3664
      %v3682 = vpack.c.bf16 %v3667, %v3666
      %v3683 = vpack.c.bf16 %v3669, %v3668
      %v3684 = vpack.c.bf16 %v3671, %v3670
      %v3685 = vpack.c.bf16 %v3672, %v3672
      %v3699 = vunpack.c.l.b16 %v3673
      %v3700 = vunpack.c.h.b16 %v3673
      %v3701 = vunpack.c.l.b16 %v3674
      %v3702 = vunpack.c.h.b16 %v3674
      %v3703 = vunpack.c.l.b16 %v3675
      %v3704 = vunpack.c.h.b16 %v3675
      %v3705 = vunpack.c.l.b16 %v3676
      %v3706 = vunpack.c.h.b16 %v3676
      %v3707 = vunpack.c.l.b16 %v3677
      %v3708 = vunpack.c.h.b16 %v3677
      %v3709 = vunpack.c.l.b16 %v3678
      %v3710 = vunpack.c.h.b16 %v3678
      %v3711 = vunpack.c.l.b16 %v3679
      %v3712 = vunpack.c.h.b16 %v3679
      %v3713 = vunpack.c.l.b16 %v3680
      %v3714 = vunpack.c.h.b16 %v3680
      %v3715 = vunpack.c.l.b16 %v3681
      %v3716 = vunpack.c.h.b16 %v3681
      %v3717 = vunpack.c.l.b16 %v3682
      %v3718 = vunpack.c.h.b16 %v3682
      %v3719 = vunpack.c.l.b16 %v3683
      %v3720 = vunpack.c.h.b16 %v3683
      %v3721 = vunpack.c.l.b16 %v3684
      %v3722 = vunpack.c.h.b16 %v3684
      %v3723 = vunpack.c.l.b16 %v3685
      %v3724 = vpack.c.b16 %v3699, %v3699
      %v3725 = vpack.c.b16 %v3700, %v3700
      %v3726 = vpack.c.b16 %v3701, %v3701
      %v3727 = vpack.c.b16 %v3702, %v3702
      %v3728 = vpack.c.b16 %v3703, %v3703
      %v3729 = vpack.c.b16 %v3704, %v3704
      %v3730 = vpack.c.b16 %v3705, %v3705
      %v3731 = vpack.c.b16 %v3706, %v3706
      %v3732 = vpack.c.b16 %v3707, %v3707
      %v3733 = vpack.c.b16 %v3708, %v3708
      %v3734 = vpack.c.b16 %v3709, %v3709
      %v3735 = vpack.c.b16 %v3710, %v3710
      %v3736 = vpack.c.b16 %v3711, %v3711
      %v3737 = vpack.c.b16 %v3712, %v3712
      %v3738 = vpack.c.b16 %v3713, %v3713
      %v3739 = vpack.c.b16 %v3714, %v3714
      %v3740 = vpack.c.b16 %v3715, %v3715
      %v3741 = vpack.c.b16 %v3716, %v3716
      %v3742 = vpack.c.b16 %v3717, %v3717
      %v3743 = vpack.c.b16 %v3718, %v3718
      %v3744 = vpack.c.b16 %v3719, %v3719
      %v3745 = vpack.c.b16 %v3720, %v3720
      %v3746 = vpack.c.b16 %v3721, %v3721
      %v3747 = vpack.c.b16 %v3722, %v3722
      %v3748 = vpack.c.b16 %v3723, %v3723
      %3774 = vst.msk [vmem:[#allocation4 + $0x8] sm:$0xf] %vm295, %v3724
      %3775 = vst.msk [vmem:[#allocation4 + $0x1c] sm:$0xf] %vm295, %v3725
      %3776 = vst.msk [vmem:[#allocation4 + $0x30] sm:$0xf] %vm295, %v3726
      %3777 = vst.msk [vmem:[#allocation4 + $0x44] sm:$0xf] %vm295, %v3727
      %3778 = vst.msk [vmem:[#allocation4 + $0x58] sm:$0xf] %vm295, %v3728
      %3779 = vst.msk [vmem:[#allocation4 + $0x6c] sm:$0xf] %vm295, %v3729
      %3780 = vst.msk [vmem:[#allocation4 + $0x80] sm:$0xf] %vm295, %v3730
      %3781 = vst.msk [vmem:[#allocation4 + $0x94] sm:$0xf] %vm295, %v3731
      %3782 = vst.msk [vmem:[#allocation4 + $0xa8] sm:$0xf] %vm295, %v3732
      %3783 = vst.msk [vmem:[#allocation4 + $0xbc] sm:$0xf] %vm295, %v3733
      %3784 = vst.msk [vmem:[#allocation4 + $0xd0] sm:$0xf] %vm295, %v3734
      %3785 = vst.msk [vmem:[#allocation4 + $0xe4] sm:$0xf] %vm295, %v3735
      %3786 = vst.msk [vmem:[#allocation4 + $0xf8] sm:$0xf] %vm295, %v3736
      %3787 = vst.msk [vmem:[#allocation4 + $0x10c] sm:$0xf] %vm295, %v3737
      %3788 = vst.msk [vmem:[#allocation4 + $0x120] sm:$0xf] %vm295, %v3738
      %3789 = vst.msk [vmem:[#allocation4 + $0x134] sm:$0xf] %vm295, %v3739
      %3790 = vst.msk [vmem:[#allocation4 + $0x148] sm:$0xf] %vm295, %v3740
      %3791 = vst.msk [vmem:[#allocation4 + $0x15c] sm:$0xf] %vm295, %v3741
      %3792 = vst.msk [vmem:[#allocation4 + $0x170] sm:$0xf] %vm295, %v3742
      %3793 = vst.msk [vmem:[#allocation4 + $0x184] sm:$0xf] %vm295, %v3743
      %3794 = vst.msk [vmem:[#allocation4 + $0x198] sm:$0xf] %vm295, %v3744
      %3795 = vst.msk [vmem:[#allocation4 + $0x1ac] sm:$0xf] %vm295, %v3745
      %3796 = vst.msk [vmem:[#allocation4 + $0x1c0] sm:$0xf] %vm295, %v3746
      %3797 = vst.msk [vmem:[#allocation4 + $0x1d4] sm:$0xf] %vm295, %v3747
      %3798 = vst.msk [vmem:[#allocation4 + $0x1e8] sm:$0xf] %vm295, %v3748
      %v3799 = vld [vmem:[#allocation3 + $0x11] sm:$0xff]
      %v3800 = vld [vmem:[#allocation3 + $0x19] sm:$0xff]
      %v3801 = vld [vmem:[#allocation3 + $0x21] sm:$0xff]
      %v3802 = vld [vmem:[#allocation3 + $0x29] sm:$0xff]
      %v3803 = vld [vmem:[#allocation3 + $0x31] sm:$0xff]
      %v3804 = vld [vmem:[#allocation3 + $0x39] sm:$0xff]
      %v3805 = vld [vmem:[#allocation3 + $0x41] sm:$0xff]
      %v3806 = vld [vmem:[#allocation3 + $0x49] sm:$0xff]
      %v3807 = vld [vmem:[#allocation3 + $0x51] sm:$0xff]
      %v3808 = vld [vmem:[#allocation3 + $0x59] sm:$0xff]
      %v3809 = vld [vmem:[#allocation3 + $0x61] sm:$0xff]
      %v3810 = vld [vmem:[#allocation3 + $0x69] sm:$0xff]
      %v3811 = vld [vmem:[#allocation3 + $0x71] sm:$0xff]
      %v3812 = vld [vmem:[#allocation3 + $0x79] sm:$0xff]
      %v3813 = vld [vmem:[#allocation3 + $0x81] sm:$0xff]
      %v3814 = vld [vmem:[#allocation3 + $0x89] sm:$0xff]
      %v3815 = vld [vmem:[#allocation3 + $0x91] sm:$0xff]
      %v3816 = vld [vmem:[#allocation3 + $0x99] sm:$0xff]
      %v3817 = vld [vmem:[#allocation3 + $0xa1] sm:$0xff]
      %v3818 = vld [vmem:[#allocation3 + $0xa9] sm:$0xff]
      %v3819 = vld [vmem:[#allocation3 + $0xb1] sm:$0xff]
      %v3820 = vld [vmem:[#allocation3 + $0xb9] sm:$0xff]
      %v3821 = vld [vmem:[#allocation3 + $0xc1] sm:$0xff]
      %v3822 = vld [vmem:[#allocation3 + $0xc9] sm:$0xff]
      %v3823 = vld [vmem:[#allocation3 + $0xd1] sm:$0xff]
      %v3824 = vpack.c.bf16 %v3800, %v3799
      %v3825 = vpack.c.bf16 %v3802, %v3801
      %v3826 = vpack.c.bf16 %v3804, %v3803
      %v3827 = vpack.c.bf16 %v3806, %v3805
      %v3828 = vpack.c.bf16 %v3808, %v3807
      %v3829 = vpack.c.bf16 %v3810, %v3809
      %v3830 = vpack.c.bf16 %v3812, %v3811
      %v3831 = vpack.c.bf16 %v3814, %v3813
      %v3832 = vpack.c.bf16 %v3816, %v3815
      %v3833 = vpack.c.bf16 %v3818, %v3817
      %v3834 = vpack.c.bf16 %v3820, %v3819
      %v3835 = vpack.c.bf16 %v3822, %v3821
      %v3836 = vpack.c.bf16 %v3823, %v3823
      %v3850 = vunpack.c.l.b16 %v3824
      %v3851 = vunpack.c.h.b16 %v3824
      %v3852 = vunpack.c.l.b16 %v3825
      %v3853 = vunpack.c.h.b16 %v3825
      %v3854 = vunpack.c.l.b16 %v3826
      %v3855 = vunpack.c.h.b16 %v3826
      %v3856 = vunpack.c.l.b16 %v3827
      %v3857 = vunpack.c.h.b16 %v3827
      %v3858 = vunpack.c.l.b16 %v3828
      %v3859 = vunpack.c.h.b16 %v3828
      %v3860 = vunpack.c.l.b16 %v3829
      %v3861 = vunpack.c.h.b16 %v3829
      %v3862 = vunpack.c.l.b16 %v3830
      %v3863 = vunpack.c.h.b16 %v3830
      %v3864 = vunpack.c.l.b16 %v3831
      %v3865 = vunpack.c.h.b16 %v3831
      %v3866 = vunpack.c.l.b16 %v3832
      %v3867 = vunpack.c.h.b16 %v3832
      %v3868 = vunpack.c.l.b16 %v3833
      %v3869 = vunpack.c.h.b16 %v3833
      %v3870 = vunpack.c.l.b16 %v3834
      %v3871 = vunpack.c.h.b16 %v3834
      %v3872 = vunpack.c.l.b16 %v3835
      %v3873 = vunpack.c.h.b16 %v3835
      %v3874 = vunpack.c.l.b16 %v3836
      %v3875 = vpack.c.b16 %v3850, %v3850
      %v3876 = vpack.c.b16 %v3851, %v3851
      %v3877 = vpack.c.b16 %v3852, %v3852
      %v3878 = vpack.c.b16 %v3853, %v3853
      %v3879 = vpack.c.b16 %v3854, %v3854
      %v3880 = vpack.c.b16 %v3855, %v3855
      %v3881 = vpack.c.b16 %v3856, %v3856
      %v3882 = vpack.c.b16 %v3857, %v3857
      %v3883 = vpack.c.b16 %v3858, %v3858
      %v3884 = vpack.c.b16 %v3859, %v3859
      %v3885 = vpack.c.b16 %v3860, %v3860
      %v3886 = vpack.c.b16 %v3861, %v3861
      %v3887 = vpack.c.b16 %v3862, %v3862
      %v3888 = vpack.c.b16 %v3863, %v3863
      %v3889 = vpack.c.b16 %v3864, %v3864
      %v3890 = vpack.c.b16 %v3865, %v3865
      %v3891 = vpack.c.b16 %v3866, %v3866
      %v3892 = vpack.c.b16 %v3867, %v3867
      %v3893 = vpack.c.b16 %v3868, %v3868
      %v3894 = vpack.c.b16 %v3869, %v3869
      %v3895 = vpack.c.b16 %v3870, %v3870
      %v3896 = vpack.c.b16 %v3871, %v3871
      %v3897 = vpack.c.b16 %v3872, %v3872
      %v3898 = vpack.c.b16 %v3873, %v3873
      %v3899 = vpack.c.b16 %v3874, %v3874
      %3900 = vrot.lane.b32.xlu0 %v3875, 64
      %v3901 = vpop.permute.xlu0 %3900
      %3902 = vrot.lane.b32.xlu0 %v3876, 64
      %v3903 = vpop.permute.xlu0 %3902
      %3904 = vrot.lane.b32.xlu0 %v3877, 64
      %v3905 = vpop.permute.xlu0 %3904
      %3906 = vrot.lane.b32.xlu0 %v3878, 64
      %v3907 = vpop.permute.xlu0 %3906
      %3908 = vrot.lane.b32.xlu0 %v3879, 64
      %v3909 = vpop.permute.xlu0 %3908
      %3910 = vrot.lane.b32.xlu0 %v3880, 64
      %v3911 = vpop.permute.xlu0 %3910
      %3912 = vrot.lane.b32.xlu0 %v3881, 64
      %v3913 = vpop.permute.xlu0 %3912
      %3914 = vrot.lane.b32.xlu0 %v3882, 64
      %v3915 = vpop.permute.xlu0 %3914
      %3916 = vrot.lane.b32.xlu0 %v3883, 64
      %v3917 = vpop.permute.xlu0 %3916
      %3918 = vrot.lane.b32.xlu0 %v3884, 64
      %v3919 = vpop.permute.xlu0 %3918
      %3920 = vrot.lane.b32.xlu0 %v3885, 64
      %v3921 = vpop.permute.xlu0 %3920
      %3922 = vrot.lane.b32.xlu0 %v3886, 64
      %v3923 = vpop.permute.xlu0 %3922
      %3924 = vrot.lane.b32.xlu0 %v3887, 64
      %v3925 = vpop.permute.xlu0 %3924
      %3926 = vrot.lane.b32.xlu0 %v3888, 64
      %v3927 = vpop.permute.xlu0 %3926
      %3928 = vrot.lane.b32.xlu0 %v3889, 64
      %v3929 = vpop.permute.xlu0 %3928
      %3930 = vrot.lane.b32.xlu0 %v3890, 64
      %v3931 = vpop.permute.xlu0 %3930
      %3932 = vrot.lane.b32.xlu0 %v3891, 64
      %v3933 = vpop.permute.xlu0 %3932
      %3934 = vrot.lane.b32.xlu0 %v3892, 64
      %v3935 = vpop.permute.xlu0 %3934
      %3936 = vrot.lane.b32.xlu0 %v3893, 64
      %v3937 = vpop.permute.xlu0 %3936
      %3938 = vrot.lane.b32.xlu0 %v3894, 64
      %v3939 = vpop.permute.xlu0 %3938
      %3940 = vrot.lane.b32.xlu0 %v3895, 64
      %v3941 = vpop.permute.xlu0 %3940
      %3942 = vrot.lane.b32.xlu0 %v3896, 64
      %v3943 = vpop.permute.xlu0 %3942
      %3944 = vrot.lane.b32.xlu0 %v3897, 64
      %v3945 = vpop.permute.xlu0 %3944
      %3946 = vrot.lane.b32.xlu0 %v3898, 64
      %v3947 = vpop.permute.xlu0 %3946
      %3948 = vrot.lane.b32.xlu0 %v3899, 64
      %v3949 = vpop.permute.xlu0 %3948
      %3975 = vst.msk [vmem:[#allocation4 + $0x8] sm:$0xf] %vm497, %v3901
      %3976 = vst.msk [vmem:[#allocation4 + $0x1c] sm:$0xf] %vm497, %v3903
      %3977 = vst.msk [vmem:[#allocation4 + $0x30] sm:$0xf] %vm497, %v3905
      %3978 = vst.msk [vmem:[#allocation4 + $0x44] sm:$0xf] %vm497, %v3907
      %3979 = vst.msk [vmem:[#allocation4 + $0x58] sm:$0xf] %vm497, %v3909
      %3980 = vst.msk [vmem:[#allocation4 + $0x6c] sm:$0xf] %vm497, %v3911
      %3981 = vst.msk [vmem:[#allocation4 + $0x80] sm:$0xf] %vm497, %v3913
      %3982 = vst.msk [vmem:[#allocation4 + $0x94] sm:$0xf] %vm497, %v3915
      %3983 = vst.msk [vmem:[#allocation4 + $0xa8] sm:$0xf] %vm497, %v3917
      %3984 = vst.msk [vmem:[#allocation4 + $0xbc] sm:$0xf] %vm497, %v3919
      %3985 = vst.msk [vmem:[#allocation4 + $0xd0] sm:$0xf] %vm497, %v3921
      %3986 = vst.msk [vmem:[#allocation4 + $0xe4] sm:$0xf] %vm497, %v3923
      %3987 = vst.msk [vmem:[#allocation4 + $0xf8] sm:$0xf] %vm497, %v3925
      %3988 = vst.msk [vmem:[#allocation4 + $0x10c] sm:$0xf] %vm497, %v3927
      %3989 = vst.msk [vmem:[#allocation4 + $0x120] sm:$0xf] %vm497, %v3929
      %3990 = vst.msk [vmem:[#allocation4 + $0x134] sm:$0xf] %vm497, %v3931
      %3991 = vst.msk [vmem:[#allocation4 + $0x148] sm:$0xf] %vm497, %v3933
      %3992 = vst.msk [vmem:[#allocation4 + $0x15c] sm:$0xf] %vm497, %v3935
      %3993 = vst.msk [vmem:[#allocation4 + $0x170] sm:$0xf] %vm497, %v3937
      %3994 = vst.msk [vmem:[#allocation4 + $0x184] sm:$0xf] %vm497, %v3939
      %3995 = vst.msk [vmem:[#allocation4 + $0x198] sm:$0xf] %vm497, %v3941
      %3996 = vst.msk [vmem:[#allocation4 + $0x1ac] sm:$0xf] %vm497, %v3943
      %3997 = vst.msk [vmem:[#allocation4 + $0x1c0] sm:$0xf] %vm497, %v3945
      %3998 = vst.msk [vmem:[#allocation4 + $0x1d4] sm:$0xf] %vm497, %v3947
      %3999 = vst.msk [vmem:[#allocation4 + $0x1e8] sm:$0xf] %vm497, %v3949
      %v4000 = vld [vmem:[#allocation3 + $0x19] sm:$0xff]
      %v4001 = vld [vmem:[#allocation3 + $0x21] sm:$0xff]
      %v4002 = vld [vmem:[#allocation3 + $0x29] sm:$0xff]
      %v4003 = vld [vmem:[#allocation3 + $0x31] sm:$0xff]
      %v4004 = vld [vmem:[#allocation3 + $0x39] sm:$0xff]
      %v4005 = vld [vmem:[#allocation3 + $0x41] sm:$0xff]
      %v4006 = vld [vmem:[#allocation3 + $0x49] sm:$0xff]
      %v4007 = vld [vmem:[#allocation3 + $0x51] sm:$0xff]
      %v4008 = vld [vmem:[#allocation3 + $0x59] sm:$0xff]
      %v4009 = vld [vmem:[#allocation3 + $0x61] sm:$0xff]
      %v4010 = vld [vmem:[#allocation3 + $0x69] sm:$0xff]
      %v4011 = vld [vmem:[#allocation3 + $0x71] sm:$0xff]
      %v4012 = vld [vmem:[#allocation3 + $0x79] sm:$0xff]
      %v4013 = vld [vmem:[#allocation3 + $0x81] sm:$0xff]
      %v4014 = vld [vmem:[#allocation3 + $0x89] sm:$0xff]
      %v4015 = vld [vmem:[#allocation3 + $0x91] sm:$0xff]
      %v4016 = vld [vmem:[#allocation3 + $0x99] sm:$0xff]
      %v4017 = vld [vmem:[#allocation3 + $0xa1] sm:$0xff]
      %v4018 = vld [vmem:[#allocation3 + $0xa9] sm:$0xff]
      %v4019 = vld [vmem:[#allocation3 + $0xb1] sm:$0xff]
      %v4020 = vld [vmem:[#allocation3 + $0xb9] sm:$0xff]
      %v4021 = vld [vmem:[#allocation3 + $0xc1] sm:$0xff]
      %v4022 = vld [vmem:[#allocation3 + $0xc9] sm:$0xff]
      %v4023 = vld [vmem:[#allocation3 + $0xd1] sm:$0xff]
      %v4024 = vld [vmem:[#allocation3 + $0xd9] sm:$0xff]
      %v4025 = vpack.c.bf16 %v4001, %v4000
      %v4026 = vpack.c.bf16 %v4003, %v4002
      %v4027 = vpack.c.bf16 %v4005, %v4004
      %v4028 = vpack.c.bf16 %v4007, %v4006
      %v4029 = vpack.c.bf16 %v4009, %v4008
      %v4030 = vpack.c.bf16 %v4011, %v4010
      %v4031 = vpack.c.bf16 %v4013, %v4012
      %v4032 = vpack.c.bf16 %v4015, %v4014
      %v4033 = vpack.c.bf16 %v4017, %v4016
      %v4034 = vpack.c.bf16 %v4019, %v4018
      %v4035 = vpack.c.bf16 %v4021, %v4020
      %v4036 = vpack.c.bf16 %v4023, %v4022
      %v4037 = vpack.c.bf16 %v4024, %v4024
      %v4051 = vunpack.c.l.b16 %v4025
      %v4052 = vunpack.c.h.b16 %v4025
      %v4053 = vunpack.c.l.b16 %v4026
      %v4054 = vunpack.c.h.b16 %v4026
      %v4055 = vunpack.c.l.b16 %v4027
      %v4056 = vunpack.c.h.b16 %v4027
      %v4057 = vunpack.c.l.b16 %v4028
      %v4058 = vunpack.c.h.b16 %v4028
      %v4059 = vunpack.c.l.b16 %v4029
      %v4060 = vunpack.c.h.b16 %v4029
      %v4061 = vunpack.c.l.b16 %v4030
      %v4062 = vunpack.c.h.b16 %v4030
      %v4063 = vunpack.c.l.b16 %v4031
      %v4064 = vunpack.c.h.b16 %v4031
      %v4065 = vunpack.c.l.b16 %v4032
      %v4066 = vunpack.c.h.b16 %v4032
      %v4067 = vunpack.c.l.b16 %v4033
      %v4068 = vunpack.c.h.b16 %v4033
      %v4069 = vunpack.c.l.b16 %v4034
      %v4070 = vunpack.c.h.b16 %v4034
      %v4071 = vunpack.c.l.b16 %v4035
      %v4072 = vunpack.c.h.b16 %v4035
      %v4073 = vunpack.c.l.b16 %v4036
      %v4074 = vunpack.c.h.b16 %v4036
      %v4075 = vunpack.c.l.b16 %v4037
      %v4076 = vpack.c.b16 %v4051, %v4051
      %v4077 = vpack.c.b16 %v4052, %v4052
      %v4078 = vpack.c.b16 %v4053, %v4053
      %v4079 = vpack.c.b16 %v4054, %v4054
      %v4080 = vpack.c.b16 %v4055, %v4055
      %v4081 = vpack.c.b16 %v4056, %v4056
      %v4082 = vpack.c.b16 %v4057, %v4057
      %v4083 = vpack.c.b16 %v4058, %v4058
      %v4084 = vpack.c.b16 %v4059, %v4059
      %v4085 = vpack.c.b16 %v4060, %v4060
      %v4086 = vpack.c.b16 %v4061, %v4061
      %v4087 = vpack.c.b16 %v4062, %v4062
      %v4088 = vpack.c.b16 %v4063, %v4063
      %v4089 = vpack.c.b16 %v4064, %v4064
      %v4090 = vpack.c.b16 %v4065, %v4065
      %v4091 = vpack.c.b16 %v4066, %v4066
      %v4092 = vpack.c.b16 %v4067, %v4067
      %v4093 = vpack.c.b16 %v4068, %v4068
      %v4094 = vpack.c.b16 %v4069, %v4069
      %v4095 = vpack.c.b16 %v4070, %v4070
      %v4096 = vpack.c.b16 %v4071, %v4071
      %v4097 = vpack.c.b16 %v4072, %v4072
      %v4098 = vpack.c.b16 %v4073, %v4073
      %v4099 = vpack.c.b16 %v4074, %v4074
      %v4100 = vpack.c.b16 %v4075, %v4075
      %4126 = vst.msk [vmem:[#allocation4 + $0xc] sm:$0xf] %vm295, %v4076
      %4127 = vst.msk [vmem:[#allocation4 + $0x20] sm:$0xf] %vm295, %v4077
      %4128 = vst.msk [vmem:[#allocation4 + $0x34] sm:$0xf] %vm295, %v4078
      %4129 = vst.msk [vmem:[#allocation4 + $0x48] sm:$0xf] %vm295, %v4079
      %4130 = vst.msk [vmem:[#allocation4 + $0x5c] sm:$0xf] %vm295, %v4080
      %4131 = vst.msk [vmem:[#allocation4 + $0x70] sm:$0xf] %vm295, %v4081
      %4132 = vst.msk [vmem:[#allocation4 + $0x84] sm:$0xf] %vm295, %v4082
      %4133 = vst.msk [vmem:[#allocation4 + $0x98] sm:$0xf] %vm295, %v4083
      %4134 = vst.msk [vmem:[#allocation4 + $0xac] sm:$0xf] %vm295, %v4084
      %4135 = vst.msk [vmem:[#allocation4 + $0xc0] sm:$0xf] %vm295, %v4085
      %4136 = vst.msk [vmem:[#allocation4 + $0xd4] sm:$0xf] %vm295, %v4086
      %4137 = vst.msk [vmem:[#allocation4 + $0xe8] sm:$0xf] %vm295, %v4087
      %4138 = vst.msk [vmem:[#allocation4 + $0xfc] sm:$0xf] %vm295, %v4088
      %4139 = vst.msk [vmem:[#allocation4 + $0x110] sm:$0xf] %vm295, %v4089
      %4140 = vst.msk [vmem:[#allocation4 + $0x124] sm:$0xf] %vm295, %v4090
      %4141 = vst.msk [vmem:[#allocation4 + $0x138] sm:$0xf] %vm295, %v4091
      %4142 = vst.msk [vmem:[#allocation4 + $0x14c] sm:$0xf] %vm295, %v4092
      %4143 = vst.msk [vmem:[#allocation4 + $0x160] sm:$0xf] %vm295, %v4093
      %4144 = vst.msk [vmem:[#allocation4 + $0x174] sm:$0xf] %vm295, %v4094
      %4145 = vst.msk [vmem:[#allocation4 + $0x188] sm:$0xf] %vm295, %v4095
      %4146 = vst.msk [vmem:[#allocation4 + $0x19c] sm:$0xf] %vm295, %v4096
      %4147 = vst.msk [vmem:[#allocation4 + $0x1b0] sm:$0xf] %vm295, %v4097
      %4148 = vst.msk [vmem:[#allocation4 + $0x1c4] sm:$0xf] %vm295, %v4098
      %4149 = vst.msk [vmem:[#allocation4 + $0x1d8] sm:$0xf] %vm295, %v4099
      %4150 = vst.msk [vmem:[#allocation4 + $0x1ec] sm:$0xf] %vm295, %v4100
      %v4151 = vld [vmem:[#allocation3 + $0x1a] sm:$0xff]
      %v4152 = vld [vmem:[#allocation3 + $0x22] sm:$0xff]
      %v4153 = vld [vmem:[#allocation3 + $0x2a] sm:$0xff]
      %v4154 = vld [vmem:[#allocation3 + $0x32] sm:$0xff]
      %v4155 = vld [vmem:[#allocation3 + $0x3a] sm:$0xff]
      %v4156 = vld [vmem:[#allocation3 + $0x42] sm:$0xff]
      %v4157 = vld [vmem:[#allocation3 + $0x4a] sm:$0xff]
      %v4158 = vld [vmem:[#allocation3 + $0x52] sm:$0xff]
      %v4159 = vld [vmem:[#allocation3 + $0x5a] sm:$0xff]
      %v4160 = vld [vmem:[#allocation3 + $0x62] sm:$0xff]
      %v4161 = vld [vmem:[#allocation3 + $0x6a] sm:$0xff]
      %v4162 = vld [vmem:[#allocation3 + $0x72] sm:$0xff]
      %v4163 = vld [vmem:[#allocation3 + $0x7a] sm:$0xff]
      %v4164 = vld [vmem:[#allocation3 + $0x82] sm:$0xff]
      %v4165 = vld [vmem:[#allocation3 + $0x8a] sm:$0xff]
      %v4166 = vld [vmem:[#allocation3 + $0x92] sm:$0xff]
      %v4167 = vld [vmem:[#allocation3 + $0x9a] sm:$0xff]
      %v4168 = vld [vmem:[#allocation3 + $0xa2] sm:$0xff]
      %v4169 = vld [vmem:[#allocation3 + $0xaa] sm:$0xff]
      %v4170 = vld [vmem:[#allocation3 + $0xb2] sm:$0xff]
      %v4171 = vld [vmem:[#allocation3 + $0xba] sm:$0xff]
      %v4172 = vld [vmem:[#allocation3 + $0xc2] sm:$0xff]
      %v4173 = vld [vmem:[#allocation3 + $0xca] sm:$0xff]
      %v4174 = vld [vmem:[#allocation3 + $0xd2] sm:$0xff]
      %v4175 = vld [vmem:[#allocation3 + $0xda] sm:$0xff]
      %v4176 = vpack.c.bf16 %v4152, %v4151
      %v4177 = vpack.c.bf16 %v4154, %v4153
      %v4178 = vpack.c.bf16 %v4156, %v4155
      %v4179 = vpack.c.bf16 %v4158, %v4157
      %v4180 = vpack.c.bf16 %v4160, %v4159
      %v4181 = vpack.c.bf16 %v4162, %v4161
      %v4182 = vpack.c.bf16 %v4164, %v4163
      %v4183 = vpack.c.bf16 %v4166, %v4165
      %v4184 = vpack.c.bf16 %v4168, %v4167
      %v4185 = vpack.c.bf16 %v4170, %v4169
      %v4186 = vpack.c.bf16 %v4172, %v4171
      %v4187 = vpack.c.bf16 %v4174, %v4173
      %v4188 = vpack.c.bf16 %v4175, %v4175
      %v4202 = vunpack.c.l.b16 %v4176
      %v4203 = vunpack.c.h.b16 %v4176
      %v4204 = vunpack.c.l.b16 %v4177
      %v4205 = vunpack.c.h.b16 %v4177
      %v4206 = vunpack.c.l.b16 %v4178
      %v4207 = vunpack.c.h.b16 %v4178
      %v4208 = vunpack.c.l.b16 %v4179
      %v4209 = vunpack.c.h.b16 %v4179
      %v4210 = vunpack.c.l.b16 %v4180
      %v4211 = vunpack.c.h.b16 %v4180
      %v4212 = vunpack.c.l.b16 %v4181
      %v4213 = vunpack.c.h.b16 %v4181
      %v4214 = vunpack.c.l.b16 %v4182
      %v4215 = vunpack.c.h.b16 %v4182
      %v4216 = vunpack.c.l.b16 %v4183
      %v4217 = vunpack.c.h.b16 %v4183
      %v4218 = vunpack.c.l.b16 %v4184
      %v4219 = vunpack.c.h.b16 %v4184
      %v4220 = vunpack.c.l.b16 %v4185
      %v4221 = vunpack.c.h.b16 %v4185
      %v4222 = vunpack.c.l.b16 %v4186
      %v4223 = vunpack.c.h.b16 %v4186
      %v4224 = vunpack.c.l.b16 %v4187
      %v4225 = vunpack.c.h.b16 %v4187
      %v4226 = vunpack.c.l.b16 %v4188
      %v4227 = vpack.c.b16 %v4202, %v4202
      %v4228 = vpack.c.b16 %v4203, %v4203
      %v4229 = vpack.c.b16 %v4204, %v4204
      %v4230 = vpack.c.b16 %v4205, %v4205
      %v4231 = vpack.c.b16 %v4206, %v4206
      %v4232 = vpack.c.b16 %v4207, %v4207
      %v4233 = vpack.c.b16 %v4208, %v4208
      %v4234 = vpack.c.b16 %v4209, %v4209
      %v4235 = vpack.c.b16 %v4210, %v4210
      %v4236 = vpack.c.b16 %v4211, %v4211
      %v4237 = vpack.c.b16 %v4212, %v4212
      %v4238 = vpack.c.b16 %v4213, %v4213
      %v4239 = vpack.c.b16 %v4214, %v4214
      %v4240 = vpack.c.b16 %v4215, %v4215
      %v4241 = vpack.c.b16 %v4216, %v4216
      %v4242 = vpack.c.b16 %v4217, %v4217
      %v4243 = vpack.c.b16 %v4218, %v4218
      %v4244 = vpack.c.b16 %v4219, %v4219
      %v4245 = vpack.c.b16 %v4220, %v4220
      %v4246 = vpack.c.b16 %v4221, %v4221
      %v4247 = vpack.c.b16 %v4222, %v4222
      %v4248 = vpack.c.b16 %v4223, %v4223
      %v4249 = vpack.c.b16 %v4224, %v4224
      %v4250 = vpack.c.b16 %v4225, %v4225
      %v4251 = vpack.c.b16 %v4226, %v4226
      %4252 = vrot.lane.b32.xlu0 %v4227, 64
      %v4253 = vpop.permute.xlu0 %4252
      %4254 = vrot.lane.b32.xlu0 %v4228, 64
      %v4255 = vpop.permute.xlu0 %4254
      %4256 = vrot.lane.b32.xlu0 %v4229, 64
      %v4257 = vpop.permute.xlu0 %4256
      %4258 = vrot.lane.b32.xlu0 %v4230, 64
      %v4259 = vpop.permute.xlu0 %4258
      %4260 = vrot.lane.b32.xlu0 %v4231, 64
      %v4261 = vpop.permute.xlu0 %4260
      %4262 = vrot.lane.b32.xlu0 %v4232, 64
      %v4263 = vpop.permute.xlu0 %4262
      %4264 = vrot.lane.b32.xlu0 %v4233, 64
      %v4265 = vpop.permute.xlu0 %4264
      %4266 = vrot.lane.b32.xlu0 %v4234, 64
      %v4267 = vpop.permute.xlu0 %4266
      %4268 = vrot.lane.b32.xlu0 %v4235, 64
      %v4269 = vpop.permute.xlu0 %4268
      %4270 = vrot.lane.b32.xlu0 %v4236, 64
      %v4271 = vpop.permute.xlu0 %4270
      %4272 = vrot.lane.b32.xlu0 %v4237, 64
      %v4273 = vpop.permute.xlu0 %4272
      %4274 = vrot.lane.b32.xlu0 %v4238, 64
      %v4275 = vpop.permute.xlu0 %4274
      %4276 = vrot.lane.b32.xlu0 %v4239, 64
      %v4277 = vpop.permute.xlu0 %4276
      %4278 = vrot.lane.b32.xlu0 %v4240, 64
      %v4279 = vpop.permute.xlu0 %4278
      %4280 = vrot.lane.b32.xlu0 %v4241, 64
      %v4281 = vpop.permute.xlu0 %4280
      %4282 = vrot.lane.b32.xlu0 %v4242, 64
      %v4283 = vpop.permute.xlu0 %4282
      %4284 = vrot.lane.b32.xlu0 %v4243, 64
      %v4285 = vpop.permute.xlu0 %4284
      %4286 = vrot.lane.b32.xlu0 %v4244, 64
      %v4287 = vpop.permute.xlu0 %4286
      %4288 = vrot.lane.b32.xlu0 %v4245, 64
      %v4289 = vpop.permute.xlu0 %4288
      %4290 = vrot.lane.b32.xlu0 %v4246, 64
      %v4291 = vpop.permute.xlu0 %4290
      %4292 = vrot.lane.b32.xlu0 %v4247, 64
      %v4293 = vpop.permute.xlu0 %4292
      %4294 = vrot.lane.b32.xlu0 %v4248, 64
      %v4295 = vpop.permute.xlu0 %4294
      %4296 = vrot.lane.b32.xlu0 %v4249, 64
      %v4297 = vpop.permute.xlu0 %4296
      %4298 = vrot.lane.b32.xlu0 %v4250, 64
      %v4299 = vpop.permute.xlu0 %4298
      %4300 = vrot.lane.b32.xlu0 %v4251, 64
      %v4301 = vpop.permute.xlu0 %4300
      %4327 = vst.msk [vmem:[#allocation4 + $0xc] sm:$0xf] %vm497, %v4253
      %4328 = vst.msk [vmem:[#allocation4 + $0x20] sm:$0xf] %vm497, %v4255
      %4329 = vst.msk [vmem:[#allocation4 + $0x34] sm:$0xf] %vm497, %v4257
      %4330 = vst.msk [vmem:[#allocation4 + $0x48] sm:$0xf] %vm497, %v4259
      %4331 = vst.msk [vmem:[#allocation4 + $0x5c] sm:$0xf] %vm497, %v4261
      %4332 = vst.msk [vmem:[#allocation4 + $0x70] sm:$0xf] %vm497, %v4263
      %4333 = vst.msk [vmem:[#allocation4 + $0x84] sm:$0xf] %vm497, %v4265
      %4334 = vst.msk [vmem:[#allocation4 + $0x98] sm:$0xf] %vm497, %v4267
      %4335 = vst.msk [vmem:[#allocation4 + $0xac] sm:$0xf] %vm497, %v4269
      %4336 = vst.msk [vmem:[#allocation4 + $0xc0] sm:$0xf] %vm497, %v4271
      %4337 = vst.msk [vmem:[#allocation4 + $0xd4] sm:$0xf] %vm497, %v4273
      %4338 = vst.msk [vmem:[#allocation4 + $0xe8] sm:$0xf] %vm497, %v4275
      %4339 = vst.msk [vmem:[#allocation4 + $0xfc] sm:$0xf] %vm497, %v4277
      %4340 = vst.msk [vmem:[#allocation4 + $0x110] sm:$0xf] %vm497, %v4279
      %4341 = vst.msk [vmem:[#allocation4 + $0x124] sm:$0xf] %vm497, %v4281
      %4342 = vst.msk [vmem:[#allocation4 + $0x138] sm:$0xf] %vm497, %v4283
      %4343 = vst.msk [vmem:[#allocation4 + $0x14c] sm:$0xf] %vm497, %v4285
      %4344 = vst.msk [vmem:[#allocation4 + $0x160] sm:$0xf] %vm497, %v4287
      %4345 = vst.msk [vmem:[#allocation4 + $0x174] sm:$0xf] %vm497, %v4289
      %4346 = vst.msk [vmem:[#allocation4 + $0x188] sm:$0xf] %vm497, %v4291
      %4347 = vst.msk [vmem:[#allocation4 + $0x19c] sm:$0xf] %vm497, %v4293
      %4348 = vst.msk [vmem:[#allocation4 + $0x1b0] sm:$0xf] %vm497, %v4295
      %4349 = vst.msk [vmem:[#allocation4 + $0x1c4] sm:$0xf] %vm497, %v4297
      %4350 = vst.msk [vmem:[#allocation4 + $0x1d8] sm:$0xf] %vm497, %v4299
      %4351 = vst.msk [vmem:[#allocation4 + $0x1ec] sm:$0xf] %vm497, %v4301
      %v4352 = vld [vmem:[#allocation3 + $0x1b] sm:$0xff]
      %v4353 = vld [vmem:[#allocation3 + $0x23] sm:$0xff]
      %v4354 = vld [vmem:[#allocation3 + $0x2b] sm:$0xff]
      %v4355 = vld [vmem:[#allocation3 + $0x33] sm:$0xff]
      %v4356 = vld [vmem:[#allocation3 + $0x3b] sm:$0xff]
      %v4357 = vld [vmem:[#allocation3 + $0x43] sm:$0xff]
      %v4358 = vld [vmem:[#allocation3 + $0x4b] sm:$0xff]
      %v4359 = vld [vmem:[#allocation3 + $0x53] sm:$0xff]
      %v4360 = vld [vmem:[#allocation3 + $0x5b] sm:$0xff]
      %v4361 = vld [vmem:[#allocation3 + $0x63] sm:$0xff]
      %v4362 = vld [vmem:[#allocation3 + $0x6b] sm:$0xff]
      %v4363 = vld [vmem:[#allocation3 + $0x73] sm:$0xff]
      %v4364 = vld [vmem:[#allocation3 + $0x7b] sm:$0xff]
      %v4365 = vld [vmem:[#allocation3 + $0x83] sm:$0xff]
      %v4366 = vld [vmem:[#allocation3 + $0x8b] sm:$0xff]
      %v4367 = vld [vmem:[#allocation3 + $0x93] sm:$0xff]
      %v4368 = vld [vmem:[#allocation3 + $0x9b] sm:$0xff]
      %v4369 = vld [vmem:[#allocation3 + $0xa3] sm:$0xff]
      %v4370 = vld [vmem:[#allocation3 + $0xab] sm:$0xff]
      %v4371 = vld [vmem:[#allocation3 + $0xb3] sm:$0xff]
      %v4372 = vld [vmem:[#allocation3 + $0xbb] sm:$0xff]
      %v4373 = vld [vmem:[#allocation3 + $0xc3] sm:$0xff]
      %v4374 = vld [vmem:[#allocation3 + $0xcb] sm:$0xff]
      %v4375 = vld [vmem:[#allocation3 + $0xd3] sm:$0xff]
      %v4376 = vld [vmem:[#allocation3 + $0xdb] sm:$0xff]
      %v4377 = vpack.c.bf16 %v4353, %v4352
      %v4378 = vpack.c.bf16 %v4355, %v4354
      %v4379 = vpack.c.bf16 %v4357, %v4356
      %v4380 = vpack.c.bf16 %v4359, %v4358
      %v4381 = vpack.c.bf16 %v4361, %v4360
      %v4382 = vpack.c.bf16 %v4363, %v4362
      %v4383 = vpack.c.bf16 %v4365, %v4364
      %v4384 = vpack.c.bf16 %v4367, %v4366
      %v4385 = vpack.c.bf16 %v4369, %v4368
      %v4386 = vpack.c.bf16 %v4371, %v4370
      %v4387 = vpack.c.bf16 %v4373, %v4372
      %v4388 = vpack.c.bf16 %v4375, %v4374
      %v4389 = vpack.c.bf16 %v4376, %v4376
      %v4403 = vunpack.c.l.b16 %v4377
      %v4404 = vunpack.c.h.b16 %v4377
      %v4405 = vunpack.c.l.b16 %v4378
      %v4406 = vunpack.c.h.b16 %v4378
      %v4407 = vunpack.c.l.b16 %v4379
      %v4408 = vunpack.c.h.b16 %v4379
      %v4409 = vunpack.c.l.b16 %v4380
      %v4410 = vunpack.c.h.b16 %v4380
      %v4411 = vunpack.c.l.b16 %v4381
      %v4412 = vunpack.c.h.b16 %v4381
      %v4413 = vunpack.c.l.b16 %v4382
      %v4414 = vunpack.c.h.b16 %v4382
      %v4415 = vunpack.c.l.b16 %v4383
      %v4416 = vunpack.c.h.b16 %v4383
      %v4417 = vunpack.c.l.b16 %v4384
      %v4418 = vunpack.c.h.b16 %v4384
      %v4419 = vunpack.c.l.b16 %v4385
      %v4420 = vunpack.c.h.b16 %v4385
      %v4421 = vunpack.c.l.b16 %v4386
      %v4422 = vunpack.c.h.b16 %v4386
      %v4423 = vunpack.c.l.b16 %v4387
      %v4424 = vunpack.c.h.b16 %v4387
      %v4425 = vunpack.c.l.b16 %v4388
      %v4426 = vunpack.c.h.b16 %v4388
      %v4427 = vunpack.c.l.b16 %v4389
      %v4428 = vpack.c.b16 %v4403, %v4403
      %v4429 = vpack.c.b16 %v4404, %v4404
      %v4430 = vpack.c.b16 %v4405, %v4405
      %v4431 = vpack.c.b16 %v4406, %v4406
      %v4432 = vpack.c.b16 %v4407, %v4407
      %v4433 = vpack.c.b16 %v4408, %v4408
      %v4434 = vpack.c.b16 %v4409, %v4409
      %v4435 = vpack.c.b16 %v4410, %v4410
      %v4436 = vpack.c.b16 %v4411, %v4411
      %v4437 = vpack.c.b16 %v4412, %v4412
      %v4438 = vpack.c.b16 %v4413, %v4413
      %v4439 = vpack.c.b16 %v4414, %v4414
      %v4440 = vpack.c.b16 %v4415, %v4415
      %v4441 = vpack.c.b16 %v4416, %v4416
      %v4442 = vpack.c.b16 %v4417, %v4417
      %v4443 = vpack.c.b16 %v4418, %v4418
      %v4444 = vpack.c.b16 %v4419, %v4419
      %v4445 = vpack.c.b16 %v4420, %v4420
      %v4446 = vpack.c.b16 %v4421, %v4421
      %v4447 = vpack.c.b16 %v4422, %v4422
      %v4448 = vpack.c.b16 %v4423, %v4423
      %v4449 = vpack.c.b16 %v4424, %v4424
      %v4450 = vpack.c.b16 %v4425, %v4425
      %v4451 = vpack.c.b16 %v4426, %v4426
      %v4452 = vpack.c.b16 %v4427, %v4427
      %4478 = vst.msk [vmem:[#allocation4 + $0x10] sm:$0xf] %vm295, %v4428
      %4479 = vst.msk [vmem:[#allocation4 + $0x24] sm:$0xf] %vm295, %v4429
      %4480 = vst.msk [vmem:[#allocation4 + $0x38] sm:$0xf] %vm295, %v4430
      %4481 = vst.msk [vmem:[#allocation4 + $0x4c] sm:$0xf] %vm295, %v4431
      %4482 = vst.msk [vmem:[#allocation4 + $0x60] sm:$0xf] %vm295, %v4432
      %4483 = vst.msk [vmem:[#allocation4 + $0x74] sm:$0xf] %vm295, %v4433
      %4484 = vst.msk [vmem:[#allocation4 + $0x88] sm:$0xf] %vm295, %v4434
      %4485 = vst.msk [vmem:[#allocation4 + $0x9c] sm:$0xf] %vm295, %v4435
      %4486 = vst.msk [vmem:[#allocation4 + $0xb0] sm:$0xf] %vm295, %v4436
      %4487 = vst.msk [vmem:[#allocation4 + $0xc4] sm:$0xf] %vm295, %v4437
      %4488 = vst.msk [vmem:[#allocation4 + $0xd8] sm:$0xf] %vm295, %v4438
      %4489 = vst.msk [vmem:[#allocation4 + $0xec] sm:$0xf] %vm295, %v4439
      %4490 = vst.msk [vmem:[#allocation4 + $0x100] sm:$0xf] %vm295, %v4440
      %4491 = vst.msk [vmem:[#allocation4 + $0x114] sm:$0xf] %vm295, %v4441
      %4492 = vst.msk [vmem:[#allocation4 + $0x128] sm:$0xf] %vm295, %v4442
      %4493 = vst.msk [vmem:[#allocation4 + $0x13c] sm:$0xf] %vm295, %v4443
      %4494 = vst.msk [vmem:[#allocation4 + $0x150] sm:$0xf] %vm295, %v4444
      %4495 = vst.msk [vmem:[#allocation4 + $0x164] sm:$0xf] %vm295, %v4445
      %4496 = vst.msk [vmem:[#allocation4 + $0x178] sm:$0xf] %vm295, %v4446
      %4497 = vst.msk [vmem:[#allocation4 + $0x18c] sm:$0xf] %vm295, %v4447
      %4498 = vst.msk [vmem:[#allocation4 + $0x1a0] sm:$0xf] %vm295, %v4448
      %4499 = vst.msk [vmem:[#allocation4 + $0x1b4] sm:$0xf] %vm295, %v4449
      %4500 = vst.msk [vmem:[#allocation4 + $0x1c8] sm:$0xf] %vm295, %v4450
      %4501 = vst.msk [vmem:[#allocation4 + $0x1dc] sm:$0xf] %vm295, %v4451
      %4502 = vst.msk [vmem:[#allocation4 + $0x1f0] sm:$0xf] %vm295, %v4452
      %v4503 = vld [vmem:[#allocation4] sm:$0xff]
      %v4504 = vld [vmem:[#allocation4 + $0x8] sm:$0xff]
      %v4505 = vld [vmem:[#allocation4 + $0x10] sm:$0xf]
      %v4506 = vld [vmem:[#allocation4 + $0x14] sm:$0xff]
      %v4507 = vld [vmem:[#allocation4 + $0x1c] sm:$0xff]
      %v4508 = vld [vmem:[#allocation4 + $0x24] sm:$0xf]
      %v4509 = vld [vmem:[#allocation4 + $0x28] sm:$0xff]
      %v4510 = vld [vmem:[#allocation4 + $0x30] sm:$0xff]
      %v4511 = vld [vmem:[#allocation4 + $0x38] sm:$0xf]
      %v4512 = vld [vmem:[#allocation4 + $0x3c] sm:$0xff]
      %v4513 = vld [vmem:[#allocation4 + $0x44] sm:$0xff]
      %v4514 = vld [vmem:[#allocation4 + $0x4c] sm:$0xf]
      %v4515 = vld [vmem:[#allocation4 + $0x50] sm:$0xff]
      %v4516 = vld [vmem:[#allocation4 + $0x58] sm:$0xff]
      %v4517 = vld [vmem:[#allocation4 + $0x60] sm:$0xf]
      %v4518 = vld [vmem:[#allocation4 + $0x64] sm:$0xff]
      %v4519 = vld [vmem:[#allocation4 + $0x6c] sm:$0xff]
      %v4520 = vld [vmem:[#allocation4 + $0x74] sm:$0xf]
      %v4521 = vld [vmem:[#allocation4 + $0x78] sm:$0xff]
      %v4522 = vld [vmem:[#allocation4 + $0x80] sm:$0xff]
      %v4523 = vld [vmem:[#allocation4 + $0x88] sm:$0xf]
      %v4524 = vld [vmem:[#allocation4 + $0x8c] sm:$0xff]
      %v4525 = vld [vmem:[#allocation4 + $0x94] sm:$0xff]
      %v4526 = vld [vmem:[#allocation4 + $0x9c] sm:$0xf]
      %v4527 = vld [vmem:[#allocation4 + $0xa0] sm:$0xff]
      %v4528 = vld [vmem:[#allocation4 + $0xa8] sm:$0xff]
      %v4529 = vld [vmem:[#allocation4 + $0xb0] sm:$0xf]
      %v4530 = vld [vmem:[#allocation4 + $0xb4] sm:$0xff]
      %v4531 = vld [vmem:[#allocation4 + $0xbc] sm:$0xff]
      %v4532 = vld [vmem:[#allocation4 + $0xc4] sm:$0xf]
      %v4533 = vld [vmem:[#allocation4 + $0xc8] sm:$0xff]
      %v4534 = vld [vmem:[#allocation4 + $0xd0] sm:$0xff]
      %v4535 = vld [vmem:[#allocation4 + $0xd8] sm:$0xf]
      %v4536 = vld [vmem:[#allocation4 + $0xdc] sm:$0xff]
      %v4537 = vld [vmem:[#allocation4 + $0xe4] sm:$0xff]
      %v4538 = vld [vmem:[#allocation4 + $0xec] sm:$0xf]
      %v4539 = vld [vmem:[#allocation4 + $0xf0] sm:$0xff]
      %v4540 = vld [vmem:[#allocation4 + $0xf8] sm:$0xff]
      %v4541 = vld [vmem:[#allocation4 + $0x100] sm:$0xf]
      %v4542 = vld [vmem:[#allocation4 + $0x104] sm:$0xff]
      %v4543 = vld [vmem:[#allocation4 + $0x10c] sm:$0xff]
      %v4544 = vld [vmem:[#allocation4 + $0x114] sm:$0xf]
      %v4545 = vld [vmem:[#allocation4 + $0x118] sm:$0xff]
      %v4546 = vld [vmem:[#allocation4 + $0x120] sm:$0xff]
      %v4547 = vld [vmem:[#allocation4 + $0x128] sm:$0xf]
      %v4548 = vld [vmem:[#allocation4 + $0x12c] sm:$0xff]
      %v4549 = vld [vmem:[#allocation4 + $0x134] sm:$0xff]
      %v4550 = vld [vmem:[#allocation4 + $0x13c] sm:$0xf]
      %v4551 = vld [vmem:[#allocation4 + $0x140] sm:$0xff]
      %v4552 = vld [vmem:[#allocation4 + $0x148] sm:$0xff]
      %v4553 = vld [vmem:[#allocation4 + $0x150] sm:$0xf]
      %v4554 = vld [vmem:[#allocation4 + $0x154] sm:$0xff]
      %v4555 = vld [vmem:[#allocation4 + $0x15c] sm:$0xff]
      %v4556 = vld [vmem:[#allocation4 + $0x164] sm:$0xf]
      %v4557 = vld [vmem:[#allocation4 + $0x168] sm:$0xff]
      %v4558 = vld [vmem:[#allocation4 + $0x170] sm:$0xff]
      %v4559 = vld [vmem:[#allocation4 + $0x178] sm:$0xf]
      %v4560 = vld [vmem:[#allocation4 + $0x17c] sm:$0xff]
      %v4561 = vld [vmem:[#allocation4 + $0x184] sm:$0xff]
      %v4562 = vld [vmem:[#allocation4 + $0x18c] sm:$0xf]
      %v4563 = vld [vmem:[#allocation4 + $0x190] sm:$0xff]
      %v4564 = vld [vmem:[#allocation4 + $0x198] sm:$0xff]
      %v4565 = vld [vmem:[#allocation4 + $0x1a0] sm:$0xf]
      %v4566 = vld [vmem:[#allocation4 + $0x1a4] sm:$0xff]
      %v4567 = vld [vmem:[#allocation4 + $0x1ac] sm:$0xff]
      %v4568 = vld [vmem:[#allocation4 + $0x1b4] sm:$0xf]
      %v4569 = vld [vmem:[#allocation4 + $0x1b8] sm:$0xff]
      %v4570 = vld [vmem:[#allocation4 + $0x1c0] sm:$0xff]
      %v4571 = vld [vmem:[#allocation4 + $0x1c8] sm:$0xf]
      %v4572 = vld [vmem:[#allocation4 + $0x1cc] sm:$0xff]
      %v4573 = vld [vmem:[#allocation4 + $0x1d4] sm:$0xff]
      %v4574 = vld [vmem:[#allocation4 + $0x1dc] sm:$0xf]
      %v4575 = vld [vmem:[#allocation4 + $0x1e0] sm:$0xff]
      %v4576 = vld [vmem:[#allocation4 + $0x1e8] sm:$0xff]
      %v4577 = vld [vmem:[#allocation4 + $0x1f0] sm:$0xf]
      %s4578 = smul.u32 %s2943, 72
      %s4579 = smul.addr %s4578, 4
      %s4580 = scalar_lea.vmem %s1, %s4579
      %v4581 = vld [vmem:[%s4580] sm:$0xf]
      %v4582 = vld [vmem:[%s4580 + $0x4] sm:$0xf]
      %v4583 = vld [vmem:[%s4580 + $0x8] sm:$0xf]
      %v4584 = vld [vmem:[%s4580 + $0xc] sm:$0xf]
      %v4585 = vld [vmem:[%s4580 + $0x10] sm:$0xf]
      %v4586 = vld [vmem:[%s4580 + $0x14] sm:$0xf]
      %v4587 = vld [vmem:[%s4580 + $0x18] sm:$0xf]
      %v4588 = vld [vmem:[%s4580 + $0x1c] sm:$0xf]
      %v4589 = vld [vmem:[%s4580 + $0x20] sm:$0xf]
      %v4590 = vld [vmem:[%s4580 + $0x24] sm:$0xf]
      %v4591 = vld [vmem:[%s4580 + $0x28] sm:$0xf]
      %v4592 = vld [vmem:[%s4580 + $0x2c] sm:$0xf]
      %v4593 = vld [vmem:[%s4580 + $0x30] sm:$0xf]
      %v4594 = vld [vmem:[%s4580 + $0x34] sm:$0xf]
      %v4595 = vld [vmem:[%s4580 + $0x38] sm:$0xf]
      %v4596 = vld [vmem:[%s4580 + $0x3c] sm:$0xf]
      %v4597 = vld [vmem:[%s4580 + $0x40] sm:$0xf]
      %v4598 = vld [vmem:[%s4580 + $0x44] sm:$0xf]
      %v4599 = vld [vmem:[%s4580 + $0x48] sm:$0xf]
      %v4600 = vld [vmem:[%s4580 + $0x4c] sm:$0xf]
      %v4601 = vld [vmem:[%s4580 + $0x50] sm:$0xf]
      %v4602 = vld [vmem:[%s4580 + $0x54] sm:$0xf]
      %v4603 = vld [vmem:[%s4580 + $0x58] sm:$0xf]
      %v4604 = vld [vmem:[%s4580 + $0x5c] sm:$0xf]
      %v4605 = vld [vmem:[%s4580 + $0x60] sm:$0xf]
      %v4606 = vld [vmem:[%s4580 + $0x64] sm:$0xf]
      %v4607 = vld [vmem:[%s4580 + $0x68] sm:$0xf]
      %v4608 = vld [vmem:[%s4580 + $0x6c] sm:$0xf]
      %v4609 = vld [vmem:[%s4580 + $0x70] sm:$0xf]
      %v4610 = vld [vmem:[%s4580 + $0x74] sm:$0xf]
      %v4611 = vld [vmem:[%s4580 + $0x78] sm:$0xf]
      %v4612 = vld [vmem:[%s4580 + $0x7c] sm:$0xf]
      %v4613 = vld [vmem:[%s4580 + $0x80] sm:$0xf]
      %v4614 = vld [vmem:[%s4580 + $0x84] sm:$0xf]
      %v4615 = vld [vmem:[%s4580 + $0x88] sm:$0xf]
      %v4616 = vld [vmem:[%s4580 + $0x8c] sm:$0xf]
      %v4617 = vld [vmem:[%s4580 + $0x90] sm:$0xf]
      %v4618 = vld [vmem:[%s4580 + $0x94] sm:$0xf]
      %v4619 = vld [vmem:[%s4580 + $0x98] sm:$0xf]
      %v4620 = vld [vmem:[%s4580 + $0x9c] sm:$0xf]
      %v4621 = vld [vmem:[%s4580 + $0xa0] sm:$0xf]
      %v4622 = vld [vmem:[%s4580 + $0xa4] sm:$0xf]
      %v4623 = vld [vmem:[%s4580 + $0xa8] sm:$0xf]
      %v4624 = vld [vmem:[%s4580 + $0xac] sm:$0xf]
      %v4625 = vld [vmem:[%s4580 + $0xb0] sm:$0xf]
      %v4626 = vld [vmem:[%s4580 + $0xb4] sm:$0xf]
      %v4627 = vld [vmem:[%s4580 + $0xb8] sm:$0xf]
      %v4628 = vld [vmem:[%s4580 + $0xbc] sm:$0xf]
      %v4629 = vld [vmem:[%s4580 + $0xc0] sm:$0xf]
      %v4630 = vld [vmem:[%s4580 + $0xc4] sm:$0xf]
      %v4631 = vld [vmem:[%s4580 + $0xc8] sm:$0xf]
      %v4632 = vld [vmem:[%s4580 + $0xcc] sm:$0xf]
      %v4633 = vld [vmem:[%s4580 + $0xd0] sm:$0xf]
      %v4634 = vld [vmem:[%s4580 + $0xd4] sm:$0xf]
      %v4635 = vld [vmem:[%s4580 + $0xd8] sm:$0xf]
      %v4636 = vld [vmem:[%s4580 + $0xdc] sm:$0xf]
      %v4637 = vld [vmem:[%s4580 + $0xe0] sm:$0xf]
      %v4638 = vld [vmem:[%s4580 + $0xe4] sm:$0xf]
      %v4639 = vld [vmem:[%s4580 + $0xe8] sm:$0xf]
      %v4640 = vld [vmem:[%s4580 + $0xec] sm:$0xf]
      %v4641 = vld [vmem:[%s4580 + $0xf0] sm:$0xf]
      %v4642 = vld [vmem:[%s4580 + $0xf4] sm:$0xf]
      %v4643 = vld [vmem:[%s4580 + $0xf8] sm:$0xf]
      %v4644 = vld [vmem:[%s4580 + $0xfc] sm:$0xf]
      %v4645 = vld [vmem:[%s4580 + $0x100] sm:$0xf]
      %v4646 = vld [vmem:[%s4580 + $0x104] sm:$0xf]
      %v4647 = vld [vmem:[%s4580 + $0x108] sm:$0xf]
      %v4648 = vld [vmem:[%s4580 + $0x10c] sm:$0xf]
      %v4649 = vld [vmem:[%s4580 + $0x110] sm:$0xf]
      %v4650 = vld [vmem:[%s4580 + $0x114] sm:$0xf]
      %v4651 = vld [vmem:[%s4580 + $0x118] sm:$0xf]
      %v4652 = vld [vmem:[%s4580 + $0x11c] sm:$0xf]
      %s4653 = scalar_lea.vmem %s2, %s2943
      %v4654 = vld [vmem:[%s4653] sm:$0x1]
      %v4656 = vlaneseq
      %v4657 = vshrl.u32 %v4656, 7
      %v4658 = vsub.s32 0, %v4657
      %v4659 = vrot.slane %v4654, %v4658
      %v4736 = vunpack.c.l.b16 %v4503
      %v4737 = vunpack.c.h.b16 %v4503
      %v4738 = vunpack.c.l.b16 %v4504
      %v4739 = vunpack.c.h.b16 %v4504
      %v4740 = vunpack.c.l.b16 %v4505
      %v4741 = vunpack.c.l.b16 %v4506
      %v4742 = vunpack.c.h.b16 %v4506
      %v4743 = vunpack.c.l.b16 %v4507
      %v4744 = vunpack.c.h.b16 %v4507
      %v4745 = vunpack.c.l.b16 %v4508
      %v4746 = vunpack.c.l.b16 %v4509
      %v4747 = vunpack.c.h.b16 %v4509
      %v4748 = vunpack.c.l.b16 %v4510
      %v4749 = vunpack.c.h.b16 %v4510
      %v4750 = vunpack.c.l.b16 %v4511
      %v4751 = vunpack.c.l.b16 %v4512
      %v4752 = vunpack.c.h.b16 %v4512
      %v4753 = vunpack.c.l.b16 %v4513
      %v4754 = vunpack.c.h.b16 %v4513
      %v4755 = vunpack.c.l.b16 %v4514
      %v4756 = vunpack.c.l.b16 %v4515
      %v4757 = vunpack.c.h.b16 %v4515
      %v4758 = vunpack.c.l.b16 %v4516
      %v4759 = vunpack.c.h.b16 %v4516
      %v4760 = vunpack.c.l.b16 %v4517
      %v4761 = vunpack.c.l.b16 %v4518
      %v4762 = vunpack.c.h.b16 %v4518
      %v4763 = vunpack.c.l.b16 %v4519
      %v4764 = vunpack.c.h.b16 %v4519
      %v4765 = vunpack.c.l.b16 %v4520
      %v4766 = vunpack.c.l.b16 %v4521
      %v4767 = vunpack.c.h.b16 %v4521
      %v4768 = vunpack.c.l.b16 %v4522
      %v4769 = vunpack.c.h.b16 %v4522
      %v4770 = vunpack.c.l.b16 %v4523
      %v4771 = vunpack.c.l.b16 %v4524
      %v4772 = vunpack.c.h.b16 %v4524
      %v4773 = vunpack.c.l.b16 %v4525
      %v4774 = vunpack.c.h.b16 %v4525
      %v4775 = vunpack.c.l.b16 %v4526
      %v4776 = vunpack.c.l.b16 %v4527
      %v4777 = vunpack.c.h.b16 %v4527
      %v4778 = vunpack.c.l.b16 %v4528
      %v4779 = vunpack.c.h.b16 %v4528
      %v4780 = vunpack.c.l.b16 %v4529
      %v4781 = vunpack.c.l.b16 %v4530
      %v4782 = vunpack.c.h.b16 %v4530
      %v4783 = vunpack.c.l.b16 %v4531
      %v4784 = vunpack.c.h.b16 %v4531
      %v4785 = vunpack.c.l.b16 %v4532
      %v4786 = vunpack.c.l.b16 %v4533
      %v4787 = vunpack.c.h.b16 %v4533
      %v4788 = vunpack.c.l.b16 %v4534
      %v4789 = vunpack.c.h.b16 %v4534
      %v4790 = vunpack.c.l.b16 %v4535
      %v4791 = vunpack.c.l.b16 %v4536
      %v4792 = vunpack.c.h.b16 %v4536
      %v4793 = vunpack.c.l.b16 %v4537
      %v4794 = vunpack.c.h.b16 %v4537
      %v4795 = vunpack.c.l.b16 %v4538
      %v4796 = vunpack.c.l.b16 %v4539
      %v4797 = vunpack.c.h.b16 %v4539
      %v4798 = vunpack.c.l.b16 %v4540
      %v4799 = vunpack.c.h.b16 %v4540
      %v4800 = vunpack.c.l.b16 %v4541
      %v4801 = vunpack.c.l.b16 %v4542
      %v4802 = vunpack.c.h.b16 %v4542
      %v4803 = vunpack.c.l.b16 %v4543
      %v4804 = vunpack.c.h.b16 %v4543
      %v4805 = vunpack.c.l.b16 %v4544
      %v4806 = vunpack.c.l.b16 %v4545
      %v4807 = vunpack.c.h.b16 %v4545
      %v4808 = vunpack.c.l.b16 %v4546
      %v4809 = vunpack.c.h.b16 %v4546
      %v4810 = vunpack.c.l.b16 %v4547
      %v4811 = vunpack.c.l.b16 %v4548
      %v4812 = vunpack.c.h.b16 %v4548
      %v4813 = vunpack.c.l.b16 %v4549
      %v4814 = vunpack.c.h.b16 %v4549
      %v4815 = vunpack.c.l.b16 %v4550
      %v4816 = vunpack.c.l.b16 %v4551
      %v4817 = vunpack.c.h.b16 %v4551
      %v4818 = vunpack.c.l.b16 %v4552
      %v4819 = vunpack.c.h.b16 %v4552
      %v4820 = vunpack.c.l.b16 %v4553
      %v4821 = vunpack.c.l.b16 %v4554
      %v4822 = vunpack.c.h.b16 %v4554
      %v4823 = vunpack.c.l.b16 %v4555
      %v4824 = vunpack.c.h.b16 %v4555
      %v4825 = vunpack.c.l.b16 %v4556
      %v4826 = vunpack.c.l.b16 %v4557
      %v4827 = vunpack.c.h.b16 %v4557
      %v4828 = vunpack.c.l.b16 %v4558
      %v4829 = vunpack.c.h.b16 %v4558
      %v4830 = vunpack.c.l.b16 %v4559
      %v4831 = vunpack.c.l.b16 %v4560
      %v4832 = vunpack.c.h.b16 %v4560
      %v4833 = vunpack.c.l.b16 %v4561
      %v4834 = vunpack.c.h.b16 %v4561
      %v4835 = vunpack.c.l.b16 %v4562
      %v4836 = vunpack.c.l.b16 %v4563
      %v4837 = vunpack.c.h.b16 %v4563
      %v4838 = vunpack.c.l.b16 %v4564
      %v4839 = vunpack.c.h.b16 %v4564
      %v4840 = vunpack.c.l.b16 %v4565
      %v4841 = vunpack.c.l.b16 %v4566
      %v4842 = vunpack.c.h.b16 %v4566
      %v4843 = vunpack.c.l.b16 %v4567
      %v4844 = vunpack.c.h.b16 %v4567
      %v4845 = vunpack.c.l.b16 %v4568
      %v4846 = vunpack.c.l.b16 %v4569
      %v4847 = vunpack.c.h.b16 %v4569
      %v4848 = vunpack.c.l.b16 %v4570
      %v4849 = vunpack.c.h.b16 %v4570
      %v4850 = vunpack.c.l.b16 %v4571
      %v4851 = vunpack.c.l.b16 %v4572
      %v4852 = vunpack.c.h.b16 %v4572
      %v4853 = vunpack.c.l.b16 %v4573
      %v4854 = vunpack.c.h.b16 %v4573
      %v4855 = vunpack.c.l.b16 %v4574
      %v4856 = vunpack.c.l.b16 %v4575
      %v4857 = vunpack.c.h.b16 %v4575
      %v4858 = vunpack.c.l.b16 %v4576
      %v4859 = vunpack.c.h.b16 %v4576
      %v4860 = vunpack.c.l.b16 %v4577
      %v4861 = vpack.c.b16 %v4741, %v4736
      %v4862 = vpack.c.b16 %v4742, %v4737
      %v4863 = vpack.c.b16 %v4743, %v4738
      %v4864 = vpack.c.b16 %v4744, %v4739
      %v4865 = vpack.c.b16 %v4745, %v4740
      %v4866 = vpack.c.b16 %v4751, %v4746
      %v4867 = vpack.c.b16 %v4752, %v4747
      %v4868 = vpack.c.b16 %v4753, %v4748
      %v4869 = vpack.c.b16 %v4754, %v4749
      %v4870 = vpack.c.b16 %v4755, %v4750
      %v4871 = vpack.c.b16 %v4761, %v4756
      %v4872 = vpack.c.b16 %v4762, %v4757
      %v4873 = vpack.c.b16 %v4763, %v4758
      %v4874 = vpack.c.b16 %v4764, %v4759
      %v4875 = vpack.c.b16 %v4765, %v4760
      %v4876 = vpack.c.b16 %v4771, %v4766
      %v4877 = vpack.c.b16 %v4772, %v4767
      %v4878 = vpack.c.b16 %v4773, %v4768
      %v4879 = vpack.c.b16 %v4774, %v4769
      %v4880 = vpack.c.b16 %v4775, %v4770
      %v4881 = vpack.c.b16 %v4781, %v4776
      %v4882 = vpack.c.b16 %v4782, %v4777
      %v4883 = vpack.c.b16 %v4783, %v4778
      %v4884 = vpack.c.b16 %v4784, %v4779
      %v4885 = vpack.c.b16 %v4785, %v4780
      %v4886 = vpack.c.b16 %v4791, %v4786
      %v4887 = vpack.c.b16 %v4792, %v4787
      %v4888 = vpack.c.b16 %v4793, %v4788
      %v4889 = vpack.c.b16 %v4794, %v4789
      %v4890 = vpack.c.b16 %v4795, %v4790
      %v4891 = vpack.c.b16 %v4801, %v4796
      %v4892 = vpack.c.b16 %v4802, %v4797
      %v4893 = vpack.c.b16 %v4803, %v4798
      %v4894 = vpack.c.b16 %v4804, %v4799
      %v4895 = vpack.c.b16 %v4805, %v4800
      %v4896 = vpack.c.b16 %v4811, %v4806
      %v4897 = vpack.c.b16 %v4812, %v4807
      %v4898 = vpack.c.b16 %v4813, %v4808
      %v4899 = vpack.c.b16 %v4814, %v4809
      %v4900 = vpack.c.b16 %v4815, %v4810
      %v4901 = vpack.c.b16 %v4821, %v4816
      %v4902 = vpack.c.b16 %v4822, %v4817
      %v4903 = vpack.c.b16 %v4823, %v4818
      %v4904 = vpack.c.b16 %v4824, %v4819
      %v4905 = vpack.c.b16 %v4825, %v4820
      %v4906 = vpack.c.b16 %v4831, %v4826
      %v4907 = vpack.c.b16 %v4832, %v4827
      %v4908 = vpack.c.b16 %v4833, %v4828
      %v4909 = vpack.c.b16 %v4834, %v4829
      %v4910 = vpack.c.b16 %v4835, %v4830
      %v4911 = vpack.c.b16 %v4841, %v4836
      %v4912 = vpack.c.b16 %v4842, %v4837
      %v4913 = vpack.c.b16 %v4843, %v4838
      %v4914 = vpack.c.b16 %v4844, %v4839
      %v4915 = vpack.c.b16 %v4845, %v4840
      %v4916 = vpack.c.b16 %v4851, %v4846
      %v4917 = vpack.c.b16 %v4852, %v4847
      %v4918 = vpack.c.b16 %v4853, %v4848
      %v4919 = vpack.c.b16 %v4854, %v4849
      %v4920 = vpack.c.b16 %v4855, %v4850
      %v4921 = vpack.c.b16 %v4856, %v4856
      %v4922 = vpack.c.b16 %v4857, %v4857
      %v4923 = vpack.c.b16 %v4858, %v4858
      %v4924 = vpack.c.b16 %v4859, %v4859
      %v4925 = vpack.c.b16 %v4860, %v4860
      %v5050 = vunpack.c.l.b16 %v4581
      %v5051 = vunpack.c.l.b16 %v4582
      %v5052 = vunpack.c.l.b16 %v4583
      %v5053 = vunpack.c.l.b16 %v4584
      %v5054 = vunpack.c.l.b16 %v4585
      %v5055 = vunpack.c.l.b16 %v4586
      %v5056 = vunpack.c.l.b16 %v4587
      %v5057 = vunpack.c.l.b16 %v4588
      %v5058 = vunpack.c.l.b16 %v4589
      %v5059 = vunpack.c.l.b16 %v4590
      %v5060 = vunpack.c.l.b16 %v4591
      %v5061 = vunpack.c.l.b16 %v4592
      %v5062 = vunpack.c.l.b16 %v4593
      %v5063 = vunpack.c.l.b16 %v4594
      %v5064 = vunpack.c.l.b16 %v4595
      %v5065 = vunpack.c.l.b16 %v4596
      %v5066 = vunpack.c.l.b16 %v4597
      %v5067 = vunpack.c.l.b16 %v4598
      %v5068 = vunpack.c.l.b16 %v4599
      %v5069 = vunpack.c.l.b16 %v4600
      %v5070 = vunpack.c.l.b16 %v4601
      %v5071 = vunpack.c.l.b16 %v4602
      %v5072 = vunpack.c.l.b16 %v4603
      %v5073 = vunpack.c.l.b16 %v4604
      %v5074 = vunpack.c.l.b16 %v4605
      %v5075 = vunpack.c.l.b16 %v4606
      %v5076 = vunpack.c.l.b16 %v4607
      %v5077 = vunpack.c.l.b16 %v4608
      %v5078 = vunpack.c.l.b16 %v4609
      %v5079 = vunpack.c.l.b16 %v4610
      %v5080 = vunpack.c.l.b16 %v4611
      %v5081 = vunpack.c.l.b16 %v4612
      %v5082 = vunpack.c.l.b16 %v4613
      %v5083 = vunpack.c.l.b16 %v4614
      %v5084 = vunpack.c.l.b16 %v4615
      %v5085 = vunpack.c.l.b16 %v4616
      %v5086 = vunpack.c.l.b16 %v4617
      %v5087 = vunpack.c.l.b16 %v4618
      %v5088 = vunpack.c.l.b16 %v4619
      %v5089 = vunpack.c.l.b16 %v4620
      %v5090 = vunpack.c.l.b16 %v4621
      %v5091 = vunpack.c.l.b16 %v4622
      %v5092 = vunpack.c.l.b16 %v4623
      %v5093 = vunpack.c.l.b16 %v4624
      %v5094 = vunpack.c.l.b16 %v4625
      %v5095 = vunpack.c.l.b16 %v4626
      %v5096 = vunpack.c.l.b16 %v4627
      %v5097 = vunpack.c.l.b16 %v4628
      %v5098 = vunpack.c.l.b16 %v4629
      %v5099 = vunpack.c.l.b16 %v4630
      %v5100 = vunpack.c.l.b16 %v4631
      %v5101 = vunpack.c.l.b16 %v4632
      %v5102 = vunpack.c.l.b16 %v4633
      %v5103 = vunpack.c.l.b16 %v4634
      %v5104 = vunpack.c.l.b16 %v4635
      %v5105 = vunpack.c.l.b16 %v4636
      %v5106 = vunpack.c.l.b16 %v4637
      %v5107 = vunpack.c.l.b16 %v4638
      %v5108 = vunpack.c.l.b16 %v4639
      %v5109 = vunpack.c.l.b16 %v4640
      %v5110 = vunpack.c.l.b16 %v4641
      %v5111 = vunpack.c.l.b16 %v4642
      %v5112 = vunpack.c.l.b16 %v4643
      %v5113 = vunpack.c.l.b16 %v4644
      %v5114 = vunpack.c.l.b16 %v4645
      %v5115 = vunpack.c.l.b16 %v4646
      %v5116 = vunpack.c.l.b16 %v4647
      %v5117 = vunpack.c.l.b16 %v4648
      %v5118 = vunpack.c.l.b16 %v4649
      %v5119 = vunpack.c.l.b16 %v4650
      %v5120 = vunpack.c.l.b16 %v4651
      %v5121 = vunpack.c.l.b16 %v4652
      %v5122 = vpack.c.b16 %v5051, %v5050
      %v5123 = vpack.c.b16 %v5053, %v5052
      %v5124 = vpack.c.b16 %v5055, %v5054
      %v5125 = vpack.c.b16 %v5057, %v5056
      %v5126 = vpack.c.b16 %v5059, %v5058
      %v5127 = vpack.c.b16 %v5061, %v5060
      %v5128 = vpack.c.b16 %v5063, %v5062
      %v5129 = vpack.c.b16 %v5065, %v5064
      %v5130 = vpack.c.b16 %v5067, %v5066
      %v5131 = vpack.c.b16 %v5069, %v5068
      %v5132 = vpack.c.b16 %v5071, %v5070
      %v5133 = vpack.c.b16 %v5073, %v5072
      %v5134 = vpack.c.b16 %v5075, %v5074
      %v5135 = vpack.c.b16 %v5077, %v5076
      %v5136 = vpack.c.b16 %v5079, %v5078
      %v5137 = vpack.c.b16 %v5081, %v5080
      %v5138 = vpack.c.b16 %v5083, %v5082
      %v5139 = vpack.c.b16 %v5085, %v5084
      %v5140 = vpack.c.b16 %v5087, %v5086
      %v5141 = vpack.c.b16 %v5089, %v5088
      %v5142 = vpack.c.b16 %v5091, %v5090
      %v5143 = vpack.c.b16 %v5093, %v5092
      %v5144 = vpack.c.b16 %v5095, %v5094
      %v5145 = vpack.c.b16 %v5097, %v5096
      %v5146 = vpack.c.b16 %v5099, %v5098
      %v5147 = vpack.c.b16 %v5101, %v5100
      %v5148 = vpack.c.b16 %v5103, %v5102
      %v5149 = vpack.c.b16 %v5105, %v5104
      %v5150 = vpack.c.b16 %v5107, %v5106
      %v5151 = vpack.c.b16 %v5109, %v5108
      %v5152 = vpack.c.b16 %v5111, %v5110
      %v5153 = vpack.c.b16 %v5113, %v5112
      %v5154 = vpack.c.b16 %v5115, %v5114
      %v5155 = vpack.c.b16 %v5117, %v5116
      %v5156 = vpack.c.b16 %v5119, %v5118
      %v5157 = vpack.c.b16 %v5121, %v5120
      %v5195 = vsel %vm28, %v4865, 0
      %v5198 = vsel %vm28, %v4870, 0
      %v5201 = vsel %vm28, %v4875, 0
      %v5204 = vsel %vm28, %v4880, 0
      %v5207 = vsel %vm28, %v4885, 0
      %v5210 = vsel %vm28, %v4890, 0
      %v5213 = vsel %vm28, %v4895, 0
      %v5216 = vsel %vm28, %v4900, 0
      %v5219 = vsel %vm28, %v4905, 0
      %v5222 = vsel %vm28, %v4910, 0
      %v5225 = vsel %vm28, %v4915, 0
      %v5228 = vsel %vm28, %v4920, 0
      %v5231 = vsel %vm28, %v4925, 0
      %5233 = vmatprep.subr.bf16.mxu0 0
      %5234 = vmatpush1.bf16.msra.mxu0 %v5129
      %5235 = vmatprep.subr.bf16.mxu0 0
      %5236 = vmatpush1.bf16.msra.mxu0 %v5128
      %5237 = vmatprep.subr.bf16.mxu0 0
      %5238 = vmatpush1.bf16.msra.mxu0 %v5127
      %5239 = vmatprep.subr.bf16.mxu0 0
      %5240 = vmatpush1.bf16.msra.mxu0 %v5126
      %5241 = vmatprep.subr.bf16.mxu0 0
      %5242 = vmatpush1.bf16.msra.mxu0 %v5125
      %5243 = vmatprep.subr.bf16.mxu0 0
      %5244 = vmatpush1.bf16.msra.mxu0 %v5124
      %5245 = vmatprep.subr.bf16.mxu0 0
      %5246 = vmatpush1.bf16.msra.mxu0 %v5123
      %5247 = vmatprep.subr.bf16.mxu0 0
      %5248 = vmatpush1.bf16.msra.mxu0 %v5122
      %5249 = vmatprep.subr.bf16.mxu0 0
      %5250 = vmatpush2.bf16.msra.mxu0 %v5137
      %5251 = vmatprep.subr.bf16.mxu0 0
      %5252 = vmatpush2.bf16.msra.mxu0 %v5136
      %5253 = vmatprep.subr.bf16.mxu0 0
      %5254 = vmatpush2.bf16.msra.mxu0 %v5135
      %5255 = vmatprep.subr.bf16.mxu0 0
      %5256 = vmatpush2.bf16.msra.mxu0 %v5134
      %5257 = vmatprep.subr.bf16.mxu0 0
      %5258 = vmatpush2.bf16.msra.mxu0 %v5133
      %5259 = vmatprep.subr.bf16.mxu0 0
      %5260 = vmatpush2.bf16.msra.mxu0 %v5132
      %5261 = vmatprep.subr.bf16.mxu0 0
      %5262 = vmatpush2.bf16.msra.mxu0 %v5131
      %5263 = vmatprep.subr.bf16.mxu0 0
      %5264 = vmatpush2.bf16.msra.mxu0 %v5130
      %5265 = vmatprep.mubr.bf16.mxu0 %v4862
      %5266 = vmatmul.mubr.bf16.gmra.mxu0 %v4861
      %v5267 = vpop.f32.mrf.mxu0
      %v5268 = vadd.f32 %v4659, %v5267
      %v5269 = vpop.f32.mrf.mxu0
      %v5270 = vpop.f32.mrf.mxu0
      %v5271 = vadd.f32 %v4659, %v5270
      %v5272 = vpop.f32.mrf.mxu0
      %5273 = vmatprep.mubr.bf16.mxu0 %v4867
      %5274 = vmatmul.mubr.bf16.gmra.mxu0 %v4866
      %v5275 = vpop.f32.mrf.mxu0
      %v5276 = vadd.f32 %v4659, %v5275
      %v5277 = vpop.f32.mrf.mxu0
      %v5278 = vpop.f32.mrf.mxu0
      %v5279 = vadd.f32 %v4659, %v5278
      %v5280 = vpop.f32.mrf.mxu0
      %5281 = vmatprep.mubr.bf16.mxu0 %v4872
      %5282 = vmatmul.mubr.bf16.gmra.mxu0 %v4871
      %v5283 = vpop.f32.mrf.mxu0
      %v5284 = vadd.f32 %v4659, %v5283
      %v5285 = vpop.f32.mrf.mxu0
      %v5286 = vpop.f32.mrf.mxu0
      %v5287 = vadd.f32 %v4659, %v5286
      %v5288 = vpop.f32.mrf.mxu0
      %5289 = vmatprep.mubr.bf16.mxu0 %v4877
      %5290 = vmatmul.mubr.bf16.gmra.mxu0 %v4876
      %v5291 = vpop.f32.mrf.mxu0
      %v5292 = vadd.f32 %v4659, %v5291
      %v5293 = vpop.f32.mrf.mxu0
      %v5294 = vpop.f32.mrf.mxu0
      %v5295 = vadd.f32 %v4659, %v5294
      %v5296 = vpop.f32.mrf.mxu0
      %5297 = vmatprep.mubr.bf16.mxu0 %v4882
      %5298 = vmatmul.mubr.bf16.gmra.mxu0 %v4881
      %v5299 = vpop.f32.mrf.mxu0
      %v5300 = vadd.f32 %v4659, %v5299
      %v5301 = vpop.f32.mrf.mxu0
      %v5302 = vpop.f32.mrf.mxu0
      %v5303 = vadd.f32 %v4659, %v5302
      %v5304 = vpop.f32.mrf.mxu0
      %5305 = vmatprep.mubr.bf16.mxu0 %v4887
      %5306 = vmatmul.mubr.bf16.gmra.mxu0 %v4886
      %v5307 = vpop.f32.mrf.mxu0
      %v5308 = vadd.f32 %v4659, %v5307
      %v5309 = vpop.f32.mrf.mxu0
      %v5310 = vpop.f32.mrf.mxu0
      %v5311 = vadd.f32 %v4659, %v5310
      %v5312 = vpop.f32.mrf.mxu0
      %5313 = vmatprep.mubr.bf16.mxu0 %v4892
      %5314 = vmatmul.mubr.bf16.gmra.mxu0 %v4891
      %v5315 = vpop.f32.mrf.mxu0
      %v5316 = vadd.f32 %v4659, %v5315
      %v5317 = vpop.f32.mrf.mxu0
      %v5318 = vpop.f32.mrf.mxu0
      %v5319 = vadd.f32 %v4659, %v5318
      %v5320 = vpop.f32.mrf.mxu0
      %5321 = vmatprep.mubr.bf16.mxu0 %v4897
      %5322 = vmatmul.mubr.bf16.gmra.mxu0 %v4896
      %v5323 = vpop.f32.mrf.mxu0
      %v5324 = vadd.f32 %v4659, %v5323
      %v5325 = vpop.f32.mrf.mxu0
      %v5326 = vpop.f32.mrf.mxu0
      %v5327 = vadd.f32 %v4659, %v5326
      %v5328 = vpop.f32.mrf.mxu0
      %5329 = vmatprep.mubr.bf16.mxu0 %v4902
      %5330 = vmatmul.mubr.bf16.gmra.mxu0 %v4901
      %v5331 = vpop.f32.mrf.mxu0
      %v5332 = vadd.f32 %v4659, %v5331
      %v5333 = vpop.f32.mrf.mxu0
      %v5334 = vpop.f32.mrf.mxu0
      %v5335 = vadd.f32 %v4659, %v5334
      %v5336 = vpop.f32.mrf.mxu0
      %5337 = vmatprep.mubr.bf16.mxu0 %v4907
      %5338 = vmatmul.mubr.bf16.gmra.mxu0 %v4906
      %v5339 = vpop.f32.mrf.mxu0
      %v5340 = vadd.f32 %v4659, %v5339
      %v5341 = vpop.f32.mrf.mxu0
      %v5342 = vpop.f32.mrf.mxu0
      %v5343 = vadd.f32 %v4659, %v5342
      %v5344 = vpop.f32.mrf.mxu0
      %5345 = vmatprep.mubr.bf16.mxu0 %v4912
      %5346 = vmatmul.mubr.bf16.gmra.mxu0 %v4911
      %v5347 = vpop.f32.mrf.mxu0
      %v5348 = vadd.f32 %v4659, %v5347
      %v5349 = vpop.f32.mrf.mxu0
      %v5350 = vpop.f32.mrf.mxu0
      %v5351 = vadd.f32 %v4659, %v5350
      %v5352 = vpop.f32.mrf.mxu0
      %5353 = vmatprep.mubr.bf16.mxu0 %v4917
      %5354 = vmatmul.mubr.bf16.gmra.mxu0 %v4916
      %v5355 = vpop.f32.mrf.mxu0
      %v5356 = vadd.f32 %v4659, %v5355
      %v5357 = vpop.f32.mrf.mxu0
      %v5358 = vpop.f32.mrf.mxu0
      %v5359 = vadd.f32 %v4659, %v5358
      %v5360 = vpop.f32.mrf.mxu0
      %5361 = vmatprep.mubr.bf16.mxu0 %v4922
      %5362 = vmatmul.mubr.bf16.gmra.mxu0 %v4921
      %v5363 = vpop.f32.mrf.mxu0
      %v5364 = vadd.f32 %v4659, %v5363
      %v5365 = vpop.f32.mrf.mxu0
      %v5366 = vpop.f32.mrf.mxu0
      %v5367 = vpop.f32.mrf.mxu0
      %5368 = vdwg.mxu0
      %5369 = vmatprep.subr.bf16.mxu0 0
      %5370 = vmatpush1.bf16.msra.mxu0 %v5145
      %5371 = vmatprep.subr.bf16.mxu0 0
      %5372 = vmatpush1.bf16.msra.mxu0 %v5144
      %5373 = vmatprep.subr.bf16.mxu0 0
      %5374 = vmatpush1.bf16.msra.mxu0 %v5143
      %5375 = vmatprep.subr.bf16.mxu0 0
      %5376 = vmatpush1.bf16.msra.mxu0 %v5142
      %5377 = vmatprep.subr.bf16.mxu0 0
      %5378 = vmatpush1.bf16.msra.mxu0 %v5141
      %5379 = vmatprep.subr.bf16.mxu0 0
      %5380 = vmatpush1.bf16.msra.mxu0 %v5140
      %5381 = vmatprep.subr.bf16.mxu0 0
      %5382 = vmatpush1.bf16.msra.mxu0 %v5139
      %5383 = vmatprep.subr.bf16.mxu0 0
      %5384 = vmatpush1.bf16.msra.mxu0 %v5138
      %5385 = vmatprep.subr.bf16.mxu0 0
      %5386 = vmatpush2.bf16.msra.mxu0 %v5153
      %5387 = vmatprep.subr.bf16.mxu0 0
      %5388 = vmatpush2.bf16.msra.mxu0 %v5152
      %5389 = vmatprep.subr.bf16.mxu0 0
      %5390 = vmatpush2.bf16.msra.mxu0 %v5151
      %5391 = vmatprep.subr.bf16.mxu0 0
      %5392 = vmatpush2.bf16.msra.mxu0 %v5150
      %5393 = vmatprep.subr.bf16.mxu0 0
      %5394 = vmatpush2.bf16.msra.mxu0 %v5149
      %5395 = vmatprep.subr.bf16.mxu0 0
      %5396 = vmatpush2.bf16.msra.mxu0 %v5148
      %5397 = vmatprep.subr.bf16.mxu0 0
      %5398 = vmatpush2.bf16.msra.mxu0 %v5147
      %5399 = vmatprep.subr.bf16.mxu0 0
      %5400 = vmatpush2.bf16.msra.mxu0 %v5146
      %5401 = vmatprep.mubr.bf16.mxu0 %v4864
      %5402 = vmatmul.mubr.bf16.gmra.mxu0 %v4863
      %v5403 = vpop.f32.mrf.mxu0
      %v5404 = vadd.f32 %v5268, %v5403
      %v5405 = vpop.f32.mrf.mxu0
      %v5406 = vpop.f32.mrf.mxu0
      %v5407 = vadd.f32 %v5271, %v5406
      %v5408 = vpop.f32.mrf.mxu0
      %5409 = vmatprep.mubr.bf16.mxu0 %v4869
      %5410 = vmatmul.mubr.bf16.gmra.mxu0 %v4868
      %v5411 = vpop.f32.mrf.mxu0
      %v5412 = vadd.f32 %v5276, %v5411
      %v5413 = vpop.f32.mrf.mxu0
      %v5414 = vpop.f32.mrf.mxu0
      %v5415 = vadd.f32 %v5279, %v5414
      %v5416 = vpop.f32.mrf.mxu0
      %5417 = vmatprep.mubr.bf16.mxu0 %v4874
      %5418 = vmatmul.mubr.bf16.gmra.mxu0 %v4873
      %v5419 = vpop.f32.mrf.mxu0
      %v5420 = vadd.f32 %v5284, %v5419
      %v5421 = vpop.f32.mrf.mxu0
      %v5422 = vpop.f32.mrf.mxu0
      %v5423 = vadd.f32 %v5287, %v5422
      %v5424 = vpop.f32.mrf.mxu0
      %5425 = vmatprep.mubr.bf16.mxu0 %v4879
      %5426 = vmatmul.mubr.bf16.gmra.mxu0 %v4878
      %v5427 = vpop.f32.mrf.mxu0
      %v5428 = vadd.f32 %v5292, %v5427
      %v5429 = vpop.f32.mrf.mxu0
      %v5430 = vpop.f32.mrf.mxu0
      %v5431 = vadd.f32 %v5295, %v5430
      %v5432 = vpop.f32.mrf.mxu0
      %5433 = vmatprep.mubr.bf16.mxu0 %v4884
      %5434 = vmatmul.mubr.bf16.gmra.mxu0 %v4883
      %v5435 = vpop.f32.mrf.mxu0
      %v5436 = vadd.f32 %v5300, %v5435
      %v5437 = vpop.f32.mrf.mxu0
      %v5438 = vpop.f32.mrf.mxu0
      %v5439 = vadd.f32 %v5303, %v5438
      %v5440 = vpop.f32.mrf.mxu0
      %5441 = vmatprep.mubr.bf16.mxu0 %v4889
      %5442 = vmatmul.mubr.bf16.gmra.mxu0 %v4888
      %v5443 = vpop.f32.mrf.mxu0
      %v5444 = vadd.f32 %v5308, %v5443
      %v5445 = vpop.f32.mrf.mxu0
      %v5446 = vpop.f32.mrf.mxu0
      %v5447 = vadd.f32 %v5311, %v5446
      %v5448 = vpop.f32.mrf.mxu0
      %5449 = vmatprep.mubr.bf16.mxu0 %v4894
      %5450 = vmatmul.mubr.bf16.gmra.mxu0 %v4893
      %v5451 = vpop.f32.mrf.mxu0
      %v5452 = vadd.f32 %v5316, %v5451
      %v5453 = vpop.f32.mrf.mxu0
      %v5454 = vpop.f32.mrf.mxu0
      %v5455 = vadd.f32 %v5319, %v5454
      %v5456 = vpop.f32.mrf.mxu0
      %5457 = vmatprep.mubr.bf16.mxu0 %v4899
      %5458 = vmatmul.mubr.bf16.gmra.mxu0 %v4898
      %v5459 = vpop.f32.mrf.mxu0
      %v5460 = vadd.f32 %v5324, %v5459
      %v5461 = vpop.f32.mrf.mxu0
      %v5462 = vpop.f32.mrf.mxu0
      %v5463 = vadd.f32 %v5327, %v5462
      %v5464 = vpop.f32.mrf.mxu0
      %5465 = vmatprep.mubr.bf16.mxu0 %v4904
      %5466 = vmatmul.mubr.bf16.gmra.mxu0 %v4903
      %v5467 = vpop.f32.mrf.mxu0
      %v5468 = vadd.f32 %v5332, %v5467
      %v5469 = vpop.f32.mrf.mxu0
      %v5470 = vpop.f32.mrf.mxu0
      %v5471 = vadd.f32 %v5335, %v5470
      %v5472 = vpop.f32.mrf.mxu0
      %5473 = vmatprep.mubr.bf16.mxu0 %v4909
      %5474 = vmatmul.mubr.bf16.gmra.mxu0 %v4908
      %v5475 = vpop.f32.mrf.mxu0
      %v5476 = vadd.f32 %v5340, %v5475
      %v5477 = vpop.f32.mrf.mxu0
      %v5478 = vpop.f32.mrf.mxu0
      %v5479 = vadd.f32 %v5343, %v5478
      %v5480 = vpop.f32.mrf.mxu0
      %5481 = vmatprep.mubr.bf16.mxu0 %v4914
      %5482 = vmatmul.mubr.bf16.gmra.mxu0 %v4913
      %v5483 = vpop.f32.mrf.mxu0
      %v5484 = vadd.f32 %v5348, %v5483
      %v5485 = vpop.f32.mrf.mxu0
      %v5486 = vpop.f32.mrf.mxu0
      %v5487 = vadd.f32 %v5351, %v5486
      %v5488 = vpop.f32.mrf.mxu0
      %5489 = vmatprep.mubr.bf16.mxu0 %v4919
      %5490 = vmatmul.mubr.bf16.gmra.mxu0 %v4918
      %v5491 = vpop.f32.mrf.mxu0
      %v5492 = vadd.f32 %v5356, %v5491
      %v5493 = vpop.f32.mrf.mxu0
      %v5494 = vpop.f32.mrf.mxu0
      %v5495 = vadd.f32 %v5359, %v5494
      %v5496 = vpop.f32.mrf.mxu0
      %5497 = vmatprep.mubr.bf16.mxu0 %v4924
      %5498 = vmatmul.mubr.bf16.gmra.mxu0 %v4923
      %v5499 = vpop.f32.mrf.mxu0
      %v5500 = vadd.f32 %v5364, %v5499
      %v5501 = vpop.f32.mrf.mxu0
      %v5502 = vpop.f32.mrf.mxu0
      %v5503 = vpop.f32.mrf.mxu0
      %5504 = vdwg.mxu0
      %5505 = vmatprep.subr.bf16.mxu0 0
      %5506 = vmatpush1.bf16.msra.mxu0 0
      %5507 = vmatprep.subr.bf16.mxu0 0
      %5508 = vmatpush1.bf16.msra.mxu0 0
      %5509 = vmatprep.subr.bf16.mxu0 0
      %5510 = vmatpush1.bf16.msra.mxu0 0
      %5511 = vmatprep.subr.bf16.mxu0 0
      %5512 = vmatpush1.bf16.msra.mxu0 0
      %5513 = vmatprep.subr.bf16.mxu0 0
      %5514 = vmatpush1.bf16.msra.mxu0 %v5157
      %5515 = vmatprep.subr.bf16.mxu0 0
      %5516 = vmatpush1.bf16.msra.mxu0 %v5156
      %5517 = vmatprep.subr.bf16.mxu0 0
      %5518 = vmatpush1.bf16.msra.mxu0 %v5155
      %5519 = vmatprep.subr.bf16.mxu0 0
      %5520 = vmatpush1.bf16.msra.mxu0 %v5154
      %5521 = vmatprep.subr.bf16.mxu0 0
      %5522 = vmatpush2.bf16.msra.mxu0 0
      %5523 = vmatprep.subr.bf16.mxu0 0
      %5524 = vmatpush2.bf16.msra.mxu0 0
      %5525 = vmatprep.subr.bf16.mxu0 0
      %5526 = vmatpush2.bf16.msra.mxu0 0
      %5527 = vmatprep.subr.bf16.mxu0 0
      %5528 = vmatpush2.bf16.msra.mxu0 0
      %5529 = vmatprep.subr.bf16.mxu0 0
      %5530 = vmatpush2.bf16.msra.mxu0 0
      %5531 = vmatprep.subr.bf16.mxu0 0
      %5532 = vmatpush2.bf16.msra.mxu0 0
      %5533 = vmatprep.subr.bf16.mxu0 0
      %5534 = vmatpush2.bf16.msra.mxu0 0
      %5535 = vmatprep.subr.bf16.mxu0 0
      %5536 = vmatpush2.bf16.msra.mxu0 0
      %5537 = vmatprep.mubr.bf16.mxu0 0
      %5538 = vmatmul.mubr.bf16.gmra.mxu0 %v5195
      %v5539 = vpop.f32.mrf.mxu0
      %v5540 = vadd.f32 %v5404, %v5539
      %v5541 = vpop.f32.mrf.mxu0
      %v5542 = vpop.f32.mrf.mxu0
      %v5543 = vadd.f32 %v5407, %v5542
      %v5544 = vpop.f32.mrf.mxu0
      %5545 = vmatprep.mubr.bf16.mxu0 0
      %5546 = vmatmul.mubr.bf16.gmra.mxu0 %v5198
      %v5547 = vpop.f32.mrf.mxu0
      %v5548 = vadd.f32 %v5412, %v5547
      %v5549 = vpop.f32.mrf.mxu0
      %v5550 = vpop.f32.mrf.mxu0
      %v5551 = vadd.f32 %v5415, %v5550
      %v5552 = vpop.f32.mrf.mxu0
      %5553 = vmatprep.mubr.bf16.mxu0 0
      %5554 = vmatmul.mubr.bf16.gmra.mxu0 %v5201
      %v5555 = vpop.f32.mrf.mxu0
      %v5556 = vadd.f32 %v5420, %v5555
      %v5557 = vpop.f32.mrf.mxu0
      %v5558 = vpop.f32.mrf.mxu0
      %v5559 = vadd.f32 %v5423, %v5558
      %v5560 = vpop.f32.mrf.mxu0
      %5561 = vmatprep.mubr.bf16.mxu0 0
      %5562 = vmatmul.mubr.bf16.gmra.mxu0 %v5204
      %v5563 = vpop.f32.mrf.mxu0
      %v5564 = vadd.f32 %v5428, %v5563
      %v5565 = vpop.f32.mrf.mxu0
      %v5566 = vpop.f32.mrf.mxu0
      %v5567 = vadd.f32 %v5431, %v5566
      %v5568 = vpop.f32.mrf.mxu0
      %5569 = vmatprep.mubr.bf16.mxu0 0
      %5570 = vmatmul.mubr.bf16.gmra.mxu0 %v5207
      %v5571 = vpop.f32.mrf.mxu0
      %v5572 = vadd.f32 %v5436, %v5571
      %v5573 = vpop.f32.mrf.mxu0
      %v5574 = vpop.f32.mrf.mxu0
      %v5575 = vadd.f32 %v5439, %v5574
      %v5576 = vpop.f32.mrf.mxu0
      %5577 = vmatprep.mubr.bf16.mxu0 0
      %5578 = vmatmul.mubr.bf16.gmra.mxu0 %v5210
      %v5579 = vpop.f32.mrf.mxu0
      %v5580 = vadd.f32 %v5444, %v5579
      %v5581 = vpop.f32.mrf.mxu0
      %v5582 = vpop.f32.mrf.mxu0
      %v5583 = vadd.f32 %v5447, %v5582
      %v5584 = vpop.f32.mrf.mxu0
      %5585 = vmatprep.mubr.bf16.mxu0 0
      %5586 = vmatmul.mubr.bf16.gmra.mxu0 %v5213
      %v5587 = vpop.f32.mrf.mxu0
      %v5588 = vadd.f32 %v5452, %v5587
      %v5589 = vpop.f32.mrf.mxu0
      %v5590 = vpop.f32.mrf.mxu0
      %v5591 = vadd.f32 %v5455, %v5590
      %v5592 = vpop.f32.mrf.mxu0
      %5593 = vmatprep.mubr.bf16.mxu0 0
      %5594 = vmatmul.mubr.bf16.gmra.mxu0 %v5216
      %v5595 = vpop.f32.mrf.mxu0
      %v5596 = vadd.f32 %v5460, %v5595
      %v5597 = vpop.f32.mrf.mxu0
      %v5598 = vpop.f32.mrf.mxu0
      %v5599 = vadd.f32 %v5463, %v5598
      %v5600 = vpop.f32.mrf.mxu0
      %5601 = vmatprep.mubr.bf16.mxu0 0
      %5602 = vmatmul.mubr.bf16.gmra.mxu0 %v5219
      %v5603 = vpop.f32.mrf.mxu0
      %v5604 = vadd.f32 %v5468, %v5603
      %v5605 = vpop.f32.mrf.mxu0
      %v5606 = vpop.f32.mrf.mxu0
      %v5607 = vadd.f32 %v5471, %v5606
      %v5608 = vpop.f32.mrf.mxu0
      %5609 = vmatprep.mubr.bf16.mxu0 0
      %5610 = vmatmul.mubr.bf16.gmra.mxu0 %v5222
      %v5611 = vpop.f32.mrf.mxu0
      %v5612 = vadd.f32 %v5476, %v5611
      %v5613 = vpop.f32.mrf.mxu0
      %v5614 = vpop.f32.mrf.mxu0
      %v5615 = vadd.f32 %v5479, %v5614
      %v5616 = vpop.f32.mrf.mxu0
      %5617 = vmatprep.mubr.bf16.mxu0 0
      %5618 = vmatmul.mubr.bf16.gmra.mxu0 %v5225
      %v5619 = vpop.f32.mrf.mxu0
      %v5620 = vadd.f32 %v5484, %v5619
      %v5621 = vpop.f32.mrf.mxu0
      %v5622 = vpop.f32.mrf.mxu0
      %v5623 = vadd.f32 %v5487, %v5622
      %v5624 = vpop.f32.mrf.mxu0
      %5625 = vmatprep.mubr.bf16.mxu0 0
      %5626 = vmatmul.mubr.bf16.gmra.mxu0 %v5228
      %v5627 = vpop.f32.mrf.mxu0
      %v5628 = vadd.f32 %v5492, %v5627
      %v5629 = vpop.f32.mrf.mxu0
      %v5630 = vpop.f32.mrf.mxu0
      %v5631 = vadd.f32 %v5495, %v5630
      %v5632 = vpop.f32.mrf.mxu0
      %5633 = vmatprep.mubr.bf16.mxu0 0
      %5634 = vmatmul.mubr.bf16.gmra.mxu0 %v5231
      %v5635 = vpop.f32.mrf.mxu0
      %v5636 = vadd.f32 %v5500, %v5635
      %v5637 = vpop.f32.mrf.mxu0
      %v5638 = vpop.f32.mrf.mxu0
      %v5639 = vpop.f32.mrf.mxu0
      %5640 = vdwg.mxu0
      %v5641 = vld [vmem:[#allocation2 + $0x10] sm:$0xff]
      %v5642 = vld [vmem:[#allocation2 + $0x18] sm:$0xff]
      %v5643 = vld [vmem:[#allocation2 + $0x20] sm:$0xff]
      %v5644 = vld [vmem:[#allocation2 + $0x28] sm:$0xff]
      %v5645 = vld [vmem:[#allocation2 + $0x30] sm:$0xff]
      %v5646 = vld [vmem:[#allocation2 + $0x38] sm:$0xff]
      %v5647 = vld [vmem:[#allocation2 + $0x40] sm:$0xff]
      %v5648 = vld [vmem:[#allocation2 + $0x48] sm:$0xff]
      %v5649 = vld [vmem:[#allocation2 + $0x50] sm:$0xff]
      %v5650 = vld [vmem:[#allocation2 + $0x58] sm:$0xff]
      %v5651 = vld [vmem:[#allocation2 + $0x60] sm:$0xff]
      %v5652 = vld [vmem:[#allocation2 + $0x68] sm:$0xff]
      %v5653 = vld [vmem:[#allocation2 + $0x70] sm:$0xff]
      %v5654 = vld [vmem:[#allocation2 + $0x78] sm:$0xff]
      %v5655 = vld [vmem:[#allocation2 + $0x80] sm:$0xff]
      %v5656 = vld [vmem:[#allocation2 + $0x88] sm:$0xff]
      %v5657 = vld [vmem:[#allocation2 + $0x90] sm:$0xff]
      %v5658 = vld [vmem:[#allocation2 + $0x98] sm:$0xff]
      %v5659 = vld [vmem:[#allocation2 + $0xa0] sm:$0xff]
      %v5660 = vld [vmem:[#allocation2 + $0xa8] sm:$0xff]
      %v5661 = vld [vmem:[#allocation2 + $0xb0] sm:$0xff]
      %v5662 = vld [vmem:[#allocation2 + $0xb8] sm:$0xff]
      %v5663 = vld [vmem:[#allocation2 + $0xc0] sm:$0xff]
      %v5664 = vld [vmem:[#allocation2 + $0xc8] sm:$0xff]
      %v5665 = vld [vmem:[#allocation2 + $0xd0] sm:$0xff]
      %v5666 = vadd.f32 %v5540, %v5641
      %v5667 = vadd.f32 %v5543, %v5642
      %v5668 = vadd.f32 %v5548, %v5643
      %v5669 = vadd.f32 %v5551, %v5644
      %v5670 = vadd.f32 %v5556, %v5645
      %v5671 = vadd.f32 %v5559, %v5646
      %v5672 = vadd.f32 %v5564, %v5647
      %v5673 = vadd.f32 %v5567, %v5648
      %v5674 = vadd.f32 %v5572, %v5649
      %v5675 = vadd.f32 %v5575, %v5650
      %v5676 = vadd.f32 %v5580, %v5651
      %v5677 = vadd.f32 %v5583, %v5652
      %v5678 = vadd.f32 %v5588, %v5653
      %v5679 = vadd.f32 %v5591, %v5654
      %v5680 = vadd.f32 %v5596, %v5655
      %v5681 = vadd.f32 %v5599, %v5656
      %v5682 = vadd.f32 %v5604, %v5657
      %v5683 = vadd.f32 %v5607, %v5658
      %v5684 = vadd.f32 %v5612, %v5659
      %v5685 = vadd.f32 %v5615, %v5660
      %v5686 = vadd.f32 %v5620, %v5661
      %v5687 = vadd.f32 %v5623, %v5662
      %v5688 = vadd.f32 %v5628, %v5663
      %v5689 = vadd.f32 %v5631, %v5664
      %v5690 = vadd.f32 %v5636, %v5665
      %v5691 = vmax.f32 %v5666, 0.0
      %v5692 = vmax.f32 %v5667, 0.0
      %v5693 = vmax.f32 %v5668, 0.0
      %v5694 = vmax.f32 %v5669, 0.0
      %v5695 = vmax.f32 %v5670, 0.0
      %v5696 = vmax.f32 %v5671, 0.0
      %v5697 = vmax.f32 %v5672, 0.0
      %v5698 = vmax.f32 %v5673, 0.0
      %v5699 = vmax.f32 %v5674, 0.0
      %v5700 = vmax.f32 %v5675, 0.0
      %v5701 = vmax.f32 %v5676, 0.0
      %v5702 = vmax.f32 %v5677, 0.0
      %v5703 = vmax.f32 %v5678, 0.0
      %v5704 = vmax.f32 %v5679, 0.0
      %v5705 = vmax.f32 %v5680, 0.0
      %v5706 = vmax.f32 %v5681, 0.0
      %v5707 = vmax.f32 %v5682, 0.0
      %v5708 = vmax.f32 %v5683, 0.0
      %v5709 = vmax.f32 %v5684, 0.0
      %v5710 = vmax.f32 %v5685, 0.0
      %v5711 = vmax.f32 %v5686, 0.0
      %v5712 = vmax.f32 %v5687, 0.0
      %v5713 = vmax.f32 %v5688, 0.0
      %v5714 = vmax.f32 %v5689, 0.0
      %v5715 = vmax.f32 %v5690, 0.0
      %v5716 = vmul.f32 %v5691, %v137
      %v5717 = vmul.f32 %v5692, %v138
      %v5718 = vmul.f32 %v5693, %v139
      %v5719 = vmul.f32 %v5694, %v140
      %v5720 = vmul.f32 %v5695, %v141
      %v5721 = vmul.f32 %v5696, %v142
      %v5722 = vmul.f32 %v5697, %v143
      %v5723 = vmul.f32 %v5698, %v144
      %v5724 = vmul.f32 %v5699, %v145
      %v5725 = vmul.f32 %v5700, %v146
      %v5726 = vmul.f32 %v5701, %v147
      %v5727 = vmul.f32 %v5702, %v148
      %v5728 = vmul.f32 %v5703, %v149
      %v5729 = vmul.f32 %v5704, %v150
      %v5730 = vmul.f32 %v5705, %v151
      %v5731 = vmul.f32 %v5706, %v152
      %v5732 = vmul.f32 %v5707, %v153
      %v5733 = vmul.f32 %v5708, %v154
      %v5734 = vmul.f32 %v5709, %v155
      %v5735 = vmul.f32 %v5710, %v156
      %v5736 = vmul.f32 %v5711, %v157
      %v5737 = vmul.f32 %v5712, %v158
      %v5738 = vmul.f32 %v5713, %v159
      %v5739 = vmul.f32 %v5714, %v160
      %v5740 = vmul.f32 %v5715, %v161
      %5741 = vst.msk [vmem:[#allocation2 + $0x10] sm:$0xff] %vm28, %v5716
      %5742 = vst.msk [vmem:[#allocation2 + $0x18] sm:$0xff] %vm28, %v5717
      %5743 = vst.msk [vmem:[#allocation2 + $0x20] sm:$0xff] %vm28, %v5718
      %5744 = vst.msk [vmem:[#allocation2 + $0x28] sm:$0xff] %vm28, %v5719
      %5745 = vst.msk [vmem:[#allocation2 + $0x30] sm:$0xff] %vm28, %v5720
      %5746 = vst.msk [vmem:[#allocation2 + $0x38] sm:$0xff] %vm28, %v5721
      %5747 = vst.msk [vmem:[#allocation2 + $0x40] sm:$0xff] %vm28, %v5722
      %5748 = vst.msk [vmem:[#allocation2 + $0x48] sm:$0xff] %vm28, %v5723
      %5749 = vst.msk [vmem:[#allocation2 + $0x50] sm:$0xff] %vm28, %v5724
      %5750 = vst.msk [vmem:[#allocation2 + $0x58] sm:$0xff] %vm28, %v5725
      %5751 = vst.msk [vmem:[#allocation2 + $0x60] sm:$0xff] %vm28, %v5726
      %5752 = vst.msk [vmem:[#allocation2 + $0x68] sm:$0xff] %vm28, %v5727
      %5753 = vst.msk [vmem:[#allocation2 + $0x70] sm:$0xff] %vm28, %v5728
      %5754 = vst.msk [vmem:[#allocation2 + $0x78] sm:$0xff] %vm28, %v5729
      %5755 = vst.msk [vmem:[#allocation2 + $0x80] sm:$0xff] %vm28, %v5730
      %5756 = vst.msk [vmem:[#allocation2 + $0x88] sm:$0xff] %vm28, %v5731
      %5757 = vst.msk [vmem:[#allocation2 + $0x90] sm:$0xff] %vm28, %v5732
      %5758 = vst.msk [vmem:[#allocation2 + $0x98] sm:$0xff] %vm28, %v5733
      %5759 = vst.msk [vmem:[#allocation2 + $0xa0] sm:$0xff] %vm28, %v5734
      %5760 = vst.msk [vmem:[#allocation2 + $0xa8] sm:$0xff] %vm28, %v5735
      %5761 = vst.msk [vmem:[#allocation2 + $0xb0] sm:$0xff] %vm28, %v5736
      %5762 = vst.msk [vmem:[#allocation2 + $0xb8] sm:$0xff] %vm28, %v5737
      %5763 = vst.msk [vmem:[#allocation2 + $0xc0] sm:$0xff] %vm28, %v5738
      %5764 = vst.msk [vmem:[#allocation2 + $0xc8] sm:$0xff] %vm28, %v5739
      %5765 = vst.msk [vmem:[#allocation2 + $0xd0] sm:$0xff] %vm28, %v5740
    $region30: #{resnet110_server_v3_forward.1} parent=1 // loop_footer
      %s167 = sadd.s32 1, %s163
    $region31: #{resnet110_server_v3_forward.1} parent=1 // loop_footer_branch
      %162 = sbr.rel target = $region27
    $region32: #{resnet110_server_v3_forward.1} parent=1 // loop_exit
      _
    %v5766 = vld [vmem:[#allocation2 + $0x10] sm:$0xff]
    %v5767 = vld [vmem:[#allocation2 + $0x18] sm:$0xff]
    %v5768 = vld [vmem:[#allocation2 + $0x20] sm:$0xff]
    %v5769 = vld [vmem:[#allocation2 + $0x28] sm:$0xff]
    %v5770 = vld [vmem:[#allocation2 + $0x30] sm:$0xff]
    %v5771 = vld [vmem:[#allocation2 + $0x38] sm:$0xff]
    %v5772 = vld [vmem:[#allocation2 + $0x40] sm:$0xff]
    %v5773 = vld [vmem:[#allocation2 + $0x48] sm:$0xff]
    %v5774 = vld [vmem:[#allocation2 + $0x50] sm:$0xff]
    %v5775 = vld [vmem:[#allocation2 + $0x58] sm:$0xff]
    %v5776 = vld [vmem:[#allocation2 + $0x60] sm:$0xff]
    %v5777 = vld [vmem:[#allocation2 + $0x68] sm:$0xff]
    %v5778 = vld [vmem:[#allocation2 + $0x70] sm:$0xf]
    %v5779 = vsel %vm28, %v5766, 0.0
    %v5780 = vsel %vm28, %v5767, 0.0
    %v5781 = vadd.f32 %v5779, %v5780
    %v5782 = vsel %vm28, %v5768, 0.0
    %v5783 = vadd.f32 %v5781, %v5782
    %v5784 = vsel %vm28, %v5769, 0.0
    %v5785 = vadd.f32 %v5783, %v5784
    %v5786 = vsel %vm28, %v5770, 0.0
    %v5787 = vadd.f32 %v5785, %v5786
    %v5788 = vsel %vm28, %v5771, 0.0
    %v5789 = vadd.f32 %v5787, %v5788
    %v5790 = vsel %vm28, %v5772, 0.0
    %v5791 = vadd.f32 %v5789, %v5790
    %v5792 = vsel %vm28, %v5773, 0.0
    %v5793 = vadd.f32 %v5791, %v5792
    %v5794 = vsel %vm28, %v5774, 0.0
    %v5795 = vadd.f32 %v5793, %v5794
    %v5796 = vsel %vm28, %v5775, 0.0
    %v5797 = vadd.f32 %v5795, %v5796
    %v5798 = vsel %vm28, %v5776, 0.0
    %v5799 = vadd.f32 %v5797, %v5798
    %v5800 = vsel %vm28, %v5777, 0.0
    %v5801 = vadd.f32 %v5799, %v5800
    %vm5802 = vcmask 519168
    %v5803 = vsel %vm5802, %v5778, 0.0
    %v5804 = vadd.f32 %v5801, %v5803
    %v5805 = vrot.slane %v5804, 4
    %v5806 = vadd.f32 %v5804, %v5805
    %v5807 = vrot.slane %v5806, 2
    %v5808 = vadd.f32 %v5806, %v5807
    %v5809 = vrot.slane %v5808, 1
    %v5810 = vadd.f32 %v5808, %v5809
    %v5811 = vld [vmem:[#allocation2 + $0x74] sm:$0xff]
    %v5812 = vld [vmem:[#allocation2 + $0x7c] sm:$0xff]
    %v5813 = vld [vmem:[#allocation2 + $0x84] sm:$0xff]
    %v5814 = vld [vmem:[#allocation2 + $0x8c] sm:$0xff]
    %v5815 = vld [vmem:[#allocation2 + $0x94] sm:$0xff]
    %v5816 = vld [vmem:[#allocation2 + $0x9c] sm:$0xff]
    %v5817 = vld [vmem:[#allocation2 + $0xa4] sm:$0xff]
    %v5818 = vld [vmem:[#allocation2 + $0xac] sm:$0xff]
    %v5819 = vld [vmem:[#allocation2 + $0xb4] sm:$0xff]
    %v5820 = vld [vmem:[#allocation2 + $0xbc] sm:$0xff]
    %v5821 = vld [vmem:[#allocation2 + $0xc4] sm:$0xff]
    %v5822 = vld [vmem:[#allocation2 + $0xcc] sm:$0xff]
    %v5823 = vld [vmem:[#allocation2 + $0xd4] sm:$0xf]
    %v5824 = vsel %vm28, %v5811, 0.0
    %v5825 = vsel %vm28, %v5812, 0.0
    %v5826 = vadd.f32 %v5824, %v5825
    %v5827 = vsel %vm28, %v5813, 0.0
    %v5828 = vadd.f32 %v5826, %v5827
    %v5829 = vsel %vm28, %v5814, 0.0
    %v5830 = vadd.f32 %v5828, %v5829
    %v5831 = vsel %vm28, %v5815, 0.0
    %v5832 = vadd.f32 %v5830, %v5831
    %v5833 = vsel %vm28, %v5816, 0.0
    %v5834 = vadd.f32 %v5832, %v5833
    %v5835 = vsel %vm28, %v5817, 0.0
    %v5836 = vadd.f32 %v5834, %v5835
    %v5837 = vsel %vm28, %v5818, 0.0
    %v5838 = vadd.f32 %v5836, %v5837
    %v5839 = vsel %vm28, %v5819, 0.0
    %v5840 = vadd.f32 %v5838, %v5839
    %v5841 = vsel %vm28, %v5820, 0.0
    %v5842 = vadd.f32 %v5840, %v5841
    %v5843 = vsel %vm28, %v5821, 0.0
    %v5844 = vadd.f32 %v5842, %v5843
    %v5845 = vsel %vm28, %v5822, 0.0
    %v5846 = vadd.f32 %v5844, %v5845
    %v5847 = vsel %vm5802, %v5823, 0.0
    %v5848 = vadd.f32 %v5846, %v5847
    %v5849 = vrot.slane %v5848, 4
    %v5850 = vadd.f32 %v5848, %v5849
    %v5851 = vrot.slane %v5850, 2
    %v5852 = vadd.f32 %v5850, %v5851
    %v5853 = vrot.slane %v5852, 1
    %v5854 = vadd.f32 %v5852, %v5853
    %vm5855 = vcmask 1040384
    %v5856 = vsel %vm5855, %v5810, %v5854
    %v5857 = vmul.f32 %v5856, 0.015625
    %v5858 = vld [vmem:[%s4] sm:$0xff]
    %v5859 = vld [vmem:[%s4 + $0x8] sm:$0xff]
    %v5860 = vld [vmem:[%s4 + $0x10] sm:$0xff]
    %v5861 = vld [vmem:[%s4 + $0x18] sm:$0xff]
    %v5862 = vld [vmem:[%s4 + $0x20] sm:$0xff]
    %v5863 = vld [vmem:[%s4 + $0x28] sm:$0xff]
    %v5864 = vld [vmem:[%s4 + $0x30] sm:$0xff]
    %v5865 = vld [vmem:[%s4 + $0x38] sm:$0xff]
    %v5866 = vld [vmem:[%s5] sm:$0x1]
    %v5868 = vlaneseq
    %v5869 = vshrl.u32 %v5868, 7
    %v5870 = vsub.s32 0, %v5869
    %v5871 = vrot.slane %v5866, %v5870
    %v5874 = vsel %vm28, %v5857, 0
    %5876 = vmatprep.subr.mxu0 0.0
    %5877 = vmatpush1.msra.mxu0 0.0
    %5878 = vmatprep.subr.mxu0 0.0
    %5879 = vmatpush1.msra.mxu0 0.0
    %5880 = vmatprep.subr.mxu0 0.0
    %5881 = vmatpush1.msra.mxu0 0.0
    %5882 = vmatprep.subr.mxu0 0.0
    %5883 = vmatpush1.msra.mxu0 0.0
    %5884 = vmatprep.subr.mxu0 0.0
    %5885 = vmatpush1.msra.mxu0 0.0
    %5886 = vmatprep.subr.mxu0 0.0
    %5887 = vmatpush1.msra.mxu0 0.0
    %5888 = vmatprep.subr.mxu0 0.0
    %5889 = vmatpush1.msra.mxu0 0.0
    %5890 = vmatprep.subr.mxu0 0.0
    %5891 = vmatpush1.msra.mxu0 0.0
    %5892 = vmatprep.subr.mxu0 0.0
    %5893 = vmatpush1.msra.mxu0 %v5865
    %5894 = vmatprep.subr.mxu0 0.0
    %5895 = vmatpush1.msra.mxu0 %v5864
    %5896 = vmatprep.subr.mxu0 0.0
    %5897 = vmatpush1.msra.mxu0 %v5863
    %5898 = vmatprep.subr.mxu0 0.0
    %5899 = vmatpush1.msra.mxu0 %v5862
    %5900 = vmatprep.subr.mxu0 0.0
    %5901 = vmatpush1.msra.mxu0 %v5861
    %5902 = vmatprep.subr.mxu0 0.0
    %5903 = vmatpush1.msra.mxu0 %v5860
    %5904 = vmatprep.subr.mxu0 0.0
    %5905 = vmatpush1.msra.mxu0 %v5859
    %5906 = vmatprep.subr.mxu0 0.0
    %5907 = vmatpush1.msra.mxu0 %v5858
    %5908 = vmatprep.subr.mxu0 0.0
    %5909 = vmatpush2.msra.mxu0 0.0
    %5910 = vmatprep.subr.mxu0 0.0
    %5911 = vmatpush2.msra.mxu0 0.0
    %5912 = vmatprep.subr.mxu0 0.0
    %5913 = vmatpush2.msra.mxu0 0.0
    %5914 = vmatprep.subr.mxu0 0.0
    %5915 = vmatpush2.msra.mxu0 0.0
    %5916 = vmatprep.subr.mxu0 0.0
    %5917 = vmatpush2.msra.mxu0 0.0
    %5918 = vmatprep.subr.mxu0 0.0
    %5919 = vmatpush2.msra.mxu0 0.0
    %5920 = vmatprep.subr.mxu0 0.0
    %5921 = vmatpush2.msra.mxu0 0.0
    %5922 = vmatprep.subr.mxu0 0.0
    %5923 = vmatpush2.msra.mxu0 0.0
    %5924 = vmatprep.subr.mxu0 0.0
    %5925 = vmatpush2.msra.mxu0 0.0
    %5926 = vmatprep.subr.mxu0 0.0
    %5927 = vmatpush2.msra.mxu0 0.0
    %5928 = vmatprep.subr.mxu0 0.0
    %5929 = vmatpush2.msra.mxu0 0.0
    %5930 = vmatprep.subr.mxu0 0.0
    %5931 = vmatpush2.msra.mxu0 0.0
    %5932 = vmatprep.subr.mxu0 0.0
    %5933 = vmatpush2.msra.mxu0 0.0
    %5934 = vmatprep.subr.mxu0 0.0
    %5935 = vmatpush2.msra.mxu0 0.0
    %5936 = vmatprep.subr.mxu0 0.0
    %5937 = vmatpush2.msra.mxu0 0.0
    %5938 = vmatprep.subr.mxu0 0.0
    %5939 = vmatpush2.msra.mxu0 0.0
    %5940 = vmatprep.mubr.f32.mxu0 0.0
    %5941 = vmatmul.mubr.f32.gmra.mxu0 %v5874
    %v5942 = vpop.f32.mrf.mxu0
    %v5943 = vadd.f32 %v5871, %v5942
    %v5944 = vpop.f32.mrf.mxu0
    %5945 = vdwg.mxu0
    %vm5946 = vcmask 74752
    %5947 = vst.msk [vmem:[#allocation5] sm:$0x3] %vm5946, %v5943
    %v5948 = vsel %vm5946, %v5943, -inf
    %5949 = vmax.xlane.f32.xlu0 %v5948
    %v5950 = vpop.xlane.xlu0 %5949
    %v5951 = vsub.f32 %v5943, %v5950
    %v5952 = vmul.f32 %v5951, 1.442695
    %v5953 = vpow.pop %v5952
    %v5954 = vsel %vm5946, %v5953, 0.0
    %5955 = vadd.xlane.f32.xlu0 %v5954
    %v5956 = vpop.xlane.xlu0 %5955
    %v5957 = vrcp.pop %v5956
    %v5958 = vmul.f32 %v5953, %v5957
    %5959 = vst.msk [vmem:[#allocation7] sm:$0x3] %vm5946, %v5958
    // Predicated region
    $region33: #{resnet110_server_v3_forward.1} parent=1 // pred_check
      _
    $region34: #{resnet110_server_v3_forward.1} parent=1 // pred_check_branch
      %5961 = sbr.rel (0) target = $region36
    $region35: #{resnet110_server_v3_forward.1} parent=1 // pred_region
      %s5963 = ssub.s32 32, 32
      %5964 = vsyncadd [#allocation6], %s5963
      %s5966 = sshll.u32 [#allocation5], 4
      %s5967 = int_to_ptr.vmem [resolvable:$true] %s5966
      %5969 = dma.vmem_to_hbm [thread:$0]  %s5967, 32, %s6, [#allocation6]
    $region36: #{resnet110_server_v3_forward.1} parent=1 // pred_fallthru
      _
    // Predicated region
    $region37: #{resnet110_server_v3_forward.1} parent=1 // pred_check
      _
    $region38: #{resnet110_server_v3_forward.1} parent=1 // pred_check_branch
      %5971 = sbr.rel (0) target = $region40
    $region39: #{resnet110_server_v3_forward.1} parent=1 // pred_region
      %s5973 = ssub.s32 32, 32
      %5974 = vsyncadd [#allocation8], %s5973
      %s5976 = sshll.u32 [#allocation7], 4
      %s5977 = int_to_ptr.vmem [resolvable:$true] %s5976
      %5979 = dma.vmem_to_hbm [thread:$0]  %s5977, 32, %s7, [#allocation8]
    $region40: #{resnet110_server_v3_forward.1} parent=1 // pred_fallthru
      _
    // Predicated region
    $region41: #{resnet110_server_v3_forward.1} parent=1 // pred_check
      _
    $region42: #{resnet110_server_v3_forward.1} parent=1 // pred_check_branch
      %5981 = sbr.rel (0) target = $region44
    $region43: #{resnet110_server_v3_forward.1} parent=1 // pred_region
      %5982 = dma.done [#allocation6], 32
    $region44: #{resnet110_server_v3_forward.1} parent=1 // pred_fallthru
      _
    // Predicated region
    $region45: #{resnet110_server_v3_forward.1} parent=1 // pred_check
      _
    $region46: #{resnet110_server_v3_forward.1} parent=1 // pred_check_branch
      %5984 = sbr.rel (0) target = $region48
    $region47: #{resnet110_server_v3_forward.1} parent=1 // pred_region
      %5985 = dma.done [#allocation8], 32
    $region48: #{resnet110_server_v3_forward.1} parent=1 // pred_fallthru
      _
    %5986 = vsyncpa [#allocation6], 1
    %5987 = vsyncpa [#allocation8], 1

</llo_original>
